<compile_context>
chip_gen: v7x
topology: tpu7x:2x2x1
jax: 0.10.0
libtpu: 0.0.40
codegen_flags: <defaults>
</compile_context>

<pallas_src>
import jax
import jax.numpy as jnp
from jax import lax
from jax.experimental import pallas as pl
from jax.experimental.pallas import tpu as pltpu

# MXU-native compute dtype; HBM-resident activations/weights are stored in it.
COMPUTE_DTYPE = jnp.bfloat16


# -----------------------------------------------------------------------------
# Bilinear 2x upsample, align_corners=True (exactly nn.UpsamplingBilinear2d).
# Runs as cheap XLA glue on the half-resolution tensor (NHWC).
# -----------------------------------------------------------------------------
def upsample_bilinear_2x_align_corners(x_nhwc):
    N, H, W, C = x_nhwc.shape
    Ho, Wo = 2 * H, 2 * W

    ys = jnp.arange(Ho, dtype=jnp.float32) * (H - 1) / (Ho - 1)
    xs = jnp.arange(Wo, dtype=jnp.float32) * (W - 1) / (Wo - 1)

    y0 = jnp.floor(ys).astype(jnp.int32)
    y1 = jnp.minimum(y0 + 1, H - 1)
    wy = (ys - y0.astype(jnp.float32))[None, :, None, None]

    x0 = jnp.floor(xs).astype(jnp.int32)
    x1 = jnp.minimum(x0 + 1, W - 1)
    wx = (xs - x0.astype(jnp.float32))[None, None, :, None]

    r0 = jnp.take(x_nhwc, y0, axis=1)
    r1 = jnp.take(x_nhwc, y1, axis=1)
    rows = r0 * (1.0 - wy) + r1 * wy

    c0 = jnp.take(rows, x0, axis=2)
    c1 = jnp.take(rows, x1, axis=2)
    return c0 * (1.0 - wx) + c1 * wx


# -----------------------------------------------------------------------------
# Fused Pallas kernel: concat + pad + conv3x3 + conv3x3, one batch element per
# grid step. Intermediate activation stays in VMEM.
#
#   x1_ref  : (1, H, W, C1)      skip connection (bf16)
#   x2u_ref : (1, H, W, C2)      upsampled decoder feature (bf16)
#   w1_ref  : (9*(C1+C2), Cm)    conv1 weights, im2col layout (bf16)
#   b1_ref  : (1, Cm)            conv1 bias (f32)
#   w2_ref  : (9*Cm, Cout)       conv2 weights, im2col layout (bf16)
#   b2_ref  : (1, Cout)          conv2 bias (f32)
#   o_ref   : (1, H, W, Cout)    output (f32)
#   xpad_ref: (H+2, W+2, C1+C2)  VMEM scratch: zero-halo concat buffer (f32)
#   mpad_ref: (H+2, W+2, Cm)     VMEM scratch: zero-halo intermediate (f32)
# -----------------------------------------------------------------------------
def unet_up_fused_kernel(x1_ref, x2u_ref, w1_ref, b1_ref, w2_ref, b2_ref,
                         o_ref, xpad_ref, mpad_ref):
    H, W, Cout = o_ref.shape[1], o_ref.shape[2], o_ref.shape[3]
    Cin = xpad_ref.shape[2]
    Cm = mpad_ref.shape[2]
    mxu_dtype = w1_ref.dtype

    # Zero the halo scratch only once; the border is never overwritten and the
    # interior is fully rewritten each grid step (scratch persists across steps).
    @pl.when(pl.program_id(0) == 0)
    def _zero_halo():
        xpad_ref[...] = jnp.zeros_like(xpad_ref)
        mpad_ref[...] = jnp.zeros_like(mpad_ref)

    # Fused channel concat + implicit zero padding: write only the interior of
    # the zero-bordered VMEM buffer.  No HBM concat, no jnp.pad.
    x_cat = jnp.concatenate(
        [x1_ref[0].astype(jnp.float32), x2u_ref[0].astype(jnp.float32)],
        axis=-1)                                           # (H, W, Cin)
    xpad_ref[1:H + 1, 1:W + 1, :] = x_cat

    def conv3x3(pad_ref, w_ref, b_ref, cin):
        """3x3 'same' conv as a single im2col matmul on the MXU."""
        xp = pad_ref[...]                                  # (H+2, W+2, cin) f32
        # Only 3 shifted-window (sublane) slices, one per kw; the kh shift is a
        # leading-dim slice and the (H,W)->(H*W) flatten is layout-preserving.
        cols = [xp[:, kw:kw + W, :] for kw in range(3)]    # (H+2, W, cin) each
        patches = []
        for kh in range(3):                                # tap order matches
            for kw in range(3):                            # weight flattening
                patches.append(cols[kw][kh:kh + H, :, :].reshape(H * W, cin))
        im = jnp.concatenate(patches, axis=-1)             # (H*W, 9*cin)
        acc = jnp.dot(im.astype(mxu_dtype), w_ref[...],
                      preferred_element_type=jnp.float32)  # single K=9*cin MXU op
        return acc + b_ref[...].astype(jnp.float32)        # bias: one f32 add

    # Conv1: (H*W, 9*Cin) @ (9*Cin, Cm) -> intermediate stays in VMEM.
    mid = conv3x3(xpad_ref, w1_ref, b1_ref, Cin)           # (H*W, Cm) f32
    mpad_ref[1:H + 1, 1:W + 1, :] = mid.reshape(H, W, Cm)

    # Conv2: (H*W, 9*Cm) @ (9*Cm, Cout).
    out = conv3x3(mpad_ref, w2_ref, b2_ref, Cm)            # (H*W, Cout) f32
    o_ref[0] = out.reshape(H, W, Cout).astype(o_ref.dtype)


# -----------------------------------------------------------------------------
# Wrapper: NHWC fused call.
# -----------------------------------------------------------------------------
def unet_up_fused_nhwc(x1_nhwc, x2up_nhwc, w1_hwio, b1, w2_hwio, b2):
    N, H, W, C1 = x1_nhwc.shape
    C2 = x2up_nhwc.shape[-1]
    Cin = C1 + C2
    Cm = w1_hwio.shape[-1]
    Cout = w2_hwio.shape[-1]
    assert x2up_nhwc.shape == (N, H, W, C2)
    assert w1_hwio.shape == (3, 3, Cin, Cm)
    assert w2_hwio.shape == (3, 3, Cm, Cout)

    cdt = COMPUTE_DTYPE
    # bf16 HBM-resident activations & weights; biases stay f32.
    x1c = x1_nhwc.astype(cdt)
    x2c = x2up_nhwc.astype(cdt)
    # Host-side reshape of HWIO weights to a 2D im2col slab (9*Cin, Cout).
    w1_2d = w1_hwio.reshape(9 * Cin, Cm).astype(cdt)
    w2_2d = w2_hwio.reshape(9 * Cm, Cout).astype(cdt)
    b1_2d = b1.reshape(1, Cm).astype(jnp.float32)
    b2_2d = b2.reshape(1, Cout).astype(jnp.float32)

    itemsize = jnp.dtype(cdt).itemsize
    flops = 2 * N * H * W * 9 * (Cin * Cm + Cm * Cout)
    bytes_accessed = ((x1c.size + x2c.size + w1_2d.size + w2_2d.size) * itemsize
                      + (b1_2d.size + b2_2d.size + N * H * W * Cout) * 4)

    return pl.pallas_call(
        unet_up_fused_kernel,
        out_shape=jax.ShapeDtypeStruct((N, H, W, Cout), jnp.float32),
        grid=(N,),
        in_specs=[
            pl.BlockSpec((1, H, W, C1), lambda n: (n, 0, 0, 0)),
            pl.BlockSpec((1, H, W, C2), lambda n: (n, 0, 0, 0)),
            # Constant index_map -> weights/biases stay resident across steps.
            pl.BlockSpec((9 * Cin, Cm), lambda n: (0, 0)),
            pl.BlockSpec((1, Cm), lambda n: (0, 0)),
            pl.BlockSpec((9 * Cm, Cout), lambda n: (0, 0)),
            pl.BlockSpec((1, Cout), lambda n: (0, 0)),
        ],
        out_specs=pl.BlockSpec((1, H, W, Cout), lambda n: (n, 0, 0, 0)),
        scratch_shapes=[
            pltpu.VMEM((H + 2, W + 2, Cin), jnp.float32),   # concat + halo
            pltpu.VMEM((H + 2, W + 2, Cm), jnp.float32),    # intermediate + halo
        ],
        compiler_params=pltpu.CompilerParams(
            dimension_semantics=("parallel",),
            vmem_limit_bytes=32 * 1024 * 1024),
        cost_estimate=pl.CostEstimate(
            flops=flops, transcendentals=0, bytes_accessed=bytes_accessed),
    )(x1c, x2c, w1_2d, b1_2d, w2_2d, b2_2d)


# -----------------------------------------------------------------------------
# unetUp forward: NCHW in / NCHW out (matching the PyTorch module interface).
# -----------------------------------------------------------------------------
@jax.jit
def unet_up_forward(inputs1_nchw, inputs2_nchw, w1_hwio, b1, w2_hwio, b2):
    x1 = jnp.transpose(inputs1_nchw, (0, 2, 3, 1))   # NHWC
    x2 = jnp.transpose(inputs2_nchw, (0, 2, 3, 1))   # NHWC
    x2_up = upsample_bilinear_2x_align_corners(x2)
    y = unet_up_fused_nhwc(x1, x2_up, w1_hwio, b1, w2_hwio, b2)
    return jnp.transpose(y, (0, 3, 1, 2))            # back to NCHW


# -----------------------------------------------------------------------------
# Pure-JAX reference (lax.conv) with the same bf16 rounding points, for a
# correctness check of the fused Pallas kernel.
# -----------------------------------------------------------------------------
@jax.jit
def unet_up_reference(inputs1_nchw, inputs2_nchw, w1_hwio, b1, w2_hwio, b2):
    cdt = COMPUTE_DTYPE
    x1 = jnp.transpose(inputs1_nchw, (0, 2, 3, 1))
    x2 = jnp.transpose(inputs2_nchw, (0, 2, 3, 1))
    x2_up = upsample_bilinear_2x_align_corners(x2)
    x = jnp.concatenate([x1, x2_up], axis=-1).astype(cdt)
    dn = ("NHWC", "HWIO", "NHWC")
    y = lax.conv_general_dilated(x, w1_hwio.astype(cdt), (1, 1), "SAME",
                                 dimension_numbers=dn,
                                 preferred_element_type=jnp.float32)
    y = y + b1[None, None, None, :].astype(jnp.float32)
    y = y.astype(cdt)
    y = lax.conv_general_dilated(y, w2_hwio.astype(cdt), (1, 1), "SAME",
                                 dimension_numbers=dn,
                                 preferred_element_type=jnp.float32)
    y = y + b2[None, None, None, :].astype(jnp.float32)
    return jnp.transpose(y, (0, 3, 1, 2))


if __name__ == "__main__":
    # Small shapes consistent with unetUp:
    #   inputs1 : (N, C1, H, W)      skip connection at full resolution
    #   inputs2 : (N, C2, H/2, W/2)  decoder feature, upsampled x2 in forward
    N, C1, H, W = 2, 4, 16, 16
    C2 = 8
    in_size = C1 + C2          # 12
    out_size = 8

    key = jax.random.PRNGKey(0)
    k_in1, k_in2, k_w1, k_b1, k_w2, k_b2 = jax.random.split(key, 6)

    inputs1 = jax.random.normal(k_in1, (N, C1, H, W), dtype=jnp.float32)
    inputs2 = jax.random.normal(k_in2, (N, C2, H // 2, W // 2), dtype=jnp.float32)

    # PyTorch Conv2d-style init (OIHW), converted to HWIO for the JAX side.
    def init_conv(kw_key, kb_key, cin, cout):
        bound = 1.0 / jnp.sqrt(cin * 9.0)
        w_oihw = jax.random.uniform(kw_key, (cout, cin, 3, 3),
                                    minval=-bound, maxval=bound,
                                    dtype=jnp.float32)
        b = jax.random.uniform(kb_key, (cout,), minval=-bound, maxval=bound,
                               dtype=jnp.float32)
        return jnp.transpose(w_oihw, (2, 3, 1, 0)), b   # OIHW -> HWIO

    w1, b1 = init_conv(k_w1, k_b1, in_size, out_size)
    w2, b2 = init_conv(k_w2, k_b2, out_size, out_size)

    out = jax.block_until_ready(unet_up_forward(inputs1, inputs2, w1, b1, w2, b2))
    ref = jax.block_until_ready(unet_up_reference(inputs1, inputs2, w1, b1, w2, b2))

    assert out.shape == (N, out_size, H, W), out.shape
    max_err = float(jnp.max(jnp.abs(out - ref)))
    assert max_err < 1e-3, max_err

    print("KERNEL_OK")
</pallas_src>

<mosaic_0001>
module attributes {stable_mosaic.version = 11 : i64} {
  func.func @unet_up_fused_kernel(%arg0: i32, %arg1: memref<1x16x16x4xbf16, #tpu.memory_space<vmem>>, %arg2: memref<1x16x16x8xbf16, #tpu.memory_space<vmem>>, %arg3: memref<108x8xbf16, #tpu.memory_space<vmem>>, %arg4: memref<1x8xf32, #tpu.memory_space<vmem>>, %arg5: memref<72x8xbf16, #tpu.memory_space<vmem>>, %arg6: memref<1x8xf32, #tpu.memory_space<vmem>>, %arg7: memref<1x16x16x8xf32, #tpu.memory_space<vmem>>, %arg8: memref<18x18x12xf32, #tpu.memory_space<vmem>>, %arg9: memref<18x18x8xf32, #tpu.memory_space<vmem>>) attributes {dimension_semantics = [#tpu.dimension_semantics<parallel>], iteration_bounds = array<i64: 2>, scalar_prefetch = 0 : i64, scratch_operands = 2 : i64, tpu.core_type = #tpu.core_type<tc>, window_params = [{transform_indices = @transform_0, window_bounds = array<i64: 1, 16, 16, 4>}, {transform_indices = @transform_1, window_bounds = array<i64: 1, 16, 16, 8>}, {pipeline_mode = #tpu.pipeline_mode<synchronous>, transform_indices = @transform_2, window_bounds = array<i64: 108, 8>}, {pipeline_mode = #tpu.pipeline_mode<synchronous>, transform_indices = @transform_3, window_bounds = array<i64: 1, 8>}, {pipeline_mode = #tpu.pipeline_mode<synchronous>, transform_indices = @transform_4, window_bounds = array<i64: 72, 8>}, {pipeline_mode = #tpu.pipeline_mode<synchronous>, transform_indices = @transform_5, window_bounds = array<i64: 1, 8>}, {transform_indices = @transform_6, window_bounds = array<i64: 1, 16, 16, 8>}]} {
    %c0_i32 = arith.constant 0 : i32
    %0 = arith.cmpi eq, %arg0, %c0_i32 : i32
    %1 = arith.extui %0 : i1 to i32
    %c0_i32_0 = arith.constant 0 : i32
    %2 = arith.cmpi ne, %1, %c0_i32_0 : i32
    scf.if %2 {
      %cst_32 = arith.constant 0.000000e+00 : f32
      %75 = vector.broadcast %cst_32 : f32 to vector<18x18x12xf32>
      %c0_33 = arith.constant 0 : index
      %c0_34 = arith.constant 0 : index
      %c0_35 = arith.constant 0 : index
      %76 = vector.load %arg8[%c0_33, %c0_34, %c0_35] : memref<18x18x12xf32, #tpu.memory_space<vmem>>, vector<18x18x12xf32>
      tpu.vector_store %arg8[%c0_33, %c0_34, %c0_35], %75 {strides = array<i32>} : memref<18x18x12xf32, #tpu.memory_space<vmem>>, vector<18x18x12xf32>,
      %cst_36 = arith.constant 0.000000e+00 : f32
      %77 = vector.broadcast %cst_36 : f32 to vector<18x18x8xf32>
      %c0_37 = arith.constant 0 : index
      %c0_38 = arith.constant 0 : index
      %c0_39 = arith.constant 0 : index
      %78 = vector.load %arg9[%c0_37, %c0_38, %c0_39] : memref<18x18x8xf32, #tpu.memory_space<vmem>>, vector<18x18x8xf32>
      tpu.vector_store %arg9[%c0_37, %c0_38, %c0_39], %77 {strides = array<i32>} : memref<18x18x8xf32, #tpu.memory_space<vmem>>, vector<18x18x8xf32>,
    } else {
    }
    %c0 = arith.constant 0 : index
    %c0_1 = arith.constant 0 : index
    %c0_2 = arith.constant 0 : index
    %c0_3 = arith.constant 0 : index
    %3 = vector.load %arg1[%c0, %c0_1, %c0_2, %c0_3] : memref<1x16x16x4xbf16, #tpu.memory_space<vmem>>, vector<1x16x16x4xbf16>
    %4 = vector.shape_cast %3 : vector<1x16x16x4xbf16> to vector<16x16x4xbf16>
    %5 = arith.extf %4 : vector<16x16x4xbf16> to vector<16x16x4xf32>
    %c0_4 = arith.constant 0 : index
    %c0_5 = arith.constant 0 : index
    %c0_6 = arith.constant 0 : index
    %c0_7 = arith.constant 0 : index
    %6 = vector.load %arg2[%c0_4, %c0_5, %c0_6, %c0_7] : memref<1x16x16x8xbf16, #tpu.memory_space<vmem>>, vector<1x16x16x8xbf16>
    %7 = vector.shape_cast %6 : vector<1x16x16x8xbf16> to vector<16x16x8xbf16>
    %8 = arith.extf %7 : vector<16x16x8xbf16> to vector<16x16x8xf32>
    %9 = tpu.concatenate %5, %8 in 2 : vector<16x16x4xf32>, vector<16x16x8xf32> -> vector<16x16x12xf32>
    %c1 = arith.constant 1 : index
    %c1_8 = arith.constant 1 : index
    %c0_9 = arith.constant 0 : index
    %10 = vector.load %arg8[%c1, %c1_8, %c0_9] : memref<18x18x12xf32, #tpu.memory_space<vmem>>, vector<16x16x12xf32>
    tpu.vector_store %arg8[%c1, %c1_8, %c0_9], %9 {strides = array<i32>} : memref<18x18x12xf32, #tpu.memory_space<vmem>>, vector<16x16x12xf32>,
    %c0_10 = arith.constant 0 : index
    %c0_11 = arith.constant 0 : index
    %c0_12 = arith.constant 0 : index
    %11 = vector.load %arg8[%c0_10, %c0_11, %c0_12] : memref<18x18x12xf32, #tpu.memory_space<vmem>>, vector<18x18x12xf32>
    %12 = vector.extract_strided_slice %11 {offsets = [0, 0, 0], sizes = [18, 16, 12], strides = [1, 1, 1]} : vector<18x18x12xf32> to vector<18x16x12xf32>
    %13 = vector.extract_strided_slice %11 {offsets = [0, 1, 0], sizes = [18, 16, 12], strides = [1, 1, 1]} : vector<18x18x12xf32> to vector<18x16x12xf32>
    %14 = vector.extract_strided_slice %11 {offsets = [0, 2, 0], sizes = [18, 16, 12], strides = [1, 1, 1]} : vector<18x18x12xf32> to vector<18x16x12xf32>
    %15 = vector.extract_strided_slice %12 {offsets = [0, 0, 0], sizes = [16, 16, 12], strides = [1, 1, 1]} : vector<18x16x12xf32> to vector<16x16x12xf32>
    %16 = vector.shape_cast %15 : vector<16x16x12xf32> to vector<256x12xf32>
    %17 = vector.extract_strided_slice %13 {offsets = [0, 0, 0], sizes = [16, 16, 12], strides = [1, 1, 1]} : vector<18x16x12xf32> to vector<16x16x12xf32>
    %18 = vector.shape_cast %17 : vector<16x16x12xf32> to vector<256x12xf32>
    %19 = vector.extract_strided_slice %14 {offsets = [0, 0, 0], sizes = [16, 16, 12], strides = [1, 1, 1]} : vector<18x16x12xf32> to vector<16x16x12xf32>
    %20 = vector.shape_cast %19 : vector<16x16x12xf32> to vector<256x12xf32>
    %21 = vector.extract_strided_slice %12 {offsets = [1, 0, 0], sizes = [16, 16, 12], strides = [1, 1, 1]} : vector<18x16x12xf32> to vector<16x16x12xf32>
    %22 = vector.shape_cast %21 : vector<16x16x12xf32> to vector<256x12xf32>
    %23 = vector.extract_strided_slice %13 {offsets = [1, 0, 0], sizes = [16, 16, 12], strides = [1, 1, 1]} : vector<18x16x12xf32> to vector<16x16x12xf32>
    %24 = vector.shape_cast %23 : vector<16x16x12xf32> to vector<256x12xf32>
    %25 = vector.extract_strided_slice %14 {offsets = [1, 0, 0], sizes = [16, 16, 12], strides = [1, 1, 1]} : vector<18x16x12xf32> to vector<16x16x12xf32>
    %26 = vector.shape_cast %25 : vector<16x16x12xf32> to vector<256x12xf32>
    %27 = vector.extract_strided_slice %12 {offsets = [2, 0, 0], sizes = [16, 16, 12], strides = [1, 1, 1]} : vector<18x16x12xf32> to vector<16x16x12xf32>
    %28 = vector.shape_cast %27 : vector<16x16x12xf32> to vector<256x12xf32>
    %29 = vector.extract_strided_slice %13 {offsets = [2, 0, 0], sizes = [16, 16, 12], strides = [1, 1, 1]} : vector<18x16x12xf32> to vector<16x16x12xf32>
    %30 = vector.shape_cast %29 : vector<16x16x12xf32> to vector<256x12xf32>
    %31 = vector.extract_strided_slice %14 {offsets = [2, 0, 0], sizes = [16, 16, 12], strides = [1, 1, 1]} : vector<18x16x12xf32> to vector<16x16x12xf32>
    %32 = vector.shape_cast %31 : vector<16x16x12xf32> to vector<256x12xf32>
    %33 = tpu.concatenate %16, %18, %20, %22, %24, %26, %28, %30, %32 in 1 : vector<256x12xf32>, vector<256x12xf32>, vector<256x12xf32>, vector<256x12xf32>, vector<256x12xf32>, vector<256x12xf32>, vector<256x12xf32>, vector<256x12xf32>, vector<256x12xf32> -> vector<256x108xf32>
    %34 = arith.truncf %33 : vector<256x108xf32> to vector<256x108xbf16>
    %c0_13 = arith.constant 0 : index
    %c0_14 = arith.constant 0 : index
    %35 = vector.load %arg3[%c0_13, %c0_14] : memref<108x8xbf16, #tpu.memory_space<vmem>>, vector<108x8xbf16>
    %cst = arith.constant dense<0.000000e+00> : vector<256x8xf32>
    %36 = tpu.matmul %34, %35, %cst {dimension_numbers = #tpu.dot_dimension_numbers<[1], [0], [0], [1], [0, 0, 1, 1], [], []>} : vector<256x108xbf16>, vector<108x8xbf16>, vector<256x8xf32> -> vector<256x8xf32>
    %c0_15 = arith.constant 0 : index
    %c0_16 = arith.constant 0 : index
    %37 = vector.load %arg4[%c0_15, %c0_16] : memref<1x8xf32, #tpu.memory_space<vmem>>, vector<1x8xf32>
    %38 = vector.broadcast %37 : vector<1x8xf32> to vector<256x8xf32>
    %39 = arith.addf %36, %38 : vector<256x8xf32>
    %40 = vector.shape_cast %39 : vector<256x8xf32> to vector<16x16x8xf32>
    %c1_17 = arith.constant 1 : index
    %c1_18 = arith.constant 1 : index
    %c0_19 = arith.constant 0 : index
    %41 = vector.load %arg9[%c1_17, %c1_18, %c0_19] : memref<18x18x8xf32, #tpu.memory_space<vmem>>, vector<16x16x8xf32>
    tpu.vector_store %arg9[%c1_17, %c1_18, %c0_19], %40 {strides = array<i32>} : memref<18x18x8xf32, #tpu.memory_space<vmem>>, vector<16x16x8xf32>,
    %c0_20 = arith.constant 0 : index
    %c0_21 = arith.constant 0 : index
    %c0_22 = arith.constant 0 : index
    %42 = vector.load %arg9[%c0_20, %c0_21, %c0_22] : memref<18x18x8xf32, #tpu.memory_space<vmem>>, vector<18x18x8xf32>
    %43 = vector.extract_strided_slice %42 {offsets = [0, 0, 0], sizes = [18, 16, 8], strides = [1, 1, 1]} : vector<18x18x8xf32> to vector<18x16x8xf32>
    %44 = vector.extract_strided_slice %42 {offsets = [0, 1, 0], sizes = [18, 16, 8], strides = [1, 1, 1]} : vector<18x18x8xf32> to vector<18x16x8xf32>
    %45 = vector.extract_strided_slice %42 {offsets = [0, 2, 0], sizes = [18, 16, 8], strides = [1, 1, 1]} : vector<18x18x8xf32> to vector<18x16x8xf32>
    %46 = vector.extract_strided_slice %43 {offsets = [0, 0, 0], sizes = [16, 16, 8], strides = [1, 1, 1]} : vector<18x16x8xf32> to vector<16x16x8xf32>
    %47 = vector.shape_cast %46 : vector<16x16x8xf32> to vector<256x8xf32>
    %48 = vector.extract_strided_slice %44 {offsets = [0, 0, 0], sizes = [16, 16, 8], strides = [1, 1, 1]} : vector<18x16x8xf32> to vector<16x16x8xf32>
    %49 = vector.shape_cast %48 : vector<16x16x8xf32> to vector<256x8xf32>
    %50 = vector.extract_strided_slice %45 {offsets = [0, 0, 0], sizes = [16, 16, 8], strides = [1, 1, 1]} : vector<18x16x8xf32> to vector<16x16x8xf32>
    %51 = vector.shape_cast %50 : vector<16x16x8xf32> to vector<256x8xf32>
    %52 = vector.extract_strided_slice %43 {offsets = [1, 0, 0], sizes = [16, 16, 8], strides = [1, 1, 1]} : vector<18x16x8xf32> to vector<16x16x8xf32>
    %53 = vector.shape_cast %52 : vector<16x16x8xf32> to vector<256x8xf32>
    %54 = vector.extract_strided_slice %44 {offsets = [1, 0, 0], sizes = [16, 16, 8], strides = [1, 1, 1]} : vector<18x16x8xf32> to vector<16x16x8xf32>
    %55 = vector.shape_cast %54 : vector<16x16x8xf32> to vector<256x8xf32>
    %56 = vector.extract_strided_slice %45 {offsets = [1, 0, 0], sizes = [16, 16, 8], strides = [1, 1, 1]} : vector<18x16x8xf32> to vector<16x16x8xf32>
    %57 = vector.shape_cast %56 : vector<16x16x8xf32> to vector<256x8xf32>
    %58 = vector.extract_strided_slice %43 {offsets = [2, 0, 0], sizes = [16, 16, 8], strides = [1, 1, 1]} : vector<18x16x8xf32> to vector<16x16x8xf32>
    %59 = vector.shape_cast %58 : vector<16x16x8xf32> to vector<256x8xf32>
    %60 = vector.extract_strided_slice %44 {offsets = [2, 0, 0], sizes = [16, 16, 8], strides = [1, 1, 1]} : vector<18x16x8xf32> to vector<16x16x8xf32>
    %61 = vector.shape_cast %60 : vector<16x16x8xf32> to vector<256x8xf32>
    %62 = vector.extract_strided_slice %45 {offsets = [2, 0, 0], sizes = [16, 16, 8], strides = [1, 1, 1]} : vector<18x16x8xf32> to vector<16x16x8xf32>
    %63 = vector.shape_cast %62 : vector<16x16x8xf32> to vector<256x8xf32>
    %64 = tpu.concatenate %47, %49, %51, %53, %55, %57, %59, %61, %63 in 1 : vector<256x8xf32>, vector<256x8xf32>, vector<256x8xf32>, vector<256x8xf32>, vector<256x8xf32>, vector<256x8xf32>, vector<256x8xf32>, vector<256x8xf32>, vector<256x8xf32> -> vector<256x72xf32>
    %65 = arith.truncf %64 : vector<256x72xf32> to vector<256x72xbf16>
    %c0_23 = arith.constant 0 : index
    %c0_24 = arith.constant 0 : index
    %66 = vector.load %arg5[%c0_23, %c0_24] : memref<72x8xbf16, #tpu.memory_space<vmem>>, vector<72x8xbf16>
    %cst_25 = arith.constant dense<0.000000e+00> : vector<256x8xf32>
    %67 = tpu.matmul %65, %66, %cst_25 {dimension_numbers = #tpu.dot_dimension_numbers<[1], [0], [0], [1], [0, 0, 1, 1], [], []>} : vector<256x72xbf16>, vector<72x8xbf16>, vector<256x8xf32> -> vector<256x8xf32>
    %c0_26 = arith.constant 0 : index
    %c0_27 = arith.constant 0 : index
    %68 = vector.load %arg6[%c0_26, %c0_27] : memref<1x8xf32, #tpu.memory_space<vmem>>, vector<1x8xf32>
    %69 = vector.broadcast %68 : vector<1x8xf32> to vector<256x8xf32>
    %70 = arith.addf %67, %69 : vector<256x8xf32>
    %71 = vector.shape_cast %70 : vector<256x8xf32> to vector<16x16x8xf32>
    %c0_28 = arith.constant 0 : index
    %c0_29 = arith.constant 0 : index
    %c0_30 = arith.constant 0 : index
    %c0_31 = arith.constant 0 : index
    %72 = vector.load %arg7[%c0_28, %c0_29, %c0_30, %c0_31] : memref<1x16x16x8xf32, #tpu.memory_space<vmem>>, vector<1x16x16x8xf32>
    %73 = vector.shape_cast %72 : vector<1x16x16x8xf32> to vector<16x16x8xf32>
    %74 = vector.shape_cast %71 : vector<16x16x8xf32> to vector<1x16x16x8xf32>
    tpu.vector_store %arg7[%c0_28, %c0_29, %c0_30, %c0_31], %74 {strides = array<i32>} : memref<1x16x16x8xf32, #tpu.memory_space<vmem>>, vector<1x16x16x8xf32>,
    return
  }
  func.func @transform_0(%arg0: i32) -> (i32, i32, i32, i32) {
    %c0_i32 = arith.constant 0 : i32
    %c0_i32_0 = arith.constant 0 : i32
    %c0_i32_1 = arith.constant 0 : i32
    %c0_i32_2 = arith.constant 0 : i32
    return %arg0, %c0_i32, %c0_i32_0, %c0_i32_1 : i32, i32, i32, i32
  }
  func.func @transform_1(%arg0: i32) -> (i32, i32, i32, i32) {
    %c0_i32 = arith.constant 0 : i32
    %c0_i32_0 = arith.constant 0 : i32
    %c0_i32_1 = arith.constant 0 : i32
    %c0_i32_2 = arith.constant 0 : i32
    return %arg0, %c0_i32, %c0_i32_0, %c0_i32_1 : i32, i32, i32, i32
  }
  func.func @transform_2(%arg0: i32) -> (i32, i32) {
    %c0_i32 = arith.constant 0 : i32
    %c0_i32_0 = arith.constant 0 : i32
    %c0_i32_1 = arith.constant 0 : i32
    return %c0_i32, %c0_i32_0 : i32, i32
  }
  func.func @transform_3(%arg0: i32) -> (i32, i32) {
    %c0_i32 = arith.constant 0 : i32
    %c0_i32_0 = arith.constant 0 : i32
    %c0_i32_1 = arith.constant 0 : i32
    return %c0_i32, %c0_i32_0 : i32, i32
  }
  func.func @transform_4(%arg0: i32) -> (i32, i32) {
    %c0_i32 = arith.constant 0 : i32
    %c0_i32_0 = arith.constant 0 : i32
    %c0_i32_1 = arith.constant 0 : i32
    return %c0_i32, %c0_i32_0 : i32, i32
  }
  func.func @transform_5(%arg0: i32) -> (i32, i32) {
    %c0_i32 = arith.constant 0 : i32
    %c0_i32_0 = arith.constant 0 : i32
    %c0_i32_1 = arith.constant 0 : i32
    return %c0_i32, %c0_i32_0 : i32, i32
  }
  func.func @transform_6(%arg0: i32) -> (i32, i32, i32, i32) {
    %c0_i32 = arith.constant 0 : i32
    %c0_i32_0 = arith.constant 0 : i32
    %c0_i32_1 = arith.constant 0 : i32
    %c0_i32_2 = arith.constant 0 : i32
    return %arg0, %c0_i32, %c0_i32_0, %c0_i32_1 : i32, i32, i32, i32
  }
}

</mosaic_0001>

<llo_original>
// kernel: unet_up_forward.1
$region0: #{unet_up_forward.1}
  #allocation0 [shape = 'u32[]', space=smem, size = 0x4, offset = 0x4, fixed_abs, tag = 'smem constant byte address 0x4 - core index']
  #allocation1 [shape = 'u32[144,128]{1,0:T(1,128)}', space=vmem, size = 0x12000, scoped, tag = 'internal scratch']
  #allocation2 [shape = 'f32[18,18,12]{2,1,0:T(8,128)}', space=vmem, size = 0x36000, scoped, tag = 'scratch operand']
  #allocation3 [shape = 'f32[18,18,8]{2,1,0:T(8,128)}', space=vmem, size = 0x36000, scoped, tag = 'scratch operand']
  %s0 = inlined_call_operand.vmem [shape: bf16[2,16,16,4], index: 0, kind: input, shape index: {}]
  %s1 = inlined_call_operand.vmem [shape: bf16[2,16,16,8], index: 1, kind: input, shape index: {}]
  %s2 = inlined_call_operand.vmem [shape: bf16[108,8], index: 2, kind: input, shape index: {}]
  %s3 = inlined_call_operand.vmem [shape: f32[1,8], index: 3, kind: input, shape index: {}]
  %s4 = inlined_call_operand.vmem [shape: bf16[72,8], index: 4, kind: input, shape index: {}]
  %s5 = inlined_call_operand.vmem [shape: f32[1,8], index: 5, kind: input, shape index: {}]
  %s6 = inlined_call_operand.vmem [shape: f32[2,16,16,8], index: 6, kind: output, shape index: {}]
  %s7 = sld [smem:[#allocation0]]
  $region61: #{unet_up_forward.1} parent=0
    _
  %s9 = ssub.s32 1, %s7
  %s10 = scalar_select 0, %s9, %s7
  loop: start=0, step=1, limit=4
  $region2: #{unet_up_forward.1} parent=0 // loop_pre_header
    _
  $region3: #{unet_up_forward.1} parent=0 // loop_header
    %s12 = sphi 0, %s16
    %p13 = scmp.ge.s32.totalorder %s12, 4
    %s22 = sphi 0, %s24
    %s25 = sphi 0, %s22
    %s26 = sphi 0, %s25
    %s42 = sphi 0, %s26
    %s48 = sphi 0, %s50
    %s51 = sphi 0, %s48
    %s52 = sphi 0, %s51
    %s68 = sphi 0, %s52
    %s72 = sphi 0, %s72
    %s74 = sphi 0, %s72
    %s75 = sphi 0, %s74
    %s89 = sphi 0, %s75
    %s93 = sphi 0, %s93
    %s95 = sphi 0, %s93
    %s96 = sphi 0, %s95
    %s110 = sphi 0, %s96
    %s114 = sphi 0, %s114
    %s116 = sphi 0, %s114
    %s117 = sphi 0, %s116
    %s131 = sphi 0, %s117
    %s135 = sphi 0, %s135
    %s137 = sphi 0, %s135
    %s138 = sphi 0, %s137
    %s152 = sphi 0, %s138
    %s158 = sphi 0, %s160
    %s161 = sphi 0, %s158
    %s162 = sphi 0, %s161
    %s178 = sphi 0, %s162
  $region4: #{unet_up_forward.1} parent=0 // loop_header_branch
    %15 = sbr.rel (%p13) target = $region8
  $region5: #{unet_up_forward.1} parent=0 // loop_body
    %s17 = ssub.s32 %s12, 1
    %s18 = ssub.s32 %s12, 2
    %s19 = sadd.s32 %s12, 1
    %s20 = ssub.s32 %s12, %s19
    %p21 = scmp.eq.s32.totalorder %s20, 0
    %s23 = sadd.s32 %s22, 1
    %s24 = scalar_select %p21, %s22, %s23
    %p27 = pneg %p21
    %p28 = scmp.eq.s32.totalorder %s12, 1
    %p29 = por %p27, %p28
    %p30 = scmp.ne.s32.totalorder %s22, %s25
    %p31 = scmp.eq.s32.totalorder %s12, 0
    %p32 = por %p30, %p31
    %p33 = scmp.ne.s32.totalorder %s22, %s25
    %p34 = scmp.eq.s32.totalorder %s17, 1
    %p35 = por %p33, %p34
    %p36 = scmp.ne.s32.totalorder %s25, %s26
    %p37 = scmp.eq.s32.totalorder %s17, 0
    %p38 = por %p36, %p37
    %p39 = scmp.ne.s32.totalorder %s25, %s26
    %p40 = scmp.eq.s32.totalorder %s18, 1
    %p41 = por %p39, %p40
    %p43 = scmp.ne.s32.totalorder %s26, %s42
    %p44 = scmp.eq.s32.totalorder %s18, 0
    %p45 = por %p43, %p44
    %s46 = ssub.s32 %s12, %s19
    %p47 = scmp.eq.s32.totalorder %s46, 0
    %s49 = sadd.s32 %s48, 1
    %s50 = scalar_select %p47, %s48, %s49
    %p53 = pneg %p47
    %p54 = scmp.eq.s32.totalorder %s12, 1
    %p55 = por %p53, %p54
    %p56 = scmp.ne.s32.totalorder %s48, %s51
    %p57 = scmp.eq.s32.totalorder %s12, 0
    %p58 = por %p56, %p57
    %p59 = scmp.ne.s32.totalorder %s48, %s51
    %p60 = scmp.eq.s32.totalorder %s17, 1
    %p61 = por %p59, %p60
    %p62 = scmp.ne.s32.totalorder %s51, %s52
    %p63 = scmp.eq.s32.totalorder %s17, 0
    %p64 = por %p62, %p63
    %p65 = scmp.ne.s32.totalorder %s51, %s52
    %p66 = scmp.eq.s32.totalorder %s18, 1
    %p67 = por %p65, %p66
    %p69 = scmp.ne.s32.totalorder %s52, %s68
    %p70 = scmp.eq.s32.totalorder %s18, 0
    %p71 = por %p69, %p70
    %s73 = sadd.s32 %s72, 1
    %p76 = scmp.eq.s32.totalorder %s12, 1
    %p77 = scmp.ne.s32.totalorder %s72, %s74
    %p78 = scmp.eq.s32.totalorder %s12, 0
    %p79 = por %p77, %p78
    %p80 = scmp.ne.s32.totalorder %s72, %s74
    %p81 = scmp.eq.s32.totalorder %s17, 1
    %p82 = por %p80, %p81
    %p83 = scmp.ne.s32.totalorder %s74, %s75
    %p84 = scmp.eq.s32.totalorder %s17, 0
    %p85 = por %p83, %p84
    %p86 = scmp.ne.s32.totalorder %s74, %s75
    %p87 = scmp.eq.s32.totalorder %s18, 1
    %p88 = por %p86, %p87
    %p90 = scmp.ne.s32.totalorder %s75, %s89
    %p91 = scmp.eq.s32.totalorder %s18, 0
    %p92 = por %p90, %p91
    %s94 = sadd.s32 %s93, 1
    %p97 = scmp.eq.s32.totalorder %s12, 1
    %p98 = scmp.ne.s32.totalorder %s93, %s95
    %p99 = scmp.eq.s32.totalorder %s12, 0
    %p100 = por %p98, %p99
    %p101 = scmp.ne.s32.totalorder %s93, %s95
    %p102 = scmp.eq.s32.totalorder %s17, 1
    %p103 = por %p101, %p102
    %p104 = scmp.ne.s32.totalorder %s95, %s96
    %p105 = scmp.eq.s32.totalorder %s17, 0
    %p106 = por %p104, %p105
    %p107 = scmp.ne.s32.totalorder %s95, %s96
    %p108 = scmp.eq.s32.totalorder %s18, 1
    %p109 = por %p107, %p108
    %p111 = scmp.ne.s32.totalorder %s96, %s110
    %p112 = scmp.eq.s32.totalorder %s18, 0
    %p113 = por %p111, %p112
    %s115 = sadd.s32 %s114, 1
    %p118 = scmp.eq.s32.totalorder %s12, 1
    %p119 = scmp.ne.s32.totalorder %s114, %s116
    %p120 = scmp.eq.s32.totalorder %s12, 0
    %p121 = por %p119, %p120
    %p122 = scmp.ne.s32.totalorder %s114, %s116
    %p123 = scmp.eq.s32.totalorder %s17, 1
    %p124 = por %p122, %p123
    %p125 = scmp.ne.s32.totalorder %s116, %s117
    %p126 = scmp.eq.s32.totalorder %s17, 0
    %p127 = por %p125, %p126
    %p128 = scmp.ne.s32.totalorder %s116, %s117
    %p129 = scmp.eq.s32.totalorder %s18, 1
    %p130 = por %p128, %p129
    %p132 = scmp.ne.s32.totalorder %s117, %s131
    %p133 = scmp.eq.s32.totalorder %s18, 0
    %p134 = por %p132, %p133
    %s136 = sadd.s32 %s135, 1
    %p139 = scmp.eq.s32.totalorder %s12, 1
    %p140 = scmp.ne.s32.totalorder %s135, %s137
    %p141 = scmp.eq.s32.totalorder %s12, 0
    %p142 = por %p140, %p141
    %p143 = scmp.ne.s32.totalorder %s135, %s137
    %p144 = scmp.eq.s32.totalorder %s17, 1
    %p145 = por %p143, %p144
    %p146 = scmp.ne.s32.totalorder %s137, %s138
    %p147 = scmp.eq.s32.totalorder %s17, 0
    %p148 = por %p146, %p147
    %p149 = scmp.ne.s32.totalorder %s137, %s138
    %p150 = scmp.eq.s32.totalorder %s18, 1
    %p151 = por %p149, %p150
    %p153 = scmp.ne.s32.totalorder %s138, %s152
    %p154 = scmp.eq.s32.totalorder %s18, 0
    %p155 = por %p153, %p154
    %s156 = ssub.s32 %s12, %s19
    %p157 = scmp.eq.s32.totalorder %s156, 0
    %s159 = sadd.s32 %s158, 1
    %s160 = scalar_select %p157, %s158, %s159
    %p163 = pneg %p157
    %p164 = scmp.eq.s32.totalorder %s12, 1
    %p165 = por %p163, %p164
    %p166 = scmp.ne.s32.totalorder %s158, %s161
    %p167 = scmp.eq.s32.totalorder %s12, 0
    %p168 = por %p166, %p167
    %p169 = scmp.ne.s32.totalorder %s158, %s161
    %p170 = scmp.eq.s32.totalorder %s17, 1
    %p171 = por %p169, %p170
    %p172 = scmp.ne.s32.totalorder %s161, %s162
    %p173 = scmp.eq.s32.totalorder %s17, 0
    %p174 = por %p172, %p173
    %p175 = scmp.ne.s32.totalorder %s161, %s162
    %p176 = scmp.eq.s32.totalorder %s18, 1
    %p177 = por %p175, %p176
    %p179 = scmp.ne.s32.totalorder %s162, %s178
    %p180 = scmp.eq.s32.totalorder %s18, 0
    %p181 = por %p179, %p180
    %p182 = scmp.le.s32.totalorder 1, %s12
    %p183 = scmp.lt.s32.totalorder %s12, 3
    %p184 = pnand %p182, %p183
    %p185 = pneg %p184
    // Predicated region
    $region9: #{unet_up_forward.1} parent=5 // pred_check
      _
    $region10: #{unet_up_forward.1} parent=5 // pred_check_branch
      %187 = sbr.rel (%p184) target = $region12
    $region11: #{unet_up_forward.1} parent=5 // pred_region
      %s188 = ssub.s32 %s12, 1
      // Predicated region
      $region13: #{unet_up_forward.1} parent=11 // pred_check
        %p189 = pneg %p85
      $region14: #{unet_up_forward.1} parent=11 // pred_check_branch
        %191 = sbr.rel (%p189) target = $region16
      $region15: #{unet_up_forward.1} parent=11 // pred_region
        _
      $region16: #{unet_up_forward.1} parent=11 // pred_fallthru
        _
      // Predicated region
      $region17: #{unet_up_forward.1} parent=11 // pred_check
        %p192 = pneg %p106
      $region18: #{unet_up_forward.1} parent=11 // pred_check_branch
        %194 = sbr.rel (%p192) target = $region20
      $region19: #{unet_up_forward.1} parent=11 // pred_region
        _
      $region20: #{unet_up_forward.1} parent=11 // pred_fallthru
        _
      // Predicated region
      $region21: #{unet_up_forward.1} parent=11 // pred_check
        %p195 = pneg %p127
      $region22: #{unet_up_forward.1} parent=11 // pred_check_branch
        %197 = sbr.rel (%p195) target = $region24
      $region23: #{unet_up_forward.1} parent=11 // pred_region
        _
      $region24: #{unet_up_forward.1} parent=11 // pred_fallthru
        _
      // Predicated region
      $region25: #{unet_up_forward.1} parent=11 // pred_check
        %p198 = pneg %p148
      $region26: #{unet_up_forward.1} parent=11 // pred_check_branch
        %200 = sbr.rel (%p198) target = $region28
      $region27: #{unet_up_forward.1} parent=11 // pred_region
        _
      $region28: #{unet_up_forward.1} parent=11 // pred_fallthru
        _
    $region12: #{unet_up_forward.1} parent=5 // pred_fallthru
      _
    %p201 = scmp.lt.s32.totalorder %s12, 2
    // Predicated region
    $region29: #{unet_up_forward.1} parent=5 // pred_check
      %p202 = pneg %p201
    $region30: #{unet_up_forward.1} parent=5 // pred_check_branch
      %204 = sbr.rel (%p202) target = $region32
    $region31: #{unet_up_forward.1} parent=5 // pred_region
      // Predicated region
      $region33: #{unet_up_forward.1} parent=31 // pred_check
        %p205 = pneg %p32
      $region34: #{unet_up_forward.1} parent=31 // pred_check_branch
        %207 = sbr.rel (%p205) target = $region36
      $region35: #{unet_up_forward.1} parent=31 // pred_region
        %p208 = scmp.lt.s32.totalorder %s12, 1
        %s209 = scalar_select %p208, %s12, 1
        %s210 = smul.addr %s209, 32
        %s211 = smul.addr %s210, 4
        %s212 = scalar_lea.vmem %s0, %s211
      $region36: #{unet_up_forward.1} parent=31 // pred_fallthru
        _
      // Predicated region
      $region37: #{unet_up_forward.1} parent=31 // pred_check
        %p213 = pneg %p58
      $region38: #{unet_up_forward.1} parent=31 // pred_check_branch
        %215 = sbr.rel (%p213) target = $region40
      $region39: #{unet_up_forward.1} parent=31 // pred_region
        %p216 = scmp.lt.s32.totalorder %s12, 1
        %s217 = scalar_select %p216, %s12, 1
        %s218 = smul.addr %s217, 32
        %s219 = smul.addr %s218, 4
        %s220 = scalar_lea.vmem %s1, %s219
      $region40: #{unet_up_forward.1} parent=31 // pred_fallthru
        _
    $region32: #{unet_up_forward.1} parent=5 // pred_fallthru
      _
    %p221 = scmp.le.s32.totalorder 1, %s12
    %p222 = scmp.lt.s32.totalorder %s12, 3
    %p223 = pnand %p221, %p222
    %p224 = pneg %p223
    // Predicated region
    $region41: #{unet_up_forward.1} parent=5 // pred_check
      _
    $region42: #{unet_up_forward.1} parent=5 // pred_check_branch
      %226 = sbr.rel (%p223) target = $region44
    $region43: #{unet_up_forward.1} parent=5 // pred_region
      %s227 = ssub.s32 %s12, 1
      %p228 = scmp.lt.s32.totalorder %s17, 1
      %s229 = scalar_select %p228, %s17, 1
      %s230 = smul.addr %s229, 32
      %s231 = smul.addr %s230, 4
      %s232 = scalar_lea.vmem %s0, %s231
      %p233 = pneg %p38
      %p234 = pneg %p35
      %p235 = scmp.lt.s32.totalorder %s17, 1
      %s236 = scalar_select %p235, %s17, 1
      %s237 = smul.addr %s236, 32
      %s238 = smul.addr %s237, 4
      %s239 = scalar_lea.vmem %s1, %s238
      %p240 = pneg %p64
      %p241 = pneg %p61
      %p242 = pneg %p85
      %p243 = pneg %p82
      %p244 = pneg %p106
      %p245 = pneg %p103
      %p246 = pneg %p127
      %p247 = pneg %p124
      %p248 = pneg %p148
      %p249 = pneg %p145
      %p250 = pneg %p174
      %p251 = pneg %p171
      %p252 = scmp.lt.s32.totalorder %s17, 1
      %s253 = scalar_select %p252, %s17, 1
      %s254 = smul.addr %s253, 32
      %s255 = smul.addr %s254, 8
      %s256 = scalar_lea.vmem %s6, %s255
      %p257 = scmp.lt.s32.totalorder %s17, 1
      %s258 = scalar_select %p257, %s17, 1
      %s259 = smul.addr %s258, 32
      %s260 = smul.addr %s259, 4
      %s261 = scalar_lea.vmem %s0, %s260
      %p262 = scmp.lt.s32.totalorder %s17, 1
      %s263 = scalar_select %p262, %s17, 1
      %s264 = smul.addr %s263, 32
      %s265 = smul.addr %s264, 4
      %s266 = scalar_lea.vmem %s1, %s265
      %p267 = scmp.lt.s32.totalorder %s17, 1
      %s268 = scalar_select %p267, %s17, 1
      %s269 = smul.addr %s268, 32
      %s270 = smul.addr %s269, 8
      %s271 = scalar_lea.vmem %s6, %s270
      %p273 = scmp.eq.s32.totalorder %s17, 0
      // Predicated region
      $region45: #{unet_up_forward.1} parent=43 // pred_check
        %p274 = pneg %p273
      $region46: #{unet_up_forward.1} parent=43 // pred_check_branch
        %276 = sbr.rel (%p274) target = $region48
      $region47: #{unet_up_forward.1} parent=43 // pred_region
        %vm277 = vcmask 97280
        %278 = vst.msk [vmem:[#allocation2] sm:$0xff] %vm277, 0.0
        %279 = vst.msk [vmem:[#allocation2 + $0x8] sm:$0xff] %vm277, 0.0
        %vm280 = vcmask 91136
        %281 = vst.msk [vmem:[#allocation2 + $0x10] sm:$0x3] %vm280, 0.0
        %282 = vst.msk [vmem:[#allocation2 + $0x18] sm:$0xff] %vm277, 0.0
        %283 = vst.msk [vmem:[#allocation2 + $0x20] sm:$0xff] %vm277, 0.0
        %284 = vst.msk [vmem:[#allocation2 + $0x28] sm:$0x3] %vm280, 0.0
        %285 = vst.msk [vmem:[#allocation2 + $0x30] sm:$0xff] %vm277, 0.0
        %286 = vst.msk [vmem:[#allocation2 + $0x38] sm:$0xff] %vm277, 0.0
        %287 = vst.msk [vmem:[#allocation2 + $0x40] sm:$0x3] %vm280, 0.0
        %288 = vst.msk [vmem:[#allocation2 + $0x48] sm:$0xff] %vm277, 0.0
        %289 = vst.msk [vmem:[#allocation2 + $0x50] sm:$0xff] %vm277, 0.0
        %290 = vst.msk [vmem:[#allocation2 + $0x58] sm:$0x3] %vm280, 0.0
        %291 = vst.msk [vmem:[#allocation2 + $0x60] sm:$0xff] %vm277, 0.0
        %292 = vst.msk [vmem:[#allocation2 + $0x68] sm:$0xff] %vm277, 0.0
        %293 = vst.msk [vmem:[#allocation2 + $0x70] sm:$0x3] %vm280, 0.0
        %294 = vst.msk [vmem:[#allocation2 + $0x78] sm:$0xff] %vm277, 0.0
        %295 = vst.msk [vmem:[#allocation2 + $0x80] sm:$0xff] %vm277, 0.0
        %296 = vst.msk [vmem:[#allocation2 + $0x88] sm:$0x3] %vm280, 0.0
        %297 = vst.msk [vmem:[#allocation2 + $0x90] sm:$0xff] %vm277, 0.0
        %298 = vst.msk [vmem:[#allocation2 + $0x98] sm:$0xff] %vm277, 0.0
        %299 = vst.msk [vmem:[#allocation2 + $0xa0] sm:$0x3] %vm280, 0.0
        %300 = vst.msk [vmem:[#allocation2 + $0xa8] sm:$0xff] %vm277, 0.0
        %301 = vst.msk [vmem:[#allocation2 + $0xb0] sm:$0xff] %vm277, 0.0
        %302 = vst.msk [vmem:[#allocation2 + $0xb8] sm:$0x3] %vm280, 0.0
        %303 = vst.msk [vmem:[#allocation2 + $0xc0] sm:$0xff] %vm277, 0.0
        %304 = vst.msk [vmem:[#allocation2 + $0xc8] sm:$0xff] %vm277, 0.0
        %305 = vst.msk [vmem:[#allocation2 + $0xd0] sm:$0x3] %vm280, 0.0
        %306 = vst.msk [vmem:[#allocation2 + $0xd8] sm:$0xff] %vm277, 0.0
        %307 = vst.msk [vmem:[#allocation2 + $0xe0] sm:$0xff] %vm277, 0.0
        %308 = vst.msk [vmem:[#allocation2 + $0xe8] sm:$0x3] %vm280, 0.0
        %309 = vst.msk [vmem:[#allocation2 + $0xf0] sm:$0xff] %vm277, 0.0
        %310 = vst.msk [vmem:[#allocation2 + $0xf8] sm:$0xff] %vm277, 0.0
        %311 = vst.msk [vmem:[#allocation2 + $0x100] sm:$0x3] %vm280, 0.0
        %312 = vst.msk [vmem:[#allocation2 + $0x108] sm:$0xff] %vm277, 0.0
        %313 = vst.msk [vmem:[#allocation2 + $0x110] sm:$0xff] %vm277, 0.0
        %314 = vst.msk [vmem:[#allocation2 + $0x118] sm:$0x3] %vm280, 0.0
        %315 = vst.msk [vmem:[#allocation2 + $0x120] sm:$0xff] %vm277, 0.0
        %316 = vst.msk [vmem:[#allocation2 + $0x128] sm:$0xff] %vm277, 0.0
        %317 = vst.msk [vmem:[#allocation2 + $0x130] sm:$0x3] %vm280, 0.0
        %318 = vst.msk [vmem:[#allocation2 + $0x138] sm:$0xff] %vm277, 0.0
        %319 = vst.msk [vmem:[#allocation2 + $0x140] sm:$0xff] %vm277, 0.0
        %320 = vst.msk [vmem:[#allocation2 + $0x148] sm:$0x3] %vm280, 0.0
        %321 = vst.msk [vmem:[#allocation2 + $0x150] sm:$0xff] %vm277, 0.0
        %322 = vst.msk [vmem:[#allocation2 + $0x158] sm:$0xff] %vm277, 0.0
        %323 = vst.msk [vmem:[#allocation2 + $0x160] sm:$0x3] %vm280, 0.0
        %324 = vst.msk [vmem:[#allocation2 + $0x168] sm:$0xff] %vm277, 0.0
        %325 = vst.msk [vmem:[#allocation2 + $0x170] sm:$0xff] %vm277, 0.0
        %326 = vst.msk [vmem:[#allocation2 + $0x178] sm:$0x3] %vm280, 0.0
        %327 = vst.msk [vmem:[#allocation2 + $0x180] sm:$0xff] %vm277, 0.0
        %328 = vst.msk [vmem:[#allocation2 + $0x188] sm:$0xff] %vm277, 0.0
        %329 = vst.msk [vmem:[#allocation2 + $0x190] sm:$0x3] %vm280, 0.0
        %330 = vst.msk [vmem:[#allocation2 + $0x198] sm:$0xff] %vm277, 0.0
        %331 = vst.msk [vmem:[#allocation2 + $0x1a0] sm:$0xff] %vm277, 0.0
        %332 = vst.msk [vmem:[#allocation2 + $0x1a8] sm:$0x3] %vm280, 0.0
        %vm333 = vcmask 64512
        %334 = vst.msk [vmem:[#allocation3] sm:$0xff] %vm333, 0.0
        %335 = vst.msk [vmem:[#allocation3 + $0x8] sm:$0xff] %vm333, 0.0
        %vm336 = vcmask 58368
        %337 = vst.msk [vmem:[#allocation3 + $0x10] sm:$0x3] %vm336, 0.0
        %338 = vst.msk [vmem:[#allocation3 + $0x18] sm:$0xff] %vm333, 0.0
        %339 = vst.msk [vmem:[#allocation3 + $0x20] sm:$0xff] %vm333, 0.0
        %340 = vst.msk [vmem:[#allocation3 + $0x28] sm:$0x3] %vm336, 0.0
        %341 = vst.msk [vmem:[#allocation3 + $0x30] sm:$0xff] %vm333, 0.0
        %342 = vst.msk [vmem:[#allocation3 + $0x38] sm:$0xff] %vm333, 0.0
        %343 = vst.msk [vmem:[#allocation3 + $0x40] sm:$0x3] %vm336, 0.0
        %344 = vst.msk [vmem:[#allocation3 + $0x48] sm:$0xff] %vm333, 0.0
        %345 = vst.msk [vmem:[#allocation3 + $0x50] sm:$0xff] %vm333, 0.0
        %346 = vst.msk [vmem:[#allocation3 + $0x58] sm:$0x3] %vm336, 0.0
        %347 = vst.msk [vmem:[#allocation3 + $0x60] sm:$0xff] %vm333, 0.0
        %348 = vst.msk [vmem:[#allocation3 + $0x68] sm:$0xff] %vm333, 0.0
        %349 = vst.msk [vmem:[#allocation3 + $0x70] sm:$0x3] %vm336, 0.0
        %350 = vst.msk [vmem:[#allocation3 + $0x78] sm:$0xff] %vm333, 0.0
        %351 = vst.msk [vmem:[#allocation3 + $0x80] sm:$0xff] %vm333, 0.0
        %352 = vst.msk [vmem:[#allocation3 + $0x88] sm:$0x3] %vm336, 0.0
        %353 = vst.msk [vmem:[#allocation3 + $0x90] sm:$0xff] %vm333, 0.0
        %354 = vst.msk [vmem:[#allocation3 + $0x98] sm:$0xff] %vm333, 0.0
        %355 = vst.msk [vmem:[#allocation3 + $0xa0] sm:$0x3] %vm336, 0.0
        %356 = vst.msk [vmem:[#allocation3 + $0xa8] sm:$0xff] %vm333, 0.0
        %357 = vst.msk [vmem:[#allocation3 + $0xb0] sm:$0xff] %vm333, 0.0
        %358 = vst.msk [vmem:[#allocation3 + $0xb8] sm:$0x3] %vm336, 0.0
        %359 = vst.msk [vmem:[#allocation3 + $0xc0] sm:$0xff] %vm333, 0.0
        %360 = vst.msk [vmem:[#allocation3 + $0xc8] sm:$0xff] %vm333, 0.0
        %361 = vst.msk [vmem:[#allocation3 + $0xd0] sm:$0x3] %vm336, 0.0
        %362 = vst.msk [vmem:[#allocation3 + $0xd8] sm:$0xff] %vm333, 0.0
        %363 = vst.msk [vmem:[#allocation3 + $0xe0] sm:$0xff] %vm333, 0.0
        %364 = vst.msk [vmem:[#allocation3 + $0xe8] sm:$0x3] %vm336, 0.0
        %365 = vst.msk [vmem:[#allocation3 + $0xf0] sm:$0xff] %vm333, 0.0
        %366 = vst.msk [vmem:[#allocation3 + $0xf8] sm:$0xff] %vm333, 0.0
        %367 = vst.msk [vmem:[#allocation3 + $0x100] sm:$0x3] %vm336, 0.0
        %368 = vst.msk [vmem:[#allocation3 + $0x108] sm:$0xff] %vm333, 0.0
        %369 = vst.msk [vmem:[#allocation3 + $0x110] sm:$0xff] %vm333, 0.0
        %370 = vst.msk [vmem:[#allocation3 + $0x118] sm:$0x3] %vm336, 0.0
        %371 = vst.msk [vmem:[#allocation3 + $0x120] sm:$0xff] %vm333, 0.0
        %372 = vst.msk [vmem:[#allocation3 + $0x128] sm:$0xff] %vm333, 0.0
        %373 = vst.msk [vmem:[#allocation3 + $0x130] sm:$0x3] %vm336, 0.0
        %374 = vst.msk [vmem:[#allocation3 + $0x138] sm:$0xff] %vm333, 0.0
        %375 = vst.msk [vmem:[#allocation3 + $0x140] sm:$0xff] %vm333, 0.0
        %376 = vst.msk [vmem:[#allocation3 + $0x148] sm:$0x3] %vm336, 0.0
        %377 = vst.msk [vmem:[#allocation3 + $0x150] sm:$0xff] %vm333, 0.0
        %378 = vst.msk [vmem:[#allocation3 + $0x158] sm:$0xff] %vm333, 0.0
        %379 = vst.msk [vmem:[#allocation3 + $0x160] sm:$0x3] %vm336, 0.0
        %380 = vst.msk [vmem:[#allocation3 + $0x168] sm:$0xff] %vm333, 0.0
        %381 = vst.msk [vmem:[#allocation3 + $0x170] sm:$0xff] %vm333, 0.0
        %382 = vst.msk [vmem:[#allocation3 + $0x178] sm:$0x3] %vm336, 0.0
        %383 = vst.msk [vmem:[#allocation3 + $0x180] sm:$0xff] %vm333, 0.0
        %384 = vst.msk [vmem:[#allocation3 + $0x188] sm:$0xff] %vm333, 0.0
        %385 = vst.msk [vmem:[#allocation3 + $0x190] sm:$0x3] %vm336, 0.0
        %386 = vst.msk [vmem:[#allocation3 + $0x198] sm:$0xff] %vm333, 0.0
        %387 = vst.msk [vmem:[#allocation3 + $0x1a0] sm:$0xff] %vm333, 0.0
        %388 = vst.msk [vmem:[#allocation3 + $0x1a8] sm:$0x3] %vm336, 0.0
      $region48: #{unet_up_forward.1} parent=43 // pred_fallthru
        _
      %v389 = vld [vmem:[%s261] sm:$0xf]
      %v390 = vld [vmem:[%s261 + $0x4] sm:$0xf]
      %v391 = vld [vmem:[%s261 + $0x8] sm:$0xf]
      %v392 = vld [vmem:[%s261 + $0xc] sm:$0xf]
      %v393 = vld [vmem:[%s261 + $0x10] sm:$0xf]
      %v394 = vld [vmem:[%s261 + $0x14] sm:$0xf]
      %v395 = vld [vmem:[%s261 + $0x18] sm:$0xf]
      %v396 = vld [vmem:[%s261 + $0x1c] sm:$0xf]
      %v397 = vld [vmem:[%s261 + $0x20] sm:$0xf]
      %v398 = vld [vmem:[%s261 + $0x24] sm:$0xf]
      %v399 = vld [vmem:[%s261 + $0x28] sm:$0xf]
      %v400 = vld [vmem:[%s261 + $0x2c] sm:$0xf]
      %v401 = vld [vmem:[%s261 + $0x30] sm:$0xf]
      %v402 = vld [vmem:[%s261 + $0x34] sm:$0xf]
      %v403 = vld [vmem:[%s261 + $0x38] sm:$0xf]
      %v404 = vld [vmem:[%s261 + $0x3c] sm:$0xf]
      %v405 = vld [vmem:[%s261 + $0x40] sm:$0xf]
      %v406 = vld [vmem:[%s261 + $0x44] sm:$0xf]
      %v407 = vld [vmem:[%s261 + $0x48] sm:$0xf]
      %v408 = vld [vmem:[%s261 + $0x4c] sm:$0xf]
      %v409 = vld [vmem:[%s261 + $0x50] sm:$0xf]
      %v410 = vld [vmem:[%s261 + $0x54] sm:$0xf]
      %v411 = vld [vmem:[%s261 + $0x58] sm:$0xf]
      %v412 = vld [vmem:[%s261 + $0x5c] sm:$0xf]
      %v413 = vld [vmem:[%s261 + $0x60] sm:$0xf]
      %v414 = vld [vmem:[%s261 + $0x64] sm:$0xf]
      %v415 = vld [vmem:[%s261 + $0x68] sm:$0xf]
      %v416 = vld [vmem:[%s261 + $0x6c] sm:$0xf]
      %v417 = vld [vmem:[%s261 + $0x70] sm:$0xf]
      %v418 = vld [vmem:[%s261 + $0x74] sm:$0xf]
      %v419 = vld [vmem:[%s261 + $0x78] sm:$0xf]
      %v420 = vld [vmem:[%s261 + $0x7c] sm:$0xf]
      %v421 = vunpack.c.l.bf16 %v389
      %v422 = vunpack.c.l.bf16 %v390
      %v423 = vunpack.c.l.bf16 %v391
      %v424 = vunpack.c.l.bf16 %v392
      %v425 = vunpack.c.l.bf16 %v393
      %v426 = vunpack.c.l.bf16 %v394
      %v427 = vunpack.c.l.bf16 %v395
      %v428 = vunpack.c.l.bf16 %v396
      %v429 = vunpack.c.l.bf16 %v397
      %v430 = vunpack.c.l.bf16 %v398
      %v431 = vunpack.c.l.bf16 %v399
      %v432 = vunpack.c.l.bf16 %v400
      %v433 = vunpack.c.l.bf16 %v401
      %v434 = vunpack.c.l.bf16 %v402
      %v435 = vunpack.c.l.bf16 %v403
      %v436 = vunpack.c.l.bf16 %v404
      %v437 = vunpack.c.l.bf16 %v405
      %v438 = vunpack.c.l.bf16 %v406
      %v439 = vunpack.c.l.bf16 %v407
      %v440 = vunpack.c.l.bf16 %v408
      %v441 = vunpack.c.l.bf16 %v409
      %v442 = vunpack.c.l.bf16 %v410
      %v443 = vunpack.c.l.bf16 %v411
      %v444 = vunpack.c.l.bf16 %v412
      %v445 = vunpack.c.l.bf16 %v413
      %v446 = vunpack.c.l.bf16 %v414
      %v447 = vunpack.c.l.bf16 %v415
      %v448 = vunpack.c.l.bf16 %v416
      %v449 = vunpack.c.l.bf16 %v417
      %v450 = vunpack.c.l.bf16 %v418
      %v451 = vunpack.c.l.bf16 %v419
      %v452 = vunpack.c.l.bf16 %v420
      %v453 = vld [vmem:[%s266] sm:$0xf]
      %v454 = vld [vmem:[%s266 + $0x4] sm:$0xf]
      %v455 = vld [vmem:[%s266 + $0x8] sm:$0xf]
      %v456 = vld [vmem:[%s266 + $0xc] sm:$0xf]
      %v457 = vld [vmem:[%s266 + $0x10] sm:$0xf]
      %v458 = vld [vmem:[%s266 + $0x14] sm:$0xf]
      %v459 = vld [vmem:[%s266 + $0x18] sm:$0xf]
      %v460 = vld [vmem:[%s266 + $0x1c] sm:$0xf]
      %v461 = vld [vmem:[%s266 + $0x20] sm:$0xf]
      %v462 = vld [vmem:[%s266 + $0x24] sm:$0xf]
      %v463 = vld [vmem:[%s266 + $0x28] sm:$0xf]
      %v464 = vld [vmem:[%s266 + $0x2c] sm:$0xf]
      %v465 = vld [vmem:[%s266 + $0x30] sm:$0xf]
      %v466 = vld [vmem:[%s266 + $0x34] sm:$0xf]
      %v467 = vld [vmem:[%s266 + $0x38] sm:$0xf]
      %v468 = vld [vmem:[%s266 + $0x3c] sm:$0xf]
      %v469 = vld [vmem:[%s266 + $0x40] sm:$0xf]
      %v470 = vld [vmem:[%s266 + $0x44] sm:$0xf]
      %v471 = vld [vmem:[%s266 + $0x48] sm:$0xf]
      %v472 = vld [vmem:[%s266 + $0x4c] sm:$0xf]
      %v473 = vld [vmem:[%s266 + $0x50] sm:$0xf]
      %v474 = vld [vmem:[%s266 + $0x54] sm:$0xf]
      %v475 = vld [vmem:[%s266 + $0x58] sm:$0xf]
      %v476 = vld [vmem:[%s266 + $0x5c] sm:$0xf]
      %v477 = vld [vmem:[%s266 + $0x60] sm:$0xf]
      %v478 = vld [vmem:[%s266 + $0x64] sm:$0xf]
      %v479 = vld [vmem:[%s266 + $0x68] sm:$0xf]
      %v480 = vld [vmem:[%s266 + $0x6c] sm:$0xf]
      %v481 = vld [vmem:[%s266 + $0x70] sm:$0xf]
      %v482 = vld [vmem:[%s266 + $0x74] sm:$0xf]
      %v483 = vld [vmem:[%s266 + $0x78] sm:$0xf]
      %v484 = vld [vmem:[%s266 + $0x7c] sm:$0xf]
      %v485 = vunpack.c.l.bf16 %v453
      %v486 = vunpack.c.l.bf16 %v454
      %v487 = vunpack.c.l.bf16 %v455
      %v488 = vunpack.c.l.bf16 %v456
      %v489 = vunpack.c.l.bf16 %v457
      %v490 = vunpack.c.l.bf16 %v458
      %v491 = vunpack.c.l.bf16 %v459
      %v492 = vunpack.c.l.bf16 %v460
      %v493 = vunpack.c.l.bf16 %v461
      %v494 = vunpack.c.l.bf16 %v462
      %v495 = vunpack.c.l.bf16 %v463
      %v496 = vunpack.c.l.bf16 %v464
      %v497 = vunpack.c.l.bf16 %v465
      %v498 = vunpack.c.l.bf16 %v466
      %v499 = vunpack.c.l.bf16 %v467
      %v500 = vunpack.c.l.bf16 %v468
      %v501 = vunpack.c.l.bf16 %v469
      %v502 = vunpack.c.l.bf16 %v470
      %v503 = vunpack.c.l.bf16 %v471
      %v504 = vunpack.c.l.bf16 %v472
      %v505 = vunpack.c.l.bf16 %v473
      %v506 = vunpack.c.l.bf16 %v474
      %v507 = vunpack.c.l.bf16 %v475
      %v508 = vunpack.c.l.bf16 %v476
      %v509 = vunpack.c.l.bf16 %v477
      %v510 = vunpack.c.l.bf16 %v478
      %v511 = vunpack.c.l.bf16 %v479
      %v512 = vunpack.c.l.bf16 %v480
      %v513 = vunpack.c.l.bf16 %v481
      %v514 = vunpack.c.l.bf16 %v482
      %v515 = vunpack.c.l.bf16 %v483
      %v516 = vunpack.c.l.bf16 %v484
      %549 = vrot.lane.b32.xlu0 %v485, 4
      %v550 = vpop.permute.xlu0 %549
      %551 = vrot.lane.b32.xlu0 %v486, 4
      %v552 = vpop.permute.xlu0 %551
      %553 = vrot.lane.b32.xlu0 %v487, 4
      %v554 = vpop.permute.xlu0 %553
      %555 = vrot.lane.b32.xlu0 %v488, 4
      %v556 = vpop.permute.xlu0 %555
      %557 = vrot.lane.b32.xlu0 %v489, 4
      %v558 = vpop.permute.xlu0 %557
      %559 = vrot.lane.b32.xlu0 %v490, 4
      %v560 = vpop.permute.xlu0 %559
      %561 = vrot.lane.b32.xlu0 %v491, 4
      %v562 = vpop.permute.xlu0 %561
      %563 = vrot.lane.b32.xlu0 %v492, 4
      %v564 = vpop.permute.xlu0 %563
      %565 = vrot.lane.b32.xlu0 %v493, 4
      %v566 = vpop.permute.xlu0 %565
      %567 = vrot.lane.b32.xlu0 %v494, 4
      %v568 = vpop.permute.xlu0 %567
      %569 = vrot.lane.b32.xlu0 %v495, 4
      %v570 = vpop.permute.xlu0 %569
      %571 = vrot.lane.b32.xlu0 %v496, 4
      %v572 = vpop.permute.xlu0 %571
      %573 = vrot.lane.b32.xlu0 %v497, 4
      %v574 = vpop.permute.xlu0 %573
      %575 = vrot.lane.b32.xlu0 %v498, 4
      %v576 = vpop.permute.xlu0 %575
      %577 = vrot.lane.b32.xlu0 %v499, 4
      %v578 = vpop.permute.xlu0 %577
      %579 = vrot.lane.b32.xlu0 %v500, 4
      %v580 = vpop.permute.xlu0 %579
      %581 = vrot.lane.b32.xlu0 %v501, 4
      %v582 = vpop.permute.xlu0 %581
      %583 = vrot.lane.b32.xlu0 %v502, 4
      %v584 = vpop.permute.xlu0 %583
      %585 = vrot.lane.b32.xlu0 %v503, 4
      %v586 = vpop.permute.xlu0 %585
      %587 = vrot.lane.b32.xlu0 %v504, 4
      %v588 = vpop.permute.xlu0 %587
      %589 = vrot.lane.b32.xlu0 %v505, 4
      %v590 = vpop.permute.xlu0 %589
      %591 = vrot.lane.b32.xlu0 %v506, 4
      %v592 = vpop.permute.xlu0 %591
      %593 = vrot.lane.b32.xlu0 %v507, 4
      %v594 = vpop.permute.xlu0 %593
      %595 = vrot.lane.b32.xlu0 %v508, 4
      %v596 = vpop.permute.xlu0 %595
      %597 = vrot.lane.b32.xlu0 %v509, 4
      %v598 = vpop.permute.xlu0 %597
      %599 = vrot.lane.b32.xlu0 %v510, 4
      %v600 = vpop.permute.xlu0 %599
      %601 = vrot.lane.b32.xlu0 %v511, 4
      %v602 = vpop.permute.xlu0 %601
      %603 = vrot.lane.b32.xlu0 %v512, 4
      %v604 = vpop.permute.xlu0 %603
      %605 = vrot.lane.b32.xlu0 %v513, 4
      %v606 = vpop.permute.xlu0 %605
      %607 = vrot.lane.b32.xlu0 %v514, 4
      %v608 = vpop.permute.xlu0 %607
      %609 = vrot.lane.b32.xlu0 %v515, 4
      %v610 = vpop.permute.xlu0 %609
      %611 = vrot.lane.b32.xlu0 %v516, 4
      %v612 = vpop.permute.xlu0 %611
      %vm645 = vcmask 31744
      %v646 = vsel %vm645, %v421, %v550
      %v647 = vsel %vm645, %v422, %v552
      %v648 = vsel %vm645, %v423, %v554
      %v649 = vsel %vm645, %v424, %v556
      %v650 = vsel %vm645, %v425, %v558
      %v651 = vsel %vm645, %v426, %v560
      %v652 = vsel %vm645, %v427, %v562
      %v653 = vsel %vm645, %v428, %v564
      %v654 = vsel %vm645, %v429, %v566
      %v655 = vsel %vm645, %v430, %v568
      %v656 = vsel %vm645, %v431, %v570
      %v657 = vsel %vm645, %v432, %v572
      %v658 = vsel %vm645, %v433, %v574
      %v659 = vsel %vm645, %v434, %v576
      %v660 = vsel %vm645, %v435, %v578
      %v661 = vsel %vm645, %v436, %v580
      %v662 = vsel %vm645, %v437, %v582
      %v663 = vsel %vm645, %v438, %v584
      %v664 = vsel %vm645, %v439, %v586
      %v665 = vsel %vm645, %v440, %v588
      %v666 = vsel %vm645, %v441, %v590
      %v667 = vsel %vm645, %v442, %v592
      %v668 = vsel %vm645, %v443, %v594
      %v669 = vsel %vm645, %v444, %v596
      %v670 = vsel %vm645, %v445, %v598
      %v671 = vsel %vm645, %v446, %v600
      %v672 = vsel %vm645, %v447, %v602
      %v673 = vsel %vm645, %v448, %v604
      %v674 = vsel %vm645, %v449, %v606
      %v675 = vsel %vm645, %v450, %v608
      %v676 = vsel %vm645, %v451, %v610
      %v677 = vsel %vm645, %v452, %v612
      %s678 = scalar_lea.vmem [#allocation2], 24
      %vm679 = vcmask 97280
      %680 = vst.msk [vmem:[%s678 + $0x1] sm:$0xff] %vm679, %v646
      %681 = vst.msk [vmem:[%s678 + $0x9] sm:$0xff] %vm679, %v647
      %682 = vst.msk [vmem:[%s678 + $0x19] sm:$0xff] %vm679, %v648
      %683 = vst.msk [vmem:[%s678 + $0x21] sm:$0xff] %vm679, %v649
      %684 = vst.msk [vmem:[%s678 + $0x31] sm:$0xff] %vm679, %v650
      %685 = vst.msk [vmem:[%s678 + $0x39] sm:$0xff] %vm679, %v651
      %686 = vst.msk [vmem:[%s678 + $0x49] sm:$0xff] %vm679, %v652
      %687 = vst.msk [vmem:[%s678 + $0x51] sm:$0xff] %vm679, %v653
      %688 = vst.msk [vmem:[%s678 + $0x61] sm:$0xff] %vm679, %v654
      %689 = vst.msk [vmem:[%s678 + $0x69] sm:$0xff] %vm679, %v655
      %690 = vst.msk [vmem:[%s678 + $0x79] sm:$0xff] %vm679, %v656
      %691 = vst.msk [vmem:[%s678 + $0x81] sm:$0xff] %vm679, %v657
      %692 = vst.msk [vmem:[%s678 + $0x91] sm:$0xff] %vm679, %v658
      %693 = vst.msk [vmem:[%s678 + $0x99] sm:$0xff] %vm679, %v659
      %694 = vst.msk [vmem:[%s678 + $0xa9] sm:$0xff] %vm679, %v660
      %695 = vst.msk [vmem:[%s678 + $0xb1] sm:$0xff] %vm679, %v661
      %696 = vst.msk [vmem:[%s678 + $0xc1] sm:$0xff] %vm679, %v662
      %697 = vst.msk [vmem:[%s678 + $0xc9] sm:$0xff] %vm679, %v663
      %698 = vst.msk [vmem:[%s678 + $0xd9] sm:$0xff] %vm679, %v664
      %699 = vst.msk [vmem:[%s678 + $0xe1] sm:$0xff] %vm679, %v665
      %700 = vst.msk [vmem:[%s678 + $0xf1] sm:$0xff] %vm679, %v666
      %701 = vst.msk [vmem:[%s678 + $0xf9] sm:$0xff] %vm679, %v667
      %702 = vst.msk [vmem:[%s678 + $0x109] sm:$0xff] %vm679, %v668
      %703 = vst.msk [vmem:[%s678 + $0x111] sm:$0xff] %vm679, %v669
      %704 = vst.msk [vmem:[%s678 + $0x121] sm:$0xff] %vm679, %v670
      %705 = vst.msk [vmem:[%s678 + $0x129] sm:$0xff] %vm679, %v671
      %706 = vst.msk [vmem:[%s678 + $0x139] sm:$0xff] %vm679, %v672
      %707 = vst.msk [vmem:[%s678 + $0x141] sm:$0xff] %vm679, %v673
      %708 = vst.msk [vmem:[%s678 + $0x151] sm:$0xff] %vm679, %v674
      %709 = vst.msk [vmem:[%s678 + $0x159] sm:$0xff] %vm679, %v675
      %710 = vst.msk [vmem:[%s678 + $0x169] sm:$0xff] %vm679, %v676
      %711 = vst.msk [vmem:[%s678 + $0x171] sm:$0xff] %vm679, %v677
      %v712 = vld [vmem:[#allocation2] sm:$0xff]
      %v713 = vld [vmem:[#allocation2 + $0x8] sm:$0xff]
      %v714 = vld [vmem:[#allocation2 + $0x10] sm:$0x3]
      %v715 = vld [vmem:[#allocation2 + $0x18] sm:$0xff]
      %v716 = vld [vmem:[#allocation2 + $0x20] sm:$0xff]
      %v717 = vld [vmem:[#allocation2 + $0x28] sm:$0x3]
      %v718 = vld [vmem:[#allocation2 + $0x30] sm:$0xff]
      %v719 = vld [vmem:[#allocation2 + $0x38] sm:$0xff]
      %v720 = vld [vmem:[#allocation2 + $0x40] sm:$0x3]
      %v721 = vld [vmem:[#allocation2 + $0x48] sm:$0xff]
      %v722 = vld [vmem:[#allocation2 + $0x50] sm:$0xff]
      %v723 = vld [vmem:[#allocation2 + $0x58] sm:$0x3]
      %v724 = vld [vmem:[#allocation2 + $0x60] sm:$0xff]
      %v725 = vld [vmem:[#allocation2 + $0x68] sm:$0xff]
      %v726 = vld [vmem:[#allocation2 + $0x70] sm:$0x3]
      %v727 = vld [vmem:[#allocation2 + $0x78] sm:$0xff]
      %v728 = vld [vmem:[#allocation2 + $0x80] sm:$0xff]
      %v729 = vld [vmem:[#allocation2 + $0x88] sm:$0x3]
      %v730 = vld [vmem:[#allocation2 + $0x90] sm:$0xff]
      %v731 = vld [vmem:[#allocation2 + $0x98] sm:$0xff]
      %v732 = vld [vmem:[#allocation2 + $0xa0] sm:$0x3]
      %v733 = vld [vmem:[#allocation2 + $0xa8] sm:$0xff]
      %v734 = vld [vmem:[#allocation2 + $0xb0] sm:$0xff]
      %v735 = vld [vmem:[#allocation2 + $0xb8] sm:$0x3]
      %v736 = vld [vmem:[#allocation2 + $0xc0] sm:$0xff]
      %v737 = vld [vmem:[#allocation2 + $0xc8] sm:$0xff]
      %v738 = vld [vmem:[#allocation2 + $0xd0] sm:$0x3]
      %v739 = vld [vmem:[#allocation2 + $0xd8] sm:$0xff]
      %v740 = vld [vmem:[#allocation2 + $0xe0] sm:$0xff]
      %v741 = vld [vmem:[#allocation2 + $0xe8] sm:$0x3]
      %v742 = vld [vmem:[#allocation2 + $0xf0] sm:$0xff]
      %v743 = vld [vmem:[#allocation2 + $0xf8] sm:$0xff]
      %v744 = vld [vmem:[#allocation2 + $0x100] sm:$0x3]
      %v745 = vld [vmem:[#allocation2 + $0x108] sm:$0xff]
      %v746 = vld [vmem:[#allocation2 + $0x110] sm:$0xff]
      %v747 = vld [vmem:[#allocation2 + $0x118] sm:$0x3]
      %v748 = vld [vmem:[#allocation2 + $0x120] sm:$0xff]
      %v749 = vld [vmem:[#allocation2 + $0x128] sm:$0xff]
      %v750 = vld [vmem:[#allocation2 + $0x130] sm:$0x3]
      %v751 = vld [vmem:[#allocation2 + $0x138] sm:$0xff]
      %v752 = vld [vmem:[#allocation2 + $0x140] sm:$0xff]
      %v753 = vld [vmem:[#allocation2 + $0x148] sm:$0x3]
      %v754 = vld [vmem:[#allocation2 + $0x150] sm:$0xff]
      %v755 = vld [vmem:[#allocation2 + $0x158] sm:$0xff]
      %v756 = vld [vmem:[#allocation2 + $0x160] sm:$0x3]
      %v757 = vld [vmem:[#allocation2 + $0x168] sm:$0xff]
      %v758 = vld [vmem:[#allocation2 + $0x170] sm:$0xff]
      %v759 = vld [vmem:[#allocation2 + $0x178] sm:$0x3]
      %v760 = vld [vmem:[#allocation2 + $0x180] sm:$0xff]
      %v761 = vld [vmem:[#allocation2 + $0x188] sm:$0xff]
      %v762 = vld [vmem:[#allocation2 + $0x190] sm:$0x3]
      %v763 = vld [vmem:[#allocation2 + $0x198] sm:$0xff]
      %v764 = vld [vmem:[#allocation2 + $0x1a0] sm:$0xff]
      %v765 = vld [vmem:[#allocation2 + $0x1a8] sm:$0x3]
      %vm814 = vcmask 1046528
      %v815 = vrot.slane %v712, 1
      %v816 = vrot.slane %v713, 1
      %v817 = vsel %vm814, %v815, %v816
      %v818 = vrot.slane %v714, 1
      %v819 = vsel %vm814, %v816, %v818
      %v820 = vrot.slane %v715, 1
      %v821 = vrot.slane %v716, 1
      %v822 = vsel %vm814, %v820, %v821
      %v823 = vrot.slane %v717, 1
      %v824 = vsel %vm814, %v821, %v823
      %v825 = vrot.slane %v718, 1
      %v826 = vrot.slane %v719, 1
      %v827 = vsel %vm814, %v825, %v826
      %v828 = vrot.slane %v720, 1
      %v829 = vsel %vm814, %v826, %v828
      %v830 = vrot.slane %v721, 1
      %v831 = vrot.slane %v722, 1
      %v832 = vsel %vm814, %v830, %v831
      %v833 = vrot.slane %v723, 1
      %v834 = vsel %vm814, %v831, %v833
      %v835 = vrot.slane %v724, 1
      %v836 = vrot.slane %v725, 1
      %v837 = vsel %vm814, %v835, %v836
      %v838 = vrot.slane %v726, 1
      %v839 = vsel %vm814, %v836, %v838
      %v840 = vrot.slane %v727, 1
      %v841 = vrot.slane %v728, 1
      %v842 = vsel %vm814, %v840, %v841
      %v843 = vrot.slane %v729, 1
      %v844 = vsel %vm814, %v841, %v843
      %v845 = vrot.slane %v730, 1
      %v846 = vrot.slane %v731, 1
      %v847 = vsel %vm814, %v845, %v846
      %v848 = vrot.slane %v732, 1
      %v849 = vsel %vm814, %v846, %v848
      %v850 = vrot.slane %v733, 1
      %v851 = vrot.slane %v734, 1
      %v852 = vsel %vm814, %v850, %v851
      %v853 = vrot.slane %v735, 1
      %v854 = vsel %vm814, %v851, %v853
      %v855 = vrot.slane %v736, 1
      %v856 = vrot.slane %v737, 1
      %v857 = vsel %vm814, %v855, %v856
      %v858 = vrot.slane %v738, 1
      %v859 = vsel %vm814, %v856, %v858
      %v860 = vrot.slane %v739, 1
      %v861 = vrot.slane %v740, 1
      %v862 = vsel %vm814, %v860, %v861
      %v863 = vrot.slane %v741, 1
      %v864 = vsel %vm814, %v861, %v863
      %v865 = vrot.slane %v742, 1
      %v866 = vrot.slane %v743, 1
      %v867 = vsel %vm814, %v865, %v866
      %v868 = vrot.slane %v744, 1
      %v869 = vsel %vm814, %v866, %v868
      %v870 = vrot.slane %v745, 1
      %v871 = vrot.slane %v746, 1
      %v872 = vsel %vm814, %v870, %v871
      %v873 = vrot.slane %v747, 1
      %v874 = vsel %vm814, %v871, %v873
      %v875 = vrot.slane %v748, 1
      %v876 = vrot.slane %v749, 1
      %v877 = vsel %vm814, %v875, %v876
      %v878 = vrot.slane %v750, 1
      %v879 = vsel %vm814, %v876, %v878
      %v880 = vrot.slane %v751, 1
      %v881 = vrot.slane %v752, 1
      %v882 = vsel %vm814, %v880, %v881
      %v883 = vrot.slane %v753, 1
      %v884 = vsel %vm814, %v881, %v883
      %v885 = vrot.slane %v754, 1
      %v886 = vrot.slane %v755, 1
      %v887 = vsel %vm814, %v885, %v886
      %v888 = vrot.slane %v756, 1
      %v889 = vsel %vm814, %v886, %v888
      %v890 = vrot.slane %v757, 1
      %v891 = vrot.slane %v758, 1
      %v892 = vsel %vm814, %v890, %v891
      %v893 = vrot.slane %v759, 1
      %v894 = vsel %vm814, %v891, %v893
      %vm895 = vcmask 1045504
      %v896 = vrot.slane %v712, 2
      %v897 = vrot.slane %v713, 2
      %v898 = vsel %vm895, %v896, %v897
      %v899 = vrot.slane %v714, 2
      %v900 = vsel %vm895, %v897, %v899
      %v901 = vrot.slane %v715, 2
      %v902 = vrot.slane %v716, 2
      %v903 = vsel %vm895, %v901, %v902
      %v904 = vrot.slane %v717, 2
      %v905 = vsel %vm895, %v902, %v904
      %v906 = vrot.slane %v718, 2
      %v907 = vrot.slane %v719, 2
      %v908 = vsel %vm895, %v906, %v907
      %v909 = vrot.slane %v720, 2
      %v910 = vsel %vm895, %v907, %v909
      %v911 = vrot.slane %v721, 2
      %v912 = vrot.slane %v722, 2
      %v913 = vsel %vm895, %v911, %v912
      %v914 = vrot.slane %v723, 2
      %v915 = vsel %vm895, %v912, %v914
      %v916 = vrot.slane %v724, 2
      %v917 = vrot.slane %v725, 2
      %v918 = vsel %vm895, %v916, %v917
      %v919 = vrot.slane %v726, 2
      %v920 = vsel %vm895, %v917, %v919
      %v921 = vrot.slane %v727, 2
      %v922 = vrot.slane %v728, 2
      %v923 = vsel %vm895, %v921, %v922
      %v924 = vrot.slane %v729, 2
      %v925 = vsel %vm895, %v922, %v924
      %v926 = vrot.slane %v730, 2
      %v927 = vrot.slane %v731, 2
      %v928 = vsel %vm895, %v926, %v927
      %v929 = vrot.slane %v732, 2
      %v930 = vsel %vm895, %v927, %v929
      %v931 = vrot.slane %v733, 2
      %v932 = vrot.slane %v734, 2
      %v933 = vsel %vm895, %v931, %v932
      %v934 = vrot.slane %v735, 2
      %v935 = vsel %vm895, %v932, %v934
      %v936 = vrot.slane %v736, 2
      %v937 = vrot.slane %v737, 2
      %v938 = vsel %vm895, %v936, %v937
      %v939 = vrot.slane %v738, 2
      %v940 = vsel %vm895, %v937, %v939
      %v941 = vrot.slane %v739, 2
      %v942 = vrot.slane %v740, 2
      %v943 = vsel %vm895, %v941, %v942
      %v944 = vrot.slane %v741, 2
      %v945 = vsel %vm895, %v942, %v944
      %v946 = vrot.slane %v742, 2
      %v947 = vrot.slane %v743, 2
      %v948 = vsel %vm895, %v946, %v947
      %v949 = vrot.slane %v744, 2
      %v950 = vsel %vm895, %v947, %v949
      %v951 = vrot.slane %v745, 2
      %v952 = vrot.slane %v746, 2
      %v953 = vsel %vm895, %v951, %v952
      %v954 = vrot.slane %v747, 2
      %v955 = vsel %vm895, %v952, %v954
      %v956 = vrot.slane %v748, 2
      %v957 = vrot.slane %v749, 2
      %v958 = vsel %vm895, %v956, %v957
      %v959 = vrot.slane %v750, 2
      %v960 = vsel %vm895, %v957, %v959
      %v961 = vrot.slane %v751, 2
      %v962 = vrot.slane %v752, 2
      %v963 = vsel %vm895, %v961, %v962
      %v964 = vrot.slane %v753, 2
      %v965 = vsel %vm895, %v962, %v964
      %v966 = vrot.slane %v754, 2
      %v967 = vrot.slane %v755, 2
      %v968 = vsel %vm895, %v966, %v967
      %v969 = vrot.slane %v756, 2
      %v970 = vsel %vm895, %v967, %v969
      %v971 = vrot.slane %v757, 2
      %v972 = vrot.slane %v758, 2
      %v973 = vsel %vm895, %v971, %v972
      %v974 = vrot.slane %v759, 2
      %v975 = vsel %vm895, %v972, %v974
      %v979 = vrot.slane %v760, 1
      %v980 = vrot.slane %v761, 1
      %v981 = vsel %vm814, %v979, %v980
      %v982 = vrot.slane %v762, 1
      %v983 = vsel %vm814, %v980, %v982
      %v984 = vrot.slane %v760, 2
      %v985 = vrot.slane %v761, 2
      %v986 = vsel %vm895, %v984, %v985
      %v987 = vrot.slane %v762, 2
      %v988 = vsel %vm895, %v985, %v987
      %v992 = vrot.slane %v763, 1
      %v993 = vrot.slane %v764, 1
      %v994 = vsel %vm814, %v992, %v993
      %v995 = vrot.slane %v765, 1
      %v996 = vsel %vm814, %v993, %v995
      %v997 = vrot.slane %v763, 2
      %v998 = vrot.slane %v764, 2
      %v999 = vsel %vm895, %v997, %v998
      %v1000 = vrot.slane %v765, 2
      %v1001 = vsel %vm895, %v998, %v1000
      %1002 = vrot.lane.b32.xlu0 %v817, 12
      %v1003 = vpop.permute.xlu0 %1002
      %1004 = vrot.lane.b32.xlu0 %v819, 12
      %v1005 = vpop.permute.xlu0 %1004
      %1006 = vrot.lane.b32.xlu0 %v822, 12
      %v1007 = vpop.permute.xlu0 %1006
      %1008 = vrot.lane.b32.xlu0 %v824, 12
      %v1009 = vpop.permute.xlu0 %1008
      %1010 = vrot.lane.b32.xlu0 %v827, 12
      %v1011 = vpop.permute.xlu0 %1010
      %1012 = vrot.lane.b32.xlu0 %v829, 12
      %v1013 = vpop.permute.xlu0 %1012
      %1014 = vrot.lane.b32.xlu0 %v832, 12
      %v1015 = vpop.permute.xlu0 %1014
      %1016 = vrot.lane.b32.xlu0 %v834, 12
      %v1017 = vpop.permute.xlu0 %1016
      %1018 = vrot.lane.b32.xlu0 %v837, 12
      %v1019 = vpop.permute.xlu0 %1018
      %1020 = vrot.lane.b32.xlu0 %v839, 12
      %v1021 = vpop.permute.xlu0 %1020
      %1022 = vrot.lane.b32.xlu0 %v842, 12
      %v1023 = vpop.permute.xlu0 %1022
      %1024 = vrot.lane.b32.xlu0 %v844, 12
      %v1025 = vpop.permute.xlu0 %1024
      %1026 = vrot.lane.b32.xlu0 %v847, 12
      %v1027 = vpop.permute.xlu0 %1026
      %1028 = vrot.lane.b32.xlu0 %v849, 12
      %v1029 = vpop.permute.xlu0 %1028
      %1030 = vrot.lane.b32.xlu0 %v852, 12
      %v1031 = vpop.permute.xlu0 %1030
      %1032 = vrot.lane.b32.xlu0 %v854, 12
      %v1033 = vpop.permute.xlu0 %1032
      %1034 = vrot.lane.b32.xlu0 %v857, 12
      %v1035 = vpop.permute.xlu0 %1034
      %1036 = vrot.lane.b32.xlu0 %v859, 12
      %v1037 = vpop.permute.xlu0 %1036
      %1038 = vrot.lane.b32.xlu0 %v862, 12
      %v1039 = vpop.permute.xlu0 %1038
      %1040 = vrot.lane.b32.xlu0 %v864, 12
      %v1041 = vpop.permute.xlu0 %1040
      %1042 = vrot.lane.b32.xlu0 %v867, 12
      %v1043 = vpop.permute.xlu0 %1042
      %1044 = vrot.lane.b32.xlu0 %v869, 12
      %v1045 = vpop.permute.xlu0 %1044
      %1046 = vrot.lane.b32.xlu0 %v872, 12
      %v1047 = vpop.permute.xlu0 %1046
      %1048 = vrot.lane.b32.xlu0 %v874, 12
      %v1049 = vpop.permute.xlu0 %1048
      %1050 = vrot.lane.b32.xlu0 %v877, 12
      %v1051 = vpop.permute.xlu0 %1050
      %1052 = vrot.lane.b32.xlu0 %v879, 12
      %v1053 = vpop.permute.xlu0 %1052
      %1054 = vrot.lane.b32.xlu0 %v882, 12
      %v1055 = vpop.permute.xlu0 %1054
      %1056 = vrot.lane.b32.xlu0 %v884, 12
      %v1057 = vpop.permute.xlu0 %1056
      %1058 = vrot.lane.b32.xlu0 %v887, 12
      %v1059 = vpop.permute.xlu0 %1058
      %1060 = vrot.lane.b32.xlu0 %v889, 12
      %v1061 = vpop.permute.xlu0 %1060
      %1062 = vrot.lane.b32.xlu0 %v892, 12
      %v1063 = vpop.permute.xlu0 %1062
      %1064 = vrot.lane.b32.xlu0 %v894, 12
      %v1065 = vpop.permute.xlu0 %1064
      %1098 = vrot.lane.b32.xlu0 %v898, 24
      %v1099 = vpop.permute.xlu0 %1098
      %1100 = vrot.lane.b32.xlu0 %v900, 24
      %v1101 = vpop.permute.xlu0 %1100
      %1102 = vrot.lane.b32.xlu0 %v903, 24
      %v1103 = vpop.permute.xlu0 %1102
      %1104 = vrot.lane.b32.xlu0 %v905, 24
      %v1105 = vpop.permute.xlu0 %1104
      %1106 = vrot.lane.b32.xlu0 %v908, 24
      %v1107 = vpop.permute.xlu0 %1106
      %1108 = vrot.lane.b32.xlu0 %v910, 24
      %v1109 = vpop.permute.xlu0 %1108
      %1110 = vrot.lane.b32.xlu0 %v913, 24
      %v1111 = vpop.permute.xlu0 %1110
      %1112 = vrot.lane.b32.xlu0 %v915, 24
      %v1113 = vpop.permute.xlu0 %1112
      %1114 = vrot.lane.b32.xlu0 %v918, 24
      %v1115 = vpop.permute.xlu0 %1114
      %1116 = vrot.lane.b32.xlu0 %v920, 24
      %v1117 = vpop.permute.xlu0 %1116
      %1118 = vrot.lane.b32.xlu0 %v923, 24
      %v1119 = vpop.permute.xlu0 %1118
      %1120 = vrot.lane.b32.xlu0 %v925, 24
      %v1121 = vpop.permute.xlu0 %1120
      %1122 = vrot.lane.b32.xlu0 %v928, 24
      %v1123 = vpop.permute.xlu0 %1122
      %1124 = vrot.lane.b32.xlu0 %v930, 24
      %v1125 = vpop.permute.xlu0 %1124
      %1126 = vrot.lane.b32.xlu0 %v933, 24
      %v1127 = vpop.permute.xlu0 %1126
      %1128 = vrot.lane.b32.xlu0 %v935, 24
      %v1129 = vpop.permute.xlu0 %1128
      %1130 = vrot.lane.b32.xlu0 %v938, 24
      %v1131 = vpop.permute.xlu0 %1130
      %1132 = vrot.lane.b32.xlu0 %v940, 24
      %v1133 = vpop.permute.xlu0 %1132
      %1134 = vrot.lane.b32.xlu0 %v943, 24
      %v1135 = vpop.permute.xlu0 %1134
      %1136 = vrot.lane.b32.xlu0 %v945, 24
      %v1137 = vpop.permute.xlu0 %1136
      %1138 = vrot.lane.b32.xlu0 %v948, 24
      %v1139 = vpop.permute.xlu0 %1138
      %1140 = vrot.lane.b32.xlu0 %v950, 24
      %v1141 = vpop.permute.xlu0 %1140
      %1142 = vrot.lane.b32.xlu0 %v953, 24
      %v1143 = vpop.permute.xlu0 %1142
      %1144 = vrot.lane.b32.xlu0 %v955, 24
      %v1145 = vpop.permute.xlu0 %1144
      %1146 = vrot.lane.b32.xlu0 %v958, 24
      %v1147 = vpop.permute.xlu0 %1146
      %1148 = vrot.lane.b32.xlu0 %v960, 24
      %v1149 = vpop.permute.xlu0 %1148
      %1150 = vrot.lane.b32.xlu0 %v963, 24
      %v1151 = vpop.permute.xlu0 %1150
      %1152 = vrot.lane.b32.xlu0 %v965, 24
      %v1153 = vpop.permute.xlu0 %1152
      %1154 = vrot.lane.b32.xlu0 %v968, 24
      %v1155 = vpop.permute.xlu0 %1154
      %1156 = vrot.lane.b32.xlu0 %v970, 24
      %v1157 = vpop.permute.xlu0 %1156
      %1158 = vrot.lane.b32.xlu0 %v973, 24
      %v1159 = vpop.permute.xlu0 %1158
      %1160 = vrot.lane.b32.xlu0 %v975, 24
      %v1161 = vpop.permute.xlu0 %1160
      %1194 = vrot.lane.b32.xlu0 %v715, 36
      %v1195 = vpop.permute.xlu0 %1194
      %1196 = vrot.lane.b32.xlu0 %v716, 36
      %v1197 = vpop.permute.xlu0 %1196
      %1198 = vrot.lane.b32.xlu0 %v718, 36
      %v1199 = vpop.permute.xlu0 %1198
      %1200 = vrot.lane.b32.xlu0 %v719, 36
      %v1201 = vpop.permute.xlu0 %1200
      %1202 = vrot.lane.b32.xlu0 %v721, 36
      %v1203 = vpop.permute.xlu0 %1202
      %1204 = vrot.lane.b32.xlu0 %v722, 36
      %v1205 = vpop.permute.xlu0 %1204
      %1206 = vrot.lane.b32.xlu0 %v724, 36
      %v1207 = vpop.permute.xlu0 %1206
      %1208 = vrot.lane.b32.xlu0 %v725, 36
      %v1209 = vpop.permute.xlu0 %1208
      %1210 = vrot.lane.b32.xlu0 %v727, 36
      %v1211 = vpop.permute.xlu0 %1210
      %1212 = vrot.lane.b32.xlu0 %v728, 36
      %v1213 = vpop.permute.xlu0 %1212
      %1214 = vrot.lane.b32.xlu0 %v730, 36
      %v1215 = vpop.permute.xlu0 %1214
      %1216 = vrot.lane.b32.xlu0 %v731, 36
      %v1217 = vpop.permute.xlu0 %1216
      %1218 = vrot.lane.b32.xlu0 %v733, 36
      %v1219 = vpop.permute.xlu0 %1218
      %1220 = vrot.lane.b32.xlu0 %v734, 36
      %v1221 = vpop.permute.xlu0 %1220
      %1222 = vrot.lane.b32.xlu0 %v736, 36
      %v1223 = vpop.permute.xlu0 %1222
      %1224 = vrot.lane.b32.xlu0 %v737, 36
      %v1225 = vpop.permute.xlu0 %1224
      %1226 = vrot.lane.b32.xlu0 %v739, 36
      %v1227 = vpop.permute.xlu0 %1226
      %1228 = vrot.lane.b32.xlu0 %v740, 36
      %v1229 = vpop.permute.xlu0 %1228
      %1230 = vrot.lane.b32.xlu0 %v742, 36
      %v1231 = vpop.permute.xlu0 %1230
      %1232 = vrot.lane.b32.xlu0 %v743, 36
      %v1233 = vpop.permute.xlu0 %1232
      %1234 = vrot.lane.b32.xlu0 %v745, 36
      %v1235 = vpop.permute.xlu0 %1234
      %1236 = vrot.lane.b32.xlu0 %v746, 36
      %v1237 = vpop.permute.xlu0 %1236
      %1238 = vrot.lane.b32.xlu0 %v748, 36
      %v1239 = vpop.permute.xlu0 %1238
      %1240 = vrot.lane.b32.xlu0 %v749, 36
      %v1241 = vpop.permute.xlu0 %1240
      %1242 = vrot.lane.b32.xlu0 %v751, 36
      %v1243 = vpop.permute.xlu0 %1242
      %1244 = vrot.lane.b32.xlu0 %v752, 36
      %v1245 = vpop.permute.xlu0 %1244
      %1246 = vrot.lane.b32.xlu0 %v754, 36
      %v1247 = vpop.permute.xlu0 %1246
      %1248 = vrot.lane.b32.xlu0 %v755, 36
      %v1249 = vpop.permute.xlu0 %1248
      %1250 = vrot.lane.b32.xlu0 %v757, 36
      %v1251 = vpop.permute.xlu0 %1250
      %1252 = vrot.lane.b32.xlu0 %v758, 36
      %v1253 = vpop.permute.xlu0 %1252
      %1254 = vrot.lane.b32.xlu0 %v760, 36
      %v1255 = vpop.permute.xlu0 %1254
      %1256 = vrot.lane.b32.xlu0 %v761, 36
      %v1257 = vpop.permute.xlu0 %1256
      %1290 = vrot.lane.b32.xlu0 %v822, 48
      %v1291 = vpop.permute.xlu0 %1290
      %1292 = vrot.lane.b32.xlu0 %v824, 48
      %v1293 = vpop.permute.xlu0 %1292
      %1294 = vrot.lane.b32.xlu0 %v827, 48
      %v1295 = vpop.permute.xlu0 %1294
      %1296 = vrot.lane.b32.xlu0 %v829, 48
      %v1297 = vpop.permute.xlu0 %1296
      %1298 = vrot.lane.b32.xlu0 %v832, 48
      %v1299 = vpop.permute.xlu0 %1298
      %1300 = vrot.lane.b32.xlu0 %v834, 48
      %v1301 = vpop.permute.xlu0 %1300
      %1302 = vrot.lane.b32.xlu0 %v837, 48
      %v1303 = vpop.permute.xlu0 %1302
      %1304 = vrot.lane.b32.xlu0 %v839, 48
      %v1305 = vpop.permute.xlu0 %1304
      %1306 = vrot.lane.b32.xlu0 %v842, 48
      %v1307 = vpop.permute.xlu0 %1306
      %1308 = vrot.lane.b32.xlu0 %v844, 48
      %v1309 = vpop.permute.xlu0 %1308
      %1310 = vrot.lane.b32.xlu0 %v847, 48
      %v1311 = vpop.permute.xlu0 %1310
      %1312 = vrot.lane.b32.xlu0 %v849, 48
      %v1313 = vpop.permute.xlu0 %1312
      %1314 = vrot.lane.b32.xlu0 %v852, 48
      %v1315 = vpop.permute.xlu0 %1314
      %1316 = vrot.lane.b32.xlu0 %v854, 48
      %v1317 = vpop.permute.xlu0 %1316
      %1318 = vrot.lane.b32.xlu0 %v857, 48
      %v1319 = vpop.permute.xlu0 %1318
      %1320 = vrot.lane.b32.xlu0 %v859, 48
      %v1321 = vpop.permute.xlu0 %1320
      %1322 = vrot.lane.b32.xlu0 %v862, 48
      %v1323 = vpop.permute.xlu0 %1322
      %1324 = vrot.lane.b32.xlu0 %v864, 48
      %v1325 = vpop.permute.xlu0 %1324
      %1326 = vrot.lane.b32.xlu0 %v867, 48
      %v1327 = vpop.permute.xlu0 %1326
      %1328 = vrot.lane.b32.xlu0 %v869, 48
      %v1329 = vpop.permute.xlu0 %1328
      %1330 = vrot.lane.b32.xlu0 %v872, 48
      %v1331 = vpop.permute.xlu0 %1330
      %1332 = vrot.lane.b32.xlu0 %v874, 48
      %v1333 = vpop.permute.xlu0 %1332
      %1334 = vrot.lane.b32.xlu0 %v877, 48
      %v1335 = vpop.permute.xlu0 %1334
      %1336 = vrot.lane.b32.xlu0 %v879, 48
      %v1337 = vpop.permute.xlu0 %1336
      %1338 = vrot.lane.b32.xlu0 %v882, 48
      %v1339 = vpop.permute.xlu0 %1338
      %1340 = vrot.lane.b32.xlu0 %v884, 48
      %v1341 = vpop.permute.xlu0 %1340
      %1342 = vrot.lane.b32.xlu0 %v887, 48
      %v1343 = vpop.permute.xlu0 %1342
      %1344 = vrot.lane.b32.xlu0 %v889, 48
      %v1345 = vpop.permute.xlu0 %1344
      %1346 = vrot.lane.b32.xlu0 %v892, 48
      %v1347 = vpop.permute.xlu0 %1346
      %1348 = vrot.lane.b32.xlu0 %v894, 48
      %v1349 = vpop.permute.xlu0 %1348
      %1350 = vrot.lane.b32.xlu0 %v981, 48
      %v1351 = vpop.permute.xlu0 %1350
      %1352 = vrot.lane.b32.xlu0 %v983, 48
      %v1353 = vpop.permute.xlu0 %1352
      %1386 = vrot.lane.b32.xlu0 %v903, 60
      %v1387 = vpop.permute.xlu0 %1386
      %1388 = vrot.lane.b32.xlu0 %v905, 60
      %v1389 = vpop.permute.xlu0 %1388
      %1390 = vrot.lane.b32.xlu0 %v908, 60
      %v1391 = vpop.permute.xlu0 %1390
      %1392 = vrot.lane.b32.xlu0 %v910, 60
      %v1393 = vpop.permute.xlu0 %1392
      %1394 = vrot.lane.b32.xlu0 %v913, 60
      %v1395 = vpop.permute.xlu0 %1394
      %1396 = vrot.lane.b32.xlu0 %v915, 60
      %v1397 = vpop.permute.xlu0 %1396
      %1398 = vrot.lane.b32.xlu0 %v918, 60
      %v1399 = vpop.permute.xlu0 %1398
      %1400 = vrot.lane.b32.xlu0 %v920, 60
      %v1401 = vpop.permute.xlu0 %1400
      %1402 = vrot.lane.b32.xlu0 %v923, 60
      %v1403 = vpop.permute.xlu0 %1402
      %1404 = vrot.lane.b32.xlu0 %v925, 60
      %v1405 = vpop.permute.xlu0 %1404
      %1406 = vrot.lane.b32.xlu0 %v928, 60
      %v1407 = vpop.permute.xlu0 %1406
      %1408 = vrot.lane.b32.xlu0 %v930, 60
      %v1409 = vpop.permute.xlu0 %1408
      %1410 = vrot.lane.b32.xlu0 %v933, 60
      %v1411 = vpop.permute.xlu0 %1410
      %1412 = vrot.lane.b32.xlu0 %v935, 60
      %v1413 = vpop.permute.xlu0 %1412
      %1414 = vrot.lane.b32.xlu0 %v938, 60
      %v1415 = vpop.permute.xlu0 %1414
      %1416 = vrot.lane.b32.xlu0 %v940, 60
      %v1417 = vpop.permute.xlu0 %1416
      %1418 = vrot.lane.b32.xlu0 %v943, 60
      %v1419 = vpop.permute.xlu0 %1418
      %1420 = vrot.lane.b32.xlu0 %v945, 60
      %v1421 = vpop.permute.xlu0 %1420
      %1422 = vrot.lane.b32.xlu0 %v948, 60
      %v1423 = vpop.permute.xlu0 %1422
      %1424 = vrot.lane.b32.xlu0 %v950, 60
      %v1425 = vpop.permute.xlu0 %1424
      %1426 = vrot.lane.b32.xlu0 %v953, 60
      %v1427 = vpop.permute.xlu0 %1426
      %1428 = vrot.lane.b32.xlu0 %v955, 60
      %v1429 = vpop.permute.xlu0 %1428
      %1430 = vrot.lane.b32.xlu0 %v958, 60
      %v1431 = vpop.permute.xlu0 %1430
      %1432 = vrot.lane.b32.xlu0 %v960, 60
      %v1433 = vpop.permute.xlu0 %1432
      %1434 = vrot.lane.b32.xlu0 %v963, 60
      %v1435 = vpop.permute.xlu0 %1434
      %1436 = vrot.lane.b32.xlu0 %v965, 60
      %v1437 = vpop.permute.xlu0 %1436
      %1438 = vrot.lane.b32.xlu0 %v968, 60
      %v1439 = vpop.permute.xlu0 %1438
      %1440 = vrot.lane.b32.xlu0 %v970, 60
      %v1441 = vpop.permute.xlu0 %1440
      %1442 = vrot.lane.b32.xlu0 %v973, 60
      %v1443 = vpop.permute.xlu0 %1442
      %1444 = vrot.lane.b32.xlu0 %v975, 60
      %v1445 = vpop.permute.xlu0 %1444
      %1446 = vrot.lane.b32.xlu0 %v986, 60
      %v1447 = vpop.permute.xlu0 %1446
      %1448 = vrot.lane.b32.xlu0 %v988, 60
      %v1449 = vpop.permute.xlu0 %1448
      %1482 = vrot.lane.b32.xlu0 %v718, 72
      %v1483 = vpop.permute.xlu0 %1482
      %1484 = vrot.lane.b32.xlu0 %v719, 72
      %v1485 = vpop.permute.xlu0 %1484
      %1486 = vrot.lane.b32.xlu0 %v721, 72
      %v1487 = vpop.permute.xlu0 %1486
      %1488 = vrot.lane.b32.xlu0 %v722, 72
      %v1489 = vpop.permute.xlu0 %1488
      %1490 = vrot.lane.b32.xlu0 %v724, 72
      %v1491 = vpop.permute.xlu0 %1490
      %1492 = vrot.lane.b32.xlu0 %v725, 72
      %v1493 = vpop.permute.xlu0 %1492
      %1494 = vrot.lane.b32.xlu0 %v727, 72
      %v1495 = vpop.permute.xlu0 %1494
      %1496 = vrot.lane.b32.xlu0 %v728, 72
      %v1497 = vpop.permute.xlu0 %1496
      %1498 = vrot.lane.b32.xlu0 %v730, 72
      %v1499 = vpop.permute.xlu0 %1498
      %1500 = vrot.lane.b32.xlu0 %v731, 72
      %v1501 = vpop.permute.xlu0 %1500
      %1502 = vrot.lane.b32.xlu0 %v733, 72
      %v1503 = vpop.permute.xlu0 %1502
      %1504 = vrot.lane.b32.xlu0 %v734, 72
      %v1505 = vpop.permute.xlu0 %1504
      %1506 = vrot.lane.b32.xlu0 %v736, 72
      %v1507 = vpop.permute.xlu0 %1506
      %1508 = vrot.lane.b32.xlu0 %v737, 72
      %v1509 = vpop.permute.xlu0 %1508
      %1510 = vrot.lane.b32.xlu0 %v739, 72
      %v1511 = vpop.permute.xlu0 %1510
      %1512 = vrot.lane.b32.xlu0 %v740, 72
      %v1513 = vpop.permute.xlu0 %1512
      %1514 = vrot.lane.b32.xlu0 %v742, 72
      %v1515 = vpop.permute.xlu0 %1514
      %1516 = vrot.lane.b32.xlu0 %v743, 72
      %v1517 = vpop.permute.xlu0 %1516
      %1518 = vrot.lane.b32.xlu0 %v745, 72
      %v1519 = vpop.permute.xlu0 %1518
      %1520 = vrot.lane.b32.xlu0 %v746, 72
      %v1521 = vpop.permute.xlu0 %1520
      %1522 = vrot.lane.b32.xlu0 %v748, 72
      %v1523 = vpop.permute.xlu0 %1522
      %1524 = vrot.lane.b32.xlu0 %v749, 72
      %v1525 = vpop.permute.xlu0 %1524
      %1526 = vrot.lane.b32.xlu0 %v751, 72
      %v1527 = vpop.permute.xlu0 %1526
      %1528 = vrot.lane.b32.xlu0 %v752, 72
      %v1529 = vpop.permute.xlu0 %1528
      %1530 = vrot.lane.b32.xlu0 %v754, 72
      %v1531 = vpop.permute.xlu0 %1530
      %1532 = vrot.lane.b32.xlu0 %v755, 72
      %v1533 = vpop.permute.xlu0 %1532
      %1534 = vrot.lane.b32.xlu0 %v757, 72
      %v1535 = vpop.permute.xlu0 %1534
      %1536 = vrot.lane.b32.xlu0 %v758, 72
      %v1537 = vpop.permute.xlu0 %1536
      %1538 = vrot.lane.b32.xlu0 %v760, 72
      %v1539 = vpop.permute.xlu0 %1538
      %1540 = vrot.lane.b32.xlu0 %v761, 72
      %v1541 = vpop.permute.xlu0 %1540
      %1542 = vrot.lane.b32.xlu0 %v763, 72
      %v1543 = vpop.permute.xlu0 %1542
      %1544 = vrot.lane.b32.xlu0 %v764, 72
      %v1545 = vpop.permute.xlu0 %1544
      %1578 = vrot.lane.b32.xlu0 %v827, 84
      %v1579 = vpop.permute.xlu0 %1578
      %1580 = vrot.lane.b32.xlu0 %v829, 84
      %v1581 = vpop.permute.xlu0 %1580
      %1582 = vrot.lane.b32.xlu0 %v832, 84
      %v1583 = vpop.permute.xlu0 %1582
      %1584 = vrot.lane.b32.xlu0 %v834, 84
      %v1585 = vpop.permute.xlu0 %1584
      %1586 = vrot.lane.b32.xlu0 %v837, 84
      %v1587 = vpop.permute.xlu0 %1586
      %1588 = vrot.lane.b32.xlu0 %v839, 84
      %v1589 = vpop.permute.xlu0 %1588
      %1590 = vrot.lane.b32.xlu0 %v842, 84
      %v1591 = vpop.permute.xlu0 %1590
      %1592 = vrot.lane.b32.xlu0 %v844, 84
      %v1593 = vpop.permute.xlu0 %1592
      %1594 = vrot.lane.b32.xlu0 %v847, 84
      %v1595 = vpop.permute.xlu0 %1594
      %1596 = vrot.lane.b32.xlu0 %v849, 84
      %v1597 = vpop.permute.xlu0 %1596
      %1598 = vrot.lane.b32.xlu0 %v852, 84
      %v1599 = vpop.permute.xlu0 %1598
      %1600 = vrot.lane.b32.xlu0 %v854, 84
      %v1601 = vpop.permute.xlu0 %1600
      %1602 = vrot.lane.b32.xlu0 %v857, 84
      %v1603 = vpop.permute.xlu0 %1602
      %1604 = vrot.lane.b32.xlu0 %v859, 84
      %v1605 = vpop.permute.xlu0 %1604
      %1606 = vrot.lane.b32.xlu0 %v862, 84
      %v1607 = vpop.permute.xlu0 %1606
      %1608 = vrot.lane.b32.xlu0 %v864, 84
      %v1609 = vpop.permute.xlu0 %1608
      %1610 = vrot.lane.b32.xlu0 %v867, 84
      %v1611 = vpop.permute.xlu0 %1610
      %1612 = vrot.lane.b32.xlu0 %v869, 84
      %v1613 = vpop.permute.xlu0 %1612
      %1614 = vrot.lane.b32.xlu0 %v872, 84
      %v1615 = vpop.permute.xlu0 %1614
      %1616 = vrot.lane.b32.xlu0 %v874, 84
      %v1617 = vpop.permute.xlu0 %1616
      %1618 = vrot.lane.b32.xlu0 %v877, 84
      %v1619 = vpop.permute.xlu0 %1618
      %1620 = vrot.lane.b32.xlu0 %v879, 84
      %v1621 = vpop.permute.xlu0 %1620
      %1622 = vrot.lane.b32.xlu0 %v882, 84
      %v1623 = vpop.permute.xlu0 %1622
      %1624 = vrot.lane.b32.xlu0 %v884, 84
      %v1625 = vpop.permute.xlu0 %1624
      %1626 = vrot.lane.b32.xlu0 %v887, 84
      %v1627 = vpop.permute.xlu0 %1626
      %1628 = vrot.lane.b32.xlu0 %v889, 84
      %v1629 = vpop.permute.xlu0 %1628
      %1630 = vrot.lane.b32.xlu0 %v892, 84
      %v1631 = vpop.permute.xlu0 %1630
      %1632 = vrot.lane.b32.xlu0 %v894, 84
      %v1633 = vpop.permute.xlu0 %1632
      %1634 = vrot.lane.b32.xlu0 %v981, 84
      %v1635 = vpop.permute.xlu0 %1634
      %1636 = vrot.lane.b32.xlu0 %v983, 84
      %v1637 = vpop.permute.xlu0 %1636
      %1638 = vrot.lane.b32.xlu0 %v994, 84
      %v1639 = vpop.permute.xlu0 %1638
      %1640 = vrot.lane.b32.xlu0 %v996, 84
      %v1641 = vpop.permute.xlu0 %1640
      %1674 = vrot.lane.b32.xlu0 %v908, 96
      %v1675 = vpop.permute.xlu0 %1674
      %1676 = vrot.lane.b32.xlu0 %v910, 96
      %v1677 = vpop.permute.xlu0 %1676
      %1678 = vrot.lane.b32.xlu0 %v913, 96
      %v1679 = vpop.permute.xlu0 %1678
      %1680 = vrot.lane.b32.xlu0 %v915, 96
      %v1681 = vpop.permute.xlu0 %1680
      %1682 = vrot.lane.b32.xlu0 %v918, 96
      %v1683 = vpop.permute.xlu0 %1682
      %1684 = vrot.lane.b32.xlu0 %v920, 96
      %v1685 = vpop.permute.xlu0 %1684
      %1686 = vrot.lane.b32.xlu0 %v923, 96
      %v1687 = vpop.permute.xlu0 %1686
      %1688 = vrot.lane.b32.xlu0 %v925, 96
      %v1689 = vpop.permute.xlu0 %1688
      %1690 = vrot.lane.b32.xlu0 %v928, 96
      %v1691 = vpop.permute.xlu0 %1690
      %1692 = vrot.lane.b32.xlu0 %v930, 96
      %v1693 = vpop.permute.xlu0 %1692
      %1694 = vrot.lane.b32.xlu0 %v933, 96
      %v1695 = vpop.permute.xlu0 %1694
      %1696 = vrot.lane.b32.xlu0 %v935, 96
      %v1697 = vpop.permute.xlu0 %1696
      %1698 = vrot.lane.b32.xlu0 %v938, 96
      %v1699 = vpop.permute.xlu0 %1698
      %1700 = vrot.lane.b32.xlu0 %v940, 96
      %v1701 = vpop.permute.xlu0 %1700
      %1702 = vrot.lane.b32.xlu0 %v943, 96
      %v1703 = vpop.permute.xlu0 %1702
      %1704 = vrot.lane.b32.xlu0 %v945, 96
      %v1705 = vpop.permute.xlu0 %1704
      %1706 = vrot.lane.b32.xlu0 %v948, 96
      %v1707 = vpop.permute.xlu0 %1706
      %1708 = vrot.lane.b32.xlu0 %v950, 96
      %v1709 = vpop.permute.xlu0 %1708
      %1710 = vrot.lane.b32.xlu0 %v953, 96
      %v1711 = vpop.permute.xlu0 %1710
      %1712 = vrot.lane.b32.xlu0 %v955, 96
      %v1713 = vpop.permute.xlu0 %1712
      %1714 = vrot.lane.b32.xlu0 %v958, 96
      %v1715 = vpop.permute.xlu0 %1714
      %1716 = vrot.lane.b32.xlu0 %v960, 96
      %v1717 = vpop.permute.xlu0 %1716
      %1718 = vrot.lane.b32.xlu0 %v963, 96
      %v1719 = vpop.permute.xlu0 %1718
      %1720 = vrot.lane.b32.xlu0 %v965, 96
      %v1721 = vpop.permute.xlu0 %1720
      %1722 = vrot.lane.b32.xlu0 %v968, 96
      %v1723 = vpop.permute.xlu0 %1722
      %1724 = vrot.lane.b32.xlu0 %v970, 96
      %v1725 = vpop.permute.xlu0 %1724
      %1726 = vrot.lane.b32.xlu0 %v973, 96
      %v1727 = vpop.permute.xlu0 %1726
      %1728 = vrot.lane.b32.xlu0 %v975, 96
      %v1729 = vpop.permute.xlu0 %1728
      %1730 = vrot.lane.b32.xlu0 %v986, 96
      %v1731 = vpop.permute.xlu0 %1730
      %1732 = vrot.lane.b32.xlu0 %v988, 96
      %v1733 = vpop.permute.xlu0 %1732
      %1734 = vrot.lane.b32.xlu0 %v999, 96
      %v1735 = vpop.permute.xlu0 %1734
      %1736 = vrot.lane.b32.xlu0 %v1001, 96
      %v1737 = vpop.permute.xlu0 %1736
      %v1770 = vsel %vm679, %v712, %v1003
      %v1771 = vsel %vm679, %v713, %v1005
      %v1772 = vsel %vm679, %v715, %v1007
      %v1773 = vsel %vm679, %v716, %v1009
      %v1774 = vsel %vm679, %v718, %v1011
      %v1775 = vsel %vm679, %v719, %v1013
      %v1776 = vsel %vm679, %v721, %v1015
      %v1777 = vsel %vm679, %v722, %v1017
      %v1778 = vsel %vm679, %v724, %v1019
      %v1779 = vsel %vm679, %v725, %v1021
      %v1780 = vsel %vm679, %v727, %v1023
      %v1781 = vsel %vm679, %v728, %v1025
      %v1782 = vsel %vm679, %v730, %v1027
      %v1783 = vsel %vm679, %v731, %v1029
      %v1784 = vsel %vm679, %v733, %v1031
      %v1785 = vsel %vm679, %v734, %v1033
      %v1786 = vsel %vm679, %v736, %v1035
      %v1787 = vsel %vm679, %v737, %v1037
      %v1788 = vsel %vm679, %v739, %v1039
      %v1789 = vsel %vm679, %v740, %v1041
      %v1790 = vsel %vm679, %v742, %v1043
      %v1791 = vsel %vm679, %v743, %v1045
      %v1792 = vsel %vm679, %v745, %v1047
      %v1793 = vsel %vm679, %v746, %v1049
      %v1794 = vsel %vm679, %v748, %v1051
      %v1795 = vsel %vm679, %v749, %v1053
      %v1796 = vsel %vm679, %v751, %v1055
      %v1797 = vsel %vm679, %v752, %v1057
      %v1798 = vsel %vm679, %v754, %v1059
      %v1799 = vsel %vm679, %v755, %v1061
      %v1800 = vsel %vm679, %v757, %v1063
      %v1801 = vsel %vm679, %v758, %v1065
      %vm1802 = vcmask 195584
      %v1803 = vsel %vm1802, %v1770, %v1099
      %v1804 = vsel %vm1802, %v1771, %v1101
      %v1805 = vsel %vm1802, %v1772, %v1103
      %v1806 = vsel %vm1802, %v1773, %v1105
      %v1807 = vsel %vm1802, %v1774, %v1107
      %v1808 = vsel %vm1802, %v1775, %v1109
      %v1809 = vsel %vm1802, %v1776, %v1111
      %v1810 = vsel %vm1802, %v1777, %v1113
      %v1811 = vsel %vm1802, %v1778, %v1115
      %v1812 = vsel %vm1802, %v1779, %v1117
      %v1813 = vsel %vm1802, %v1780, %v1119
      %v1814 = vsel %vm1802, %v1781, %v1121
      %v1815 = vsel %vm1802, %v1782, %v1123
      %v1816 = vsel %vm1802, %v1783, %v1125
      %v1817 = vsel %vm1802, %v1784, %v1127
      %v1818 = vsel %vm1802, %v1785, %v1129
      %v1819 = vsel %vm1802, %v1786, %v1131
      %v1820 = vsel %vm1802, %v1787, %v1133
      %v1821 = vsel %vm1802, %v1788, %v1135
      %v1822 = vsel %vm1802, %v1789, %v1137
      %v1823 = vsel %vm1802, %v1790, %v1139
      %v1824 = vsel %vm1802, %v1791, %v1141
      %v1825 = vsel %vm1802, %v1792, %v1143
      %v1826 = vsel %vm1802, %v1793, %v1145
      %v1827 = vsel %vm1802, %v1794, %v1147
      %v1828 = vsel %vm1802, %v1795, %v1149
      %v1829 = vsel %vm1802, %v1796, %v1151
      %v1830 = vsel %vm1802, %v1797, %v1153
      %v1831 = vsel %vm1802, %v1798, %v1155
      %v1832 = vsel %vm1802, %v1799, %v1157
      %v1833 = vsel %vm1802, %v1800, %v1159
      %v1834 = vsel %vm1802, %v1801, %v1161
      %vm1835 = vcmask 293888
      %v1836 = vsel %vm1835, %v1803, %v1195
      %v1837 = vsel %vm1835, %v1804, %v1197
      %v1838 = vsel %vm1835, %v1805, %v1199
      %v1839 = vsel %vm1835, %v1806, %v1201
      %v1840 = vsel %vm1835, %v1807, %v1203
      %v1841 = vsel %vm1835, %v1808, %v1205
      %v1842 = vsel %vm1835, %v1809, %v1207
      %v1843 = vsel %vm1835, %v1810, %v1209
      %v1844 = vsel %vm1835, %v1811, %v1211
      %v1845 = vsel %vm1835, %v1812, %v1213
      %v1846 = vsel %vm1835, %v1813, %v1215
      %v1847 = vsel %vm1835, %v1814, %v1217
      %v1848 = vsel %vm1835, %v1815, %v1219
      %v1849 = vsel %vm1835, %v1816, %v1221
      %v1850 = vsel %vm1835, %v1817, %v1223
      %v1851 = vsel %vm1835, %v1818, %v1225
      %v1852 = vsel %vm1835, %v1819, %v1227
      %v1853 = vsel %vm1835, %v1820, %v1229
      %v1854 = vsel %vm1835, %v1821, %v1231
      %v1855 = vsel %vm1835, %v1822, %v1233
      %v1856 = vsel %vm1835, %v1823, %v1235
      %v1857 = vsel %vm1835, %v1824, %v1237
      %v1858 = vsel %vm1835, %v1825, %v1239
      %v1859 = vsel %vm1835, %v1826, %v1241
      %v1860 = vsel %vm1835, %v1827, %v1243
      %v1861 = vsel %vm1835, %v1828, %v1245
      %v1862 = vsel %vm1835, %v1829, %v1247
      %v1863 = vsel %vm1835, %v1830, %v1249
      %v1864 = vsel %vm1835, %v1831, %v1251
      %v1865 = vsel %vm1835, %v1832, %v1253
      %v1866 = vsel %vm1835, %v1833, %v1255
      %v1867 = vsel %vm1835, %v1834, %v1257
      %vm1868 = vcmask 392192
      %v1869 = vsel %vm1868, %v1836, %v1291
      %v1870 = vsel %vm1868, %v1837, %v1293
      %v1871 = vsel %vm1868, %v1838, %v1295
      %v1872 = vsel %vm1868, %v1839, %v1297
      %v1873 = vsel %vm1868, %v1840, %v1299
      %v1874 = vsel %vm1868, %v1841, %v1301
      %v1875 = vsel %vm1868, %v1842, %v1303
      %v1876 = vsel %vm1868, %v1843, %v1305
      %v1877 = vsel %vm1868, %v1844, %v1307
      %v1878 = vsel %vm1868, %v1845, %v1309
      %v1879 = vsel %vm1868, %v1846, %v1311
      %v1880 = vsel %vm1868, %v1847, %v1313
      %v1881 = vsel %vm1868, %v1848, %v1315
      %v1882 = vsel %vm1868, %v1849, %v1317
      %v1883 = vsel %vm1868, %v1850, %v1319
      %v1884 = vsel %vm1868, %v1851, %v1321
      %v1885 = vsel %vm1868, %v1852, %v1323
      %v1886 = vsel %vm1868, %v1853, %v1325
      %v1887 = vsel %vm1868, %v1854, %v1327
      %v1888 = vsel %vm1868, %v1855, %v1329
      %v1889 = vsel %vm1868, %v1856, %v1331
      %v1890 = vsel %vm1868, %v1857, %v1333
      %v1891 = vsel %vm1868, %v1858, %v1335
      %v1892 = vsel %vm1868, %v1859, %v1337
      %v1893 = vsel %vm1868, %v1860, %v1339
      %v1894 = vsel %vm1868, %v1861, %v1341
      %v1895 = vsel %vm1868, %v1862, %v1343
      %v1896 = vsel %vm1868, %v1863, %v1345
      %v1897 = vsel %vm1868, %v1864, %v1347
      %v1898 = vsel %vm1868, %v1865, %v1349
      %v1899 = vsel %vm1868, %v1866, %v1351
      %v1900 = vsel %vm1868, %v1867, %v1353
      %vm1901 = vcmask 490496
      %v1902 = vsel %vm1901, %v1869, %v1387
      %v1903 = vsel %vm1901, %v1870, %v1389
      %v1904 = vsel %vm1901, %v1871, %v1391
      %v1905 = vsel %vm1901, %v1872, %v1393
      %v1906 = vsel %vm1901, %v1873, %v1395
      %v1907 = vsel %vm1901, %v1874, %v1397
      %v1908 = vsel %vm1901, %v1875, %v1399
      %v1909 = vsel %vm1901, %v1876, %v1401
      %v1910 = vsel %vm1901, %v1877, %v1403
      %v1911 = vsel %vm1901, %v1878, %v1405
      %v1912 = vsel %vm1901, %v1879, %v1407
      %v1913 = vsel %vm1901, %v1880, %v1409
      %v1914 = vsel %vm1901, %v1881, %v1411
      %v1915 = vsel %vm1901, %v1882, %v1413
      %v1916 = vsel %vm1901, %v1883, %v1415
      %v1917 = vsel %vm1901, %v1884, %v1417
      %v1918 = vsel %vm1901, %v1885, %v1419
      %v1919 = vsel %vm1901, %v1886, %v1421
      %v1920 = vsel %vm1901, %v1887, %v1423
      %v1921 = vsel %vm1901, %v1888, %v1425
      %v1922 = vsel %vm1901, %v1889, %v1427
      %v1923 = vsel %vm1901, %v1890, %v1429
      %v1924 = vsel %vm1901, %v1891, %v1431
      %v1925 = vsel %vm1901, %v1892, %v1433
      %v1926 = vsel %vm1901, %v1893, %v1435
      %v1927 = vsel %vm1901, %v1894, %v1437
      %v1928 = vsel %vm1901, %v1895, %v1439
      %v1929 = vsel %vm1901, %v1896, %v1441
      %v1930 = vsel %vm1901, %v1897, %v1443
      %v1931 = vsel %vm1901, %v1898, %v1445
      %v1932 = vsel %vm1901, %v1899, %v1447
      %v1933 = vsel %vm1901, %v1900, %v1449
      %vm1934 = vcmask 588800
      %v1935 = vsel %vm1934, %v1902, %v1483
      %v1936 = vsel %vm1934, %v1903, %v1485
      %v1937 = vsel %vm1934, %v1904, %v1487
      %v1938 = vsel %vm1934, %v1905, %v1489
      %v1939 = vsel %vm1934, %v1906, %v1491
      %v1940 = vsel %vm1934, %v1907, %v1493
      %v1941 = vsel %vm1934, %v1908, %v1495
      %v1942 = vsel %vm1934, %v1909, %v1497
      %v1943 = vsel %vm1934, %v1910, %v1499
      %v1944 = vsel %vm1934, %v1911, %v1501
      %v1945 = vsel %vm1934, %v1912, %v1503
      %v1946 = vsel %vm1934, %v1913, %v1505
      %v1947 = vsel %vm1934, %v1914, %v1507
      %v1948 = vsel %vm1934, %v1915, %v1509
      %v1949 = vsel %vm1934, %v1916, %v1511
      %v1950 = vsel %vm1934, %v1917, %v1513
      %v1951 = vsel %vm1934, %v1918, %v1515
      %v1952 = vsel %vm1934, %v1919, %v1517
      %v1953 = vsel %vm1934, %v1920, %v1519
      %v1954 = vsel %vm1934, %v1921, %v1521
      %v1955 = vsel %vm1934, %v1922, %v1523
      %v1956 = vsel %vm1934, %v1923, %v1525
      %v1957 = vsel %vm1934, %v1924, %v1527
      %v1958 = vsel %vm1934, %v1925, %v1529
      %v1959 = vsel %vm1934, %v1926, %v1531
      %v1960 = vsel %vm1934, %v1927, %v1533
      %v1961 = vsel %vm1934, %v1928, %v1535
      %v1962 = vsel %vm1934, %v1929, %v1537
      %v1963 = vsel %vm1934, %v1930, %v1539
      %v1964 = vsel %vm1934, %v1931, %v1541
      %v1965 = vsel %vm1934, %v1932, %v1543
      %v1966 = vsel %vm1934, %v1933, %v1545
      %vm1967 = vcmask 687104
      %v1968 = vsel %vm1967, %v1935, %v1579
      %v1969 = vsel %vm1967, %v1936, %v1581
      %v1970 = vsel %vm1967, %v1937, %v1583
      %v1971 = vsel %vm1967, %v1938, %v1585
      %v1972 = vsel %vm1967, %v1939, %v1587
      %v1973 = vsel %vm1967, %v1940, %v1589
      %v1974 = vsel %vm1967, %v1941, %v1591
      %v1975 = vsel %vm1967, %v1942, %v1593
      %v1976 = vsel %vm1967, %v1943, %v1595
      %v1977 = vsel %vm1967, %v1944, %v1597
      %v1978 = vsel %vm1967, %v1945, %v1599
      %v1979 = vsel %vm1967, %v1946, %v1601
      %v1980 = vsel %vm1967, %v1947, %v1603
      %v1981 = vsel %vm1967, %v1948, %v1605
      %v1982 = vsel %vm1967, %v1949, %v1607
      %v1983 = vsel %vm1967, %v1950, %v1609
      %v1984 = vsel %vm1967, %v1951, %v1611
      %v1985 = vsel %vm1967, %v1952, %v1613
      %v1986 = vsel %vm1967, %v1953, %v1615
      %v1987 = vsel %vm1967, %v1954, %v1617
      %v1988 = vsel %vm1967, %v1955, %v1619
      %v1989 = vsel %vm1967, %v1956, %v1621
      %v1990 = vsel %vm1967, %v1957, %v1623
      %v1991 = vsel %vm1967, %v1958, %v1625
      %v1992 = vsel %vm1967, %v1959, %v1627
      %v1993 = vsel %vm1967, %v1960, %v1629
      %v1994 = vsel %vm1967, %v1961, %v1631
      %v1995 = vsel %vm1967, %v1962, %v1633
      %v1996 = vsel %vm1967, %v1963, %v1635
      %v1997 = vsel %vm1967, %v1964, %v1637
      %v1998 = vsel %vm1967, %v1965, %v1639
      %v1999 = vsel %vm1967, %v1966, %v1641
      %vm2000 = vcmask 785408
      %v2001 = vsel %vm2000, %v1968, %v1675
      %v2002 = vsel %vm2000, %v1969, %v1677
      %v2003 = vsel %vm2000, %v1970, %v1679
      %v2004 = vsel %vm2000, %v1971, %v1681
      %v2005 = vsel %vm2000, %v1972, %v1683
      %v2006 = vsel %vm2000, %v1973, %v1685
      %v2007 = vsel %vm2000, %v1974, %v1687
      %v2008 = vsel %vm2000, %v1975, %v1689
      %v2009 = vsel %vm2000, %v1976, %v1691
      %v2010 = vsel %vm2000, %v1977, %v1693
      %v2011 = vsel %vm2000, %v1978, %v1695
      %v2012 = vsel %vm2000, %v1979, %v1697
      %v2013 = vsel %vm2000, %v1980, %v1699
      %v2014 = vsel %vm2000, %v1981, %v1701
      %v2015 = vsel %vm2000, %v1982, %v1703
      %v2016 = vsel %vm2000, %v1983, %v1705
      %v2017 = vsel %vm2000, %v1984, %v1707
      %v2018 = vsel %vm2000, %v1985, %v1709
      %v2019 = vsel %vm2000, %v1986, %v1711
      %v2020 = vsel %vm2000, %v1987, %v1713
      %v2021 = vsel %vm2000, %v1988, %v1715
      %v2022 = vsel %vm2000, %v1989, %v1717
      %v2023 = vsel %vm2000, %v1990, %v1719
      %v2024 = vsel %vm2000, %v1991, %v1721
      %v2025 = vsel %vm2000, %v1992, %v1723
      %v2026 = vsel %vm2000, %v1993, %v1725
      %v2027 = vsel %vm2000, %v1994, %v1727
      %v2028 = vsel %vm2000, %v1995, %v1729
      %v2029 = vsel %vm2000, %v1996, %v1731
      %v2030 = vsel %vm2000, %v1997, %v1733
      %v2031 = vsel %vm2000, %v1998, %v1735
      %v2032 = vsel %vm2000, %v1999, %v1737
      %v2033 = vpack.c.bf16 %v2002, %v2001
      %v2034 = vpack.c.bf16 %v2004, %v2003
      %v2035 = vpack.c.bf16 %v2006, %v2005
      %v2036 = vpack.c.bf16 %v2008, %v2007
      %v2037 = vpack.c.bf16 %v2010, %v2009
      %v2038 = vpack.c.bf16 %v2012, %v2011
      %v2039 = vpack.c.bf16 %v2014, %v2013
      %v2040 = vpack.c.bf16 %v2016, %v2015
      %v2041 = vpack.c.bf16 %v2018, %v2017
      %v2042 = vpack.c.bf16 %v2020, %v2019
      %v2043 = vpack.c.bf16 %v2022, %v2021
      %v2044 = vpack.c.bf16 %v2024, %v2023
      %v2045 = vpack.c.bf16 %v2026, %v2025
      %v2046 = vpack.c.bf16 %v2028, %v2027
      %v2047 = vpack.c.bf16 %v2030, %v2029
      %v2048 = vpack.c.bf16 %v2032, %v2031
      %v2049 = vld [vmem:[%s2] sm:$0xf]
      %v2050 = vld [vmem:[%s2 + $0x4] sm:$0xf]
      %v2051 = vld [vmem:[%s2 + $0x8] sm:$0xf]
      %v2052 = vld [vmem:[%s2 + $0xc] sm:$0xf]
      %v2053 = vld [vmem:[%s2 + $0x10] sm:$0xf]
      %v2054 = vld [vmem:[%s2 + $0x14] sm:$0xf]
      %v2055 = vld [vmem:[%s2 + $0x18] sm:$0xf]
      %v2056 = vld [vmem:[%s2 + $0x1c] sm:$0xf]
      %v2057 = vld [vmem:[%s2 + $0x20] sm:$0xf]
      %v2058 = vld [vmem:[%s2 + $0x24] sm:$0xf]
      %v2059 = vld [vmem:[%s2 + $0x28] sm:$0xf]
      %v2060 = vld [vmem:[%s2 + $0x2c] sm:$0xf]
      %v2061 = vld [vmem:[%s2 + $0x30] sm:$0xf]
      %v2062 = vld [vmem:[%s2 + $0x34] sm:$0x3]
      %v2063 = vld [vmem:[%s3] sm:$0x1]
      %v2065 = vlaneseq
      %v2066 = vshrl.u32 %v2065, 7
      %v2067 = vsub.s32 0, %v2066
      %v2068 = vrot.slane %v2063, %v2067
      %v2084 = vunpack.c.l.b16 %v2049
      %v2085 = vunpack.c.l.b16 %v2050
      %v2086 = vunpack.c.l.b16 %v2051
      %v2087 = vunpack.c.l.b16 %v2052
      %v2088 = vunpack.c.l.b16 %v2053
      %v2089 = vunpack.c.l.b16 %v2054
      %v2090 = vunpack.c.l.b16 %v2055
      %v2091 = vunpack.c.l.b16 %v2056
      %v2092 = vunpack.c.l.b16 %v2057
      %v2093 = vunpack.c.l.b16 %v2058
      %v2094 = vunpack.c.l.b16 %v2059
      %v2095 = vunpack.c.l.b16 %v2060
      %v2096 = vunpack.c.l.b16 %v2061
      %v2097 = vunpack.c.l.b16 %v2062
      %v2098 = vpack.c.b16 %v2085, %v2084
      %v2099 = vpack.c.b16 %v2087, %v2086
      %v2100 = vpack.c.b16 %v2089, %v2088
      %v2101 = vpack.c.b16 %v2091, %v2090
      %v2102 = vpack.c.b16 %v2093, %v2092
      %v2103 = vpack.c.b16 %v2095, %v2094
      %v2104 = vpack.c.b16 %v2097, %v2096
      %vm2111 = vcmask 883712
      %v2113 = vsel %vm2111, %v2033, 0
      %v2116 = vsel %vm2111, %v2034, 0
      %v2119 = vsel %vm2111, %v2035, 0
      %v2122 = vsel %vm2111, %v2036, 0
      %v2125 = vsel %vm2111, %v2037, 0
      %v2128 = vsel %vm2111, %v2038, 0
      %v2131 = vsel %vm2111, %v2039, 0
      %v2134 = vsel %vm2111, %v2040, 0
      %v2137 = vsel %vm2111, %v2041, 0
      %v2140 = vsel %vm2111, %v2042, 0
      %v2143 = vsel %vm2111, %v2043, 0
      %v2146 = vsel %vm2111, %v2044, 0
      %v2149 = vsel %vm2111, %v2045, 0
      %v2152 = vsel %vm2111, %v2046, 0
      %v2155 = vsel %vm2111, %v2047, 0
      %v2158 = vsel %vm2111, %v2048, 0
      %v2161 = vsel %vm895, %v2104, 0
      %2163 = vmatprep.subr.bf16.mxu0 0
      %2164 = vmatpush1.bf16.msra.mxu0 %v2098
      %2165 = vmatprep.subr.bf16.mxu0 0
      %2166 = vmatpush1.bf16.msra.mxu0 %v2099
      %2167 = vmatprep.subr.bf16.mxu0 0
      %2168 = vmatpush1.bf16.msra.mxu0 %v2100
      %2169 = vmatprep.subr.bf16.mxu0 0
      %2170 = vmatpush1.bf16.msra.mxu0 %v2101
      %2171 = vmatprep.subr.bf16.mxu0 0
      %2172 = vmatpush1.bf16.msra.mxu0 %v2102
      %2173 = vmatprep.subr.bf16.mxu0 0
      %2174 = vmatpush1.bf16.msra.mxu0 %v2103
      %2175 = vmatprep.subr.bf16.mxu0 0
      %2176 = vmatpush1.bf16.msra.mxu0 %v2161
      %2177 = vmatprep.subr.bf16.mxu0 0
      %2178 = vmatpush1.bf16.msra.mxu0 0
      %2179 = vmatprep.subr.bf16.mxu0 0
      %2180 = vmatpush1.bf16.msra.mxu0 0
      %2181 = vmatprep.subr.bf16.mxu0 0
      %2182 = vmatpush1.bf16.msra.mxu0 0
      %2183 = vmatprep.subr.bf16.mxu0 0
      %2184 = vmatpush1.bf16.msra.mxu0 0
      %2185 = vmatprep.subr.bf16.mxu0 0
      %2186 = vmatpush1.bf16.msra.mxu0 0
      %2187 = vmatprep.subr.bf16.mxu0 0
      %2188 = vmatpush1.bf16.msra.mxu0 0
      %2189 = vmatprep.subr.bf16.mxu0 0
      %2190 = vmatpush1.bf16.msra.mxu0 0
      %2191 = vmatprep.subr.bf16.mxu0 0
      %2192 = vmatpush1.bf16.msra.mxu0 0
      %2193 = vmatprep.subr.bf16.mxu0 0
      %2194 = vmatpush1.bf16.msra.mxu0 0
      %2195 = vmatprep.mubr.bf16.mxu0 0
      %2196 = vmatmul.mubr.bf16.gmra.mrb[0].mxu0 %v2113
      %v2197 = vpop.f32.mrb[0].mxu0
      %v2198 = vadd.f32 %v2068, %v2197
      %v2199 = vpop.f32.mrb[0].mxu0
      %v2200 = vpop.f32.mrb[0].mxu0
      %v2201 = vadd.f32 %v2068, %v2200
      %v2202 = vpop.f32.mrb[0].mxu0
      %2203 = vmatprep.mubr.bf16.mxu0 0
      %2204 = vmatmul.mubr.bf16.gmra.mrb[0].mxu0 %v2116
      %v2205 = vpop.f32.mrb[0].mxu0
      %v2206 = vadd.f32 %v2068, %v2205
      %v2207 = vpop.f32.mrb[0].mxu0
      %v2208 = vpop.f32.mrb[0].mxu0
      %v2209 = vadd.f32 %v2068, %v2208
      %v2210 = vpop.f32.mrb[0].mxu0
      %2211 = vmatprep.mubr.bf16.mxu0 0
      %2212 = vmatmul.mubr.bf16.gmra.mrb[0].mxu0 %v2119
      %v2213 = vpop.f32.mrb[0].mxu0
      %v2214 = vadd.f32 %v2068, %v2213
      %v2215 = vpop.f32.mrb[0].mxu0
      %v2216 = vpop.f32.mrb[0].mxu0
      %v2217 = vadd.f32 %v2068, %v2216
      %v2218 = vpop.f32.mrb[0].mxu0
      %2219 = vmatprep.mubr.bf16.mxu0 0
      %2220 = vmatmul.mubr.bf16.gmra.mrb[0].mxu0 %v2122
      %v2221 = vpop.f32.mrb[0].mxu0
      %v2222 = vadd.f32 %v2068, %v2221
      %v2223 = vpop.f32.mrb[0].mxu0
      %v2224 = vpop.f32.mrb[0].mxu0
      %v2225 = vadd.f32 %v2068, %v2224
      %v2226 = vpop.f32.mrb[0].mxu0
      %2227 = vmatprep.mubr.bf16.mxu0 0
      %2228 = vmatmul.mubr.bf16.gmra.mrb[0].mxu0 %v2125
      %v2229 = vpop.f32.mrb[0].mxu0
      %v2230 = vadd.f32 %v2068, %v2229
      %v2231 = vpop.f32.mrb[0].mxu0
      %v2232 = vpop.f32.mrb[0].mxu0
      %v2233 = vadd.f32 %v2068, %v2232
      %v2234 = vpop.f32.mrb[0].mxu0
      %2235 = vmatprep.mubr.bf16.mxu0 0
      %2236 = vmatmul.mubr.bf16.gmra.mrb[0].mxu0 %v2128
      %v2237 = vpop.f32.mrb[0].mxu0
      %v2238 = vadd.f32 %v2068, %v2237
      %v2239 = vpop.f32.mrb[0].mxu0
      %v2240 = vpop.f32.mrb[0].mxu0
      %v2241 = vadd.f32 %v2068, %v2240
      %v2242 = vpop.f32.mrb[0].mxu0
      %2243 = vmatprep.mubr.bf16.mxu0 0
      %2244 = vmatmul.mubr.bf16.gmra.mrb[0].mxu0 %v2131
      %v2245 = vpop.f32.mrb[0].mxu0
      %v2246 = vadd.f32 %v2068, %v2245
      %v2247 = vpop.f32.mrb[0].mxu0
      %v2248 = vpop.f32.mrb[0].mxu0
      %v2249 = vadd.f32 %v2068, %v2248
      %v2250 = vpop.f32.mrb[0].mxu0
      %2251 = vmatprep.mubr.bf16.mxu0 0
      %2252 = vmatmul.mubr.bf16.gmra.mrb[0].mxu0 %v2134
      %v2253 = vpop.f32.mrb[0].mxu0
      %v2254 = vadd.f32 %v2068, %v2253
      %v2255 = vpop.f32.mrb[0].mxu0
      %v2256 = vpop.f32.mrb[0].mxu0
      %v2257 = vadd.f32 %v2068, %v2256
      %v2258 = vpop.f32.mrb[0].mxu0
      %2259 = vmatprep.mubr.bf16.mxu0 0
      %2260 = vmatmul.mubr.bf16.gmra.mrb[0].mxu0 %v2137
      %v2261 = vpop.f32.mrb[0].mxu0
      %v2262 = vadd.f32 %v2068, %v2261
      %v2263 = vpop.f32.mrb[0].mxu0
      %v2264 = vpop.f32.mrb[0].mxu0
      %v2265 = vadd.f32 %v2068, %v2264
      %v2266 = vpop.f32.mrb[0].mxu0
      %2267 = vmatprep.mubr.bf16.mxu0 0
      %2268 = vmatmul.mubr.bf16.gmra.mrb[0].mxu0 %v2140
      %v2269 = vpop.f32.mrb[0].mxu0
      %v2270 = vadd.f32 %v2068, %v2269
      %v2271 = vpop.f32.mrb[0].mxu0
      %v2272 = vpop.f32.mrb[0].mxu0
      %v2273 = vadd.f32 %v2068, %v2272
      %v2274 = vpop.f32.mrb[0].mxu0
      %2275 = vmatprep.mubr.bf16.mxu0 0
      %2276 = vmatmul.mubr.bf16.gmra.mrb[0].mxu0 %v2143
      %v2277 = vpop.f32.mrb[0].mxu0
      %v2278 = vadd.f32 %v2068, %v2277
      %v2279 = vpop.f32.mrb[0].mxu0
      %v2280 = vpop.f32.mrb[0].mxu0
      %v2281 = vadd.f32 %v2068, %v2280
      %v2282 = vpop.f32.mrb[0].mxu0
      %2283 = vmatprep.mubr.bf16.mxu0 0
      %2284 = vmatmul.mubr.bf16.gmra.mrb[0].mxu0 %v2146
      %v2285 = vpop.f32.mrb[0].mxu0
      %v2286 = vadd.f32 %v2068, %v2285
      %v2287 = vpop.f32.mrb[0].mxu0
      %v2288 = vpop.f32.mrb[0].mxu0
      %v2289 = vadd.f32 %v2068, %v2288
      %v2290 = vpop.f32.mrb[0].mxu0
      %2291 = vmatprep.mubr.bf16.mxu0 0
      %2292 = vmatmul.mubr.bf16.gmra.mrb[0].mxu0 %v2149
      %v2293 = vpop.f32.mrb[0].mxu0
      %v2294 = vadd.f32 %v2068, %v2293
      %v2295 = vpop.f32.mrb[0].mxu0
      %v2296 = vpop.f32.mrb[0].mxu0
      %v2297 = vadd.f32 %v2068, %v2296
      %v2298 = vpop.f32.mrb[0].mxu0
      %2299 = vmatprep.mubr.bf16.mxu0 0
      %2300 = vmatmul.mubr.bf16.gmra.mrb[0].mxu0 %v2152
      %v2301 = vpop.f32.mrb[0].mxu0
      %v2302 = vadd.f32 %v2068, %v2301
      %v2303 = vpop.f32.mrb[0].mxu0
      %v2304 = vpop.f32.mrb[0].mxu0
      %v2305 = vadd.f32 %v2068, %v2304
      %v2306 = vpop.f32.mrb[0].mxu0
      %2307 = vmatprep.mubr.bf16.mxu0 0
      %2308 = vmatmul.mubr.bf16.gmra.mrb[0].mxu0 %v2155
      %v2309 = vpop.f32.mrb[0].mxu0
      %v2310 = vadd.f32 %v2068, %v2309
      %v2311 = vpop.f32.mrb[0].mxu0
      %v2312 = vpop.f32.mrb[0].mxu0
      %v2313 = vadd.f32 %v2068, %v2312
      %v2314 = vpop.f32.mrb[0].mxu0
      %2315 = vmatprep.mubr.bf16.mxu0 0
      %2316 = vmatmul.mubr.bf16.gmra.mrb[0].mxu0 %v2158
      %v2317 = vpop.f32.mrb[0].mxu0
      %v2318 = vadd.f32 %v2068, %v2317
      %v2319 = vpop.f32.mrb[0].mxu0
      %v2320 = vpop.f32.mrb[0].mxu0
      %v2321 = vadd.f32 %v2068, %v2320
      %v2322 = vpop.f32.mrb[0].mxu0
      %2323 = vdwg.mxu0
      %s2324 = scalar_lea.vmem [#allocation3], 24
      %vm2325 = vcmask 64512
      %2326 = vst.msk [vmem:[%s2324 + $0x1] sm:$0xff] %vm2325, %v2198
      %2327 = vst.msk [vmem:[%s2324 + $0x9] sm:$0xff] %vm2325, %v2201
      %2328 = vst.msk [vmem:[%s2324 + $0x19] sm:$0xff] %vm2325, %v2206
      %2329 = vst.msk [vmem:[%s2324 + $0x21] sm:$0xff] %vm2325, %v2209
      %2330 = vst.msk [vmem:[%s2324 + $0x31] sm:$0xff] %vm2325, %v2214
      %2331 = vst.msk [vmem:[%s2324 + $0x39] sm:$0xff] %vm2325, %v2217
      %2332 = vst.msk [vmem:[%s2324 + $0x49] sm:$0xff] %vm2325, %v2222
      %2333 = vst.msk [vmem:[%s2324 + $0x51] sm:$0xff] %vm2325, %v2225
      %2334 = vst.msk [vmem:[%s2324 + $0x61] sm:$0xff] %vm2325, %v2230
      %2335 = vst.msk [vmem:[%s2324 + $0x69] sm:$0xff] %vm2325, %v2233
      %2336 = vst.msk [vmem:[%s2324 + $0x79] sm:$0xff] %vm2325, %v2238
      %2337 = vst.msk [vmem:[%s2324 + $0x81] sm:$0xff] %vm2325, %v2241
      %2338 = vst.msk [vmem:[%s2324 + $0x91] sm:$0xff] %vm2325, %v2246
      %2339 = vst.msk [vmem:[%s2324 + $0x99] sm:$0xff] %vm2325, %v2249
      %2340 = vst.msk [vmem:[%s2324 + $0xa9] sm:$0xff] %vm2325, %v2254
      %2341 = vst.msk [vmem:[%s2324 + $0xb1] sm:$0xff] %vm2325, %v2257
      %2342 = vst.msk [vmem:[%s2324 + $0xc1] sm:$0xff] %vm2325, %v2262
      %2343 = vst.msk [vmem:[%s2324 + $0xc9] sm:$0xff] %vm2325, %v2265
      %2344 = vst.msk [vmem:[%s2324 + $0xd9] sm:$0xff] %vm2325, %v2270
      %2345 = vst.msk [vmem:[%s2324 + $0xe1] sm:$0xff] %vm2325, %v2273
      %2346 = vst.msk [vmem:[%s2324 + $0xf1] sm:$0xff] %vm2325, %v2278
      %2347 = vst.msk [vmem:[%s2324 + $0xf9] sm:$0xff] %vm2325, %v2281
      %2348 = vst.msk [vmem:[%s2324 + $0x109] sm:$0xff] %vm2325, %v2286
      %2349 = vst.msk [vmem:[%s2324 + $0x111] sm:$0xff] %vm2325, %v2289
      %2350 = vst.msk [vmem:[%s2324 + $0x121] sm:$0xff] %vm2325, %v2294
      %2351 = vst.msk [vmem:[%s2324 + $0x129] sm:$0xff] %vm2325, %v2297
      %2352 = vst.msk [vmem:[%s2324 + $0x139] sm:$0xff] %vm2325, %v2302
      %2353 = vst.msk [vmem:[%s2324 + $0x141] sm:$0xff] %vm2325, %v2305
      %2354 = vst.msk [vmem:[%s2324 + $0x151] sm:$0xff] %vm2325, %v2310
      %2355 = vst.msk [vmem:[%s2324 + $0x159] sm:$0xff] %vm2325, %v2313
      %2356 = vst.msk [vmem:[%s2324 + $0x169] sm:$0xff] %vm2325, %v2318
      %2357 = vst.msk [vmem:[%s2324 + $0x171] sm:$0xff] %vm2325, %v2321
      %v2358 = vld [vmem:[#allocation3] sm:$0xff]
      %v2359 = vld [vmem:[#allocation3 + $0x8] sm:$0xff]
      %v2360 = vld [vmem:[#allocation3 + $0x10] sm:$0x3]
      %v2361 = vld [vmem:[#allocation3 + $0x18] sm:$0xff]
      %v2362 = vld [vmem:[#allocation3 + $0x20] sm:$0xff]
      %v2363 = vld [vmem:[#allocation3 + $0x28] sm:$0x3]
      %v2364 = vld [vmem:[#allocation3 + $0x30] sm:$0xff]
      %v2365 = vld [vmem:[#allocation3 + $0x38] sm:$0xff]
      %v2366 = vld [vmem:[#allocation3 + $0x40] sm:$0x3]
      %v2367 = vld [vmem:[#allocation3 + $0x48] sm:$0xff]
      %v2368 = vld [vmem:[#allocation3 + $0x50] sm:$0xff]
      %v2369 = vld [vmem:[#allocation3 + $0x58] sm:$0x3]
      %v2370 = vld [vmem:[#allocation3 + $0x60] sm:$0xff]
      %v2371 = vld [vmem:[#allocation3 + $0x68] sm:$0xff]
      %v2372 = vld [vmem:[#allocation3 + $0x70] sm:$0x3]
      %v2373 = vld [vmem:[#allocation3 + $0x78] sm:$0xff]
      %v2374 = vld [vmem:[#allocation3 + $0x80] sm:$0xff]
      %v2375 = vld [vmem:[#allocation3 + $0x88] sm:$0x3]
      %v2376 = vld [vmem:[#allocation3 + $0x90] sm:$0xff]
      %v2377 = vld [vmem:[#allocation3 + $0x98] sm:$0xff]
      %v2378 = vld [vmem:[#allocation3 + $0xa0] sm:$0x3]
      %v2379 = vld [vmem:[#allocation3 + $0xa8] sm:$0xff]
      %v2380 = vld [vmem:[#allocation3 + $0xb0] sm:$0xff]
      %v2381 = vld [vmem:[#allocation3 + $0xb8] sm:$0x3]
      %v2382 = vld [vmem:[#allocation3 + $0xc0] sm:$0xff]
      %v2383 = vld [vmem:[#allocation3 + $0xc8] sm:$0xff]
      %v2384 = vld [vmem:[#allocation3 + $0xd0] sm:$0x3]
      %v2385 = vld [vmem:[#allocation3 + $0xd8] sm:$0xff]
      %v2386 = vld [vmem:[#allocation3 + $0xe0] sm:$0xff]
      %v2387 = vld [vmem:[#allocation3 + $0xe8] sm:$0x3]
      %v2388 = vld [vmem:[#allocation3 + $0xf0] sm:$0xff]
      %v2389 = vld [vmem:[#allocation3 + $0xf8] sm:$0xff]
      %v2390 = vld [vmem:[#allocation3 + $0x100] sm:$0x3]
      %v2391 = vld [vmem:[#allocation3 + $0x108] sm:$0xff]
      %v2392 = vld [vmem:[#allocation3 + $0x110] sm:$0xff]
      %v2393 = vld [vmem:[#allocation3 + $0x118] sm:$0x3]
      %v2394 = vld [vmem:[#allocation3 + $0x120] sm:$0xff]
      %v2395 = vld [vmem:[#allocation3 + $0x128] sm:$0xff]
      %v2396 = vld [vmem:[#allocation3 + $0x130] sm:$0x3]
      %v2397 = vld [vmem:[#allocation3 + $0x138] sm:$0xff]
      %v2398 = vld [vmem:[#allocation3 + $0x140] sm:$0xff]
      %v2399 = vld [vmem:[#allocation3 + $0x148] sm:$0x3]
      %v2400 = vld [vmem:[#allocation3 + $0x150] sm:$0xff]
      %v2401 = vld [vmem:[#allocation3 + $0x158] sm:$0xff]
      %v2402 = vld [vmem:[#allocation3 + $0x160] sm:$0x3]
      %v2403 = vld [vmem:[#allocation3 + $0x168] sm:$0xff]
      %v2404 = vld [vmem:[#allocation3 + $0x170] sm:$0xff]
      %v2405 = vld [vmem:[#allocation3 + $0x178] sm:$0x3]
      %v2406 = vld [vmem:[#allocation3 + $0x180] sm:$0xff]
      %v2407 = vld [vmem:[#allocation3 + $0x188] sm:$0xff]
      %v2408 = vld [vmem:[#allocation3 + $0x190] sm:$0x3]
      %v2409 = vld [vmem:[#allocation3 + $0x198] sm:$0xff]
      %v2410 = vld [vmem:[#allocation3 + $0x1a0] sm:$0xff]
      %v2411 = vld [vmem:[#allocation3 + $0x1a8] sm:$0x3]
      %v2460 = vrot.slane %v2358, 1
      %v2461 = vrot.slane %v2359, 1
      %v2462 = vsel %vm814, %v2460, %v2461
      %v2463 = vrot.slane %v2360, 1
      %v2464 = vsel %vm814, %v2461, %v2463
      %v2465 = vrot.slane %v2361, 1
      %v2466 = vrot.slane %v2362, 1
      %v2467 = vsel %vm814, %v2465, %v2466
      %v2468 = vrot.slane %v2363, 1
      %v2469 = vsel %vm814, %v2466, %v2468
      %v2470 = vrot.slane %v2364, 1
      %v2471 = vrot.slane %v2365, 1
      %v2472 = vsel %vm814, %v2470, %v2471
      %v2473 = vrot.slane %v2366, 1
      %v2474 = vsel %vm814, %v2471, %v2473
      %v2475 = vrot.slane %v2367, 1
      %v2476 = vrot.slane %v2368, 1
      %v2477 = vsel %vm814, %v2475, %v2476
      %v2478 = vrot.slane %v2369, 1
      %v2479 = vsel %vm814, %v2476, %v2478
      %v2480 = vrot.slane %v2370, 1
      %v2481 = vrot.slane %v2371, 1
      %v2482 = vsel %vm814, %v2480, %v2481
      %v2483 = vrot.slane %v2372, 1
      %v2484 = vsel %vm814, %v2481, %v2483
      %v2485 = vrot.slane %v2373, 1
      %v2486 = vrot.slane %v2374, 1
      %v2487 = vsel %vm814, %v2485, %v2486
      %v2488 = vrot.slane %v2375, 1
      %v2489 = vsel %vm814, %v2486, %v2488
      %v2490 = vrot.slane %v2376, 1
      %v2491 = vrot.slane %v2377, 1
      %v2492 = vsel %vm814, %v2490, %v2491
      %v2493 = vrot.slane %v2378, 1
      %v2494 = vsel %vm814, %v2491, %v2493
      %v2495 = vrot.slane %v2379, 1
      %v2496 = vrot.slane %v2380, 1
      %v2497 = vsel %vm814, %v2495, %v2496
      %v2498 = vrot.slane %v2381, 1
      %v2499 = vsel %vm814, %v2496, %v2498
      %v2500 = vrot.slane %v2382, 1
      %v2501 = vrot.slane %v2383, 1
      %v2502 = vsel %vm814, %v2500, %v2501
      %v2503 = vrot.slane %v2384, 1
      %v2504 = vsel %vm814, %v2501, %v2503
      %v2505 = vrot.slane %v2385, 1
      %v2506 = vrot.slane %v2386, 1
      %v2507 = vsel %vm814, %v2505, %v2506
      %v2508 = vrot.slane %v2387, 1
      %v2509 = vsel %vm814, %v2506, %v2508
      %v2510 = vrot.slane %v2388, 1
      %v2511 = vrot.slane %v2389, 1
      %v2512 = vsel %vm814, %v2510, %v2511
      %v2513 = vrot.slane %v2390, 1
      %v2514 = vsel %vm814, %v2511, %v2513
      %v2515 = vrot.slane %v2391, 1
      %v2516 = vrot.slane %v2392, 1
      %v2517 = vsel %vm814, %v2515, %v2516
      %v2518 = vrot.slane %v2393, 1
      %v2519 = vsel %vm814, %v2516, %v2518
      %v2520 = vrot.slane %v2394, 1
      %v2521 = vrot.slane %v2395, 1
      %v2522 = vsel %vm814, %v2520, %v2521
      %v2523 = vrot.slane %v2396, 1
      %v2524 = vsel %vm814, %v2521, %v2523
      %v2525 = vrot.slane %v2397, 1
      %v2526 = vrot.slane %v2398, 1
      %v2527 = vsel %vm814, %v2525, %v2526
      %v2528 = vrot.slane %v2399, 1
      %v2529 = vsel %vm814, %v2526, %v2528
      %v2530 = vrot.slane %v2400, 1
      %v2531 = vrot.slane %v2401, 1
      %v2532 = vsel %vm814, %v2530, %v2531
      %v2533 = vrot.slane %v2402, 1
      %v2534 = vsel %vm814, %v2531, %v2533
      %v2535 = vrot.slane %v2403, 1
      %v2536 = vrot.slane %v2404, 1
      %v2537 = vsel %vm814, %v2535, %v2536
      %v2538 = vrot.slane %v2405, 1
      %v2539 = vsel %vm814, %v2536, %v2538
      %v2540 = vrot.slane %v2358, 2
      %v2541 = vrot.slane %v2359, 2
      %v2542 = vsel %vm895, %v2540, %v2541
      %v2543 = vrot.slane %v2360, 2
      %v2544 = vsel %vm895, %v2541, %v2543
      %v2545 = vrot.slane %v2361, 2
      %v2546 = vrot.slane %v2362, 2
      %v2547 = vsel %vm895, %v2545, %v2546
      %v2548 = vrot.slane %v2363, 2
      %v2549 = vsel %vm895, %v2546, %v2548
      %v2550 = vrot.slane %v2364, 2
      %v2551 = vrot.slane %v2365, 2
      %v2552 = vsel %vm895, %v2550, %v2551
      %v2553 = vrot.slane %v2366, 2
      %v2554 = vsel %vm895, %v2551, %v2553
      %v2555 = vrot.slane %v2367, 2
      %v2556 = vrot.slane %v2368, 2
      %v2557 = vsel %vm895, %v2555, %v2556
      %v2558 = vrot.slane %v2369, 2
      %v2559 = vsel %vm895, %v2556, %v2558
      %v2560 = vrot.slane %v2370, 2
      %v2561 = vrot.slane %v2371, 2
      %v2562 = vsel %vm895, %v2560, %v2561
      %v2563 = vrot.slane %v2372, 2
      %v2564 = vsel %vm895, %v2561, %v2563
      %v2565 = vrot.slane %v2373, 2
      %v2566 = vrot.slane %v2374, 2
      %v2567 = vsel %vm895, %v2565, %v2566
      %v2568 = vrot.slane %v2375, 2
      %v2569 = vsel %vm895, %v2566, %v2568
      %v2570 = vrot.slane %v2376, 2
      %v2571 = vrot.slane %v2377, 2
      %v2572 = vsel %vm895, %v2570, %v2571
      %v2573 = vrot.slane %v2378, 2
      %v2574 = vsel %vm895, %v2571, %v2573
      %v2575 = vrot.slane %v2379, 2
      %v2576 = vrot.slane %v2380, 2
      %v2577 = vsel %vm895, %v2575, %v2576
      %v2578 = vrot.slane %v2381, 2
      %v2579 = vsel %vm895, %v2576, %v2578
      %v2580 = vrot.slane %v2382, 2
      %v2581 = vrot.slane %v2383, 2
      %v2582 = vsel %vm895, %v2580, %v2581
      %v2583 = vrot.slane %v2384, 2
      %v2584 = vsel %vm895, %v2581, %v2583
      %v2585 = vrot.slane %v2385, 2
      %v2586 = vrot.slane %v2386, 2
      %v2587 = vsel %vm895, %v2585, %v2586
      %v2588 = vrot.slane %v2387, 2
      %v2589 = vsel %vm895, %v2586, %v2588
      %v2590 = vrot.slane %v2388, 2
      %v2591 = vrot.slane %v2389, 2
      %v2592 = vsel %vm895, %v2590, %v2591
      %v2593 = vrot.slane %v2390, 2
      %v2594 = vsel %vm895, %v2591, %v2593
      %v2595 = vrot.slane %v2391, 2
      %v2596 = vrot.slane %v2392, 2
      %v2597 = vsel %vm895, %v2595, %v2596
      %v2598 = vrot.slane %v2393, 2
      %v2599 = vsel %vm895, %v2596, %v2598
      %v2600 = vrot.slane %v2394, 2
      %v2601 = vrot.slane %v2395, 2
      %v2602 = vsel %vm895, %v2600, %v2601
      %v2603 = vrot.slane %v2396, 2
      %v2604 = vsel %vm895, %v2601, %v2603
      %v2605 = vrot.slane %v2397, 2
      %v2606 = vrot.slane %v2398, 2
      %v2607 = vsel %vm895, %v2605, %v2606
      %v2608 = vrot.slane %v2399, 2
      %v2609 = vsel %vm895, %v2606, %v2608
      %v2610 = vrot.slane %v2400, 2
      %v2611 = vrot.slane %v2401, 2
      %v2612 = vsel %vm895, %v2610, %v2611
      %v2613 = vrot.slane %v2402, 2
      %v2614 = vsel %vm895, %v2611, %v2613
      %v2615 = vrot.slane %v2403, 2
      %v2616 = vrot.slane %v2404, 2
      %v2617 = vsel %vm895, %v2615, %v2616
      %v2618 = vrot.slane %v2405, 2
      %v2619 = vsel %vm895, %v2616, %v2618
      %v2623 = vrot.slane %v2406, 1
      %v2624 = vrot.slane %v2407, 1
      %v2625 = vsel %vm814, %v2623, %v2624
      %v2626 = vrot.slane %v2408, 1
      %v2627 = vsel %vm814, %v2624, %v2626
      %v2628 = vrot.slane %v2406, 2
      %v2629 = vrot.slane %v2407, 2
      %v2630 = vsel %vm895, %v2628, %v2629
      %v2631 = vrot.slane %v2408, 2
      %v2632 = vsel %vm895, %v2629, %v2631
      %v2636 = vrot.slane %v2409, 1
      %v2637 = vrot.slane %v2410, 1
      %v2638 = vsel %vm814, %v2636, %v2637
      %v2639 = vrot.slane %v2411, 1
      %v2640 = vsel %vm814, %v2637, %v2639
      %v2641 = vrot.slane %v2409, 2
      %v2642 = vrot.slane %v2410, 2
      %v2643 = vsel %vm895, %v2641, %v2642
      %v2644 = vrot.slane %v2411, 2
      %v2645 = vsel %vm895, %v2642, %v2644
      %2646 = vrot.lane.b32.xlu0 %v2462, 8
      %v2647 = vpop.permute.xlu0 %2646
      %2648 = vrot.lane.b32.xlu0 %v2464, 8
      %v2649 = vpop.permute.xlu0 %2648
      %2650 = vrot.lane.b32.xlu0 %v2467, 8
      %v2651 = vpop.permute.xlu0 %2650
      %2652 = vrot.lane.b32.xlu0 %v2469, 8
      %v2653 = vpop.permute.xlu0 %2652
      %2654 = vrot.lane.b32.xlu0 %v2472, 8
      %v2655 = vpop.permute.xlu0 %2654
      %2656 = vrot.lane.b32.xlu0 %v2474, 8
      %v2657 = vpop.permute.xlu0 %2656
      %2658 = vrot.lane.b32.xlu0 %v2477, 8
      %v2659 = vpop.permute.xlu0 %2658
      %2660 = vrot.lane.b32.xlu0 %v2479, 8
      %v2661 = vpop.permute.xlu0 %2660
      %2662 = vrot.lane.b32.xlu0 %v2482, 8
      %v2663 = vpop.permute.xlu0 %2662
      %2664 = vrot.lane.b32.xlu0 %v2484, 8
      %v2665 = vpop.permute.xlu0 %2664
      %2666 = vrot.lane.b32.xlu0 %v2487, 8
      %v2667 = vpop.permute.xlu0 %2666
      %2668 = vrot.lane.b32.xlu0 %v2489, 8
      %v2669 = vpop.permute.xlu0 %2668
      %2670 = vrot.lane.b32.xlu0 %v2492, 8
      %v2671 = vpop.permute.xlu0 %2670
      %2672 = vrot.lane.b32.xlu0 %v2494, 8
      %v2673 = vpop.permute.xlu0 %2672
      %2674 = vrot.lane.b32.xlu0 %v2497, 8
      %v2675 = vpop.permute.xlu0 %2674
      %2676 = vrot.lane.b32.xlu0 %v2499, 8
      %v2677 = vpop.permute.xlu0 %2676
      %2678 = vrot.lane.b32.xlu0 %v2502, 8
      %v2679 = vpop.permute.xlu0 %2678
      %2680 = vrot.lane.b32.xlu0 %v2504, 8
      %v2681 = vpop.permute.xlu0 %2680
      %2682 = vrot.lane.b32.xlu0 %v2507, 8
      %v2683 = vpop.permute.xlu0 %2682
      %2684 = vrot.lane.b32.xlu0 %v2509, 8
      %v2685 = vpop.permute.xlu0 %2684
      %2686 = vrot.lane.b32.xlu0 %v2512, 8
      %v2687 = vpop.permute.xlu0 %2686
      %2688 = vrot.lane.b32.xlu0 %v2514, 8
      %v2689 = vpop.permute.xlu0 %2688
      %2690 = vrot.lane.b32.xlu0 %v2517, 8
      %v2691 = vpop.permute.xlu0 %2690
      %2692 = vrot.lane.b32.xlu0 %v2519, 8
      %v2693 = vpop.permute.xlu0 %2692
      %2694 = vrot.lane.b32.xlu0 %v2522, 8
      %v2695 = vpop.permute.xlu0 %2694
      %2696 = vrot.lane.b32.xlu0 %v2524, 8
      %v2697 = vpop.permute.xlu0 %2696
      %2698 = vrot.lane.b32.xlu0 %v2527, 8
      %v2699 = vpop.permute.xlu0 %2698
      %2700 = vrot.lane.b32.xlu0 %v2529, 8
      %v2701 = vpop.permute.xlu0 %2700
      %2702 = vrot.lane.b32.xlu0 %v2532, 8
      %v2703 = vpop.permute.xlu0 %2702
      %2704 = vrot.lane.b32.xlu0 %v2534, 8
      %v2705 = vpop.permute.xlu0 %2704
      %2706 = vrot.lane.b32.xlu0 %v2537, 8
      %v2707 = vpop.permute.xlu0 %2706
      %2708 = vrot.lane.b32.xlu0 %v2539, 8
      %v2709 = vpop.permute.xlu0 %2708
      %2742 = vrot.lane.b32.xlu0 %v2542, 16
      %v2743 = vpop.permute.xlu0 %2742
      %2744 = vrot.lane.b32.xlu0 %v2544, 16
      %v2745 = vpop.permute.xlu0 %2744
      %2746 = vrot.lane.b32.xlu0 %v2547, 16
      %v2747 = vpop.permute.xlu0 %2746
      %2748 = vrot.lane.b32.xlu0 %v2549, 16
      %v2749 = vpop.permute.xlu0 %2748
      %2750 = vrot.lane.b32.xlu0 %v2552, 16
      %v2751 = vpop.permute.xlu0 %2750
      %2752 = vrot.lane.b32.xlu0 %v2554, 16
      %v2753 = vpop.permute.xlu0 %2752
      %2754 = vrot.lane.b32.xlu0 %v2557, 16
      %v2755 = vpop.permute.xlu0 %2754
      %2756 = vrot.lane.b32.xlu0 %v2559, 16
      %v2757 = vpop.permute.xlu0 %2756
      %2758 = vrot.lane.b32.xlu0 %v2562, 16
      %v2759 = vpop.permute.xlu0 %2758
      %2760 = vrot.lane.b32.xlu0 %v2564, 16
      %v2761 = vpop.permute.xlu0 %2760
      %2762 = vrot.lane.b32.xlu0 %v2567, 16
      %v2763 = vpop.permute.xlu0 %2762
      %2764 = vrot.lane.b32.xlu0 %v2569, 16
      %v2765 = vpop.permute.xlu0 %2764
      %2766 = vrot.lane.b32.xlu0 %v2572, 16
      %v2767 = vpop.permute.xlu0 %2766
      %2768 = vrot.lane.b32.xlu0 %v2574, 16
      %v2769 = vpop.permute.xlu0 %2768
      %2770 = vrot.lane.b32.xlu0 %v2577, 16
      %v2771 = vpop.permute.xlu0 %2770
      %2772 = vrot.lane.b32.xlu0 %v2579, 16
      %v2773 = vpop.permute.xlu0 %2772
      %2774 = vrot.lane.b32.xlu0 %v2582, 16
      %v2775 = vpop.permute.xlu0 %2774
      %2776 = vrot.lane.b32.xlu0 %v2584, 16
      %v2777 = vpop.permute.xlu0 %2776
      %2778 = vrot.lane.b32.xlu0 %v2587, 16
      %v2779 = vpop.permute.xlu0 %2778
      %2780 = vrot.lane.b32.xlu0 %v2589, 16
      %v2781 = vpop.permute.xlu0 %2780
      %2782 = vrot.lane.b32.xlu0 %v2592, 16
      %v2783 = vpop.permute.xlu0 %2782
      %2784 = vrot.lane.b32.xlu0 %v2594, 16
      %v2785 = vpop.permute.xlu0 %2784
      %2786 = vrot.lane.b32.xlu0 %v2597, 16
      %v2787 = vpop.permute.xlu0 %2786
      %2788 = vrot.lane.b32.xlu0 %v2599, 16
      %v2789 = vpop.permute.xlu0 %2788
      %2790 = vrot.lane.b32.xlu0 %v2602, 16
      %v2791 = vpop.permute.xlu0 %2790
      %2792 = vrot.lane.b32.xlu0 %v2604, 16
      %v2793 = vpop.permute.xlu0 %2792
      %2794 = vrot.lane.b32.xlu0 %v2607, 16
      %v2795 = vpop.permute.xlu0 %2794
      %2796 = vrot.lane.b32.xlu0 %v2609, 16
      %v2797 = vpop.permute.xlu0 %2796
      %2798 = vrot.lane.b32.xlu0 %v2612, 16
      %v2799 = vpop.permute.xlu0 %2798
      %2800 = vrot.lane.b32.xlu0 %v2614, 16
      %v2801 = vpop.permute.xlu0 %2800
      %2802 = vrot.lane.b32.xlu0 %v2617, 16
      %v2803 = vpop.permute.xlu0 %2802
      %2804 = vrot.lane.b32.xlu0 %v2619, 16
      %v2805 = vpop.permute.xlu0 %2804
      %2838 = vrot.lane.b32.xlu0 %v2361, 24
      %v2839 = vpop.permute.xlu0 %2838
      %2840 = vrot.lane.b32.xlu0 %v2362, 24
      %v2841 = vpop.permute.xlu0 %2840
      %2842 = vrot.lane.b32.xlu0 %v2364, 24
      %v2843 = vpop.permute.xlu0 %2842
      %2844 = vrot.lane.b32.xlu0 %v2365, 24
      %v2845 = vpop.permute.xlu0 %2844
      %2846 = vrot.lane.b32.xlu0 %v2367, 24
      %v2847 = vpop.permute.xlu0 %2846
      %2848 = vrot.lane.b32.xlu0 %v2368, 24
      %v2849 = vpop.permute.xlu0 %2848
      %2850 = vrot.lane.b32.xlu0 %v2370, 24
      %v2851 = vpop.permute.xlu0 %2850
      %2852 = vrot.lane.b32.xlu0 %v2371, 24
      %v2853 = vpop.permute.xlu0 %2852
      %2854 = vrot.lane.b32.xlu0 %v2373, 24
      %v2855 = vpop.permute.xlu0 %2854
      %2856 = vrot.lane.b32.xlu0 %v2374, 24
      %v2857 = vpop.permute.xlu0 %2856
      %2858 = vrot.lane.b32.xlu0 %v2376, 24
      %v2859 = vpop.permute.xlu0 %2858
      %2860 = vrot.lane.b32.xlu0 %v2377, 24
      %v2861 = vpop.permute.xlu0 %2860
      %2862 = vrot.lane.b32.xlu0 %v2379, 24
      %v2863 = vpop.permute.xlu0 %2862
      %2864 = vrot.lane.b32.xlu0 %v2380, 24
      %v2865 = vpop.permute.xlu0 %2864
      %2866 = vrot.lane.b32.xlu0 %v2382, 24
      %v2867 = vpop.permute.xlu0 %2866
      %2868 = vrot.lane.b32.xlu0 %v2383, 24
      %v2869 = vpop.permute.xlu0 %2868
      %2870 = vrot.lane.b32.xlu0 %v2385, 24
      %v2871 = vpop.permute.xlu0 %2870
      %2872 = vrot.lane.b32.xlu0 %v2386, 24
      %v2873 = vpop.permute.xlu0 %2872
      %2874 = vrot.lane.b32.xlu0 %v2388, 24
      %v2875 = vpop.permute.xlu0 %2874
      %2876 = vrot.lane.b32.xlu0 %v2389, 24
      %v2877 = vpop.permute.xlu0 %2876
      %2878 = vrot.lane.b32.xlu0 %v2391, 24
      %v2879 = vpop.permute.xlu0 %2878
      %2880 = vrot.lane.b32.xlu0 %v2392, 24
      %v2881 = vpop.permute.xlu0 %2880
      %2882 = vrot.lane.b32.xlu0 %v2394, 24
      %v2883 = vpop.permute.xlu0 %2882
      %2884 = vrot.lane.b32.xlu0 %v2395, 24
      %v2885 = vpop.permute.xlu0 %2884
      %2886 = vrot.lane.b32.xlu0 %v2397, 24
      %v2887 = vpop.permute.xlu0 %2886
      %2888 = vrot.lane.b32.xlu0 %v2398, 24
      %v2889 = vpop.permute.xlu0 %2888
      %2890 = vrot.lane.b32.xlu0 %v2400, 24
      %v2891 = vpop.permute.xlu0 %2890
      %2892 = vrot.lane.b32.xlu0 %v2401, 24
      %v2893 = vpop.permute.xlu0 %2892
      %2894 = vrot.lane.b32.xlu0 %v2403, 24
      %v2895 = vpop.permute.xlu0 %2894
      %2896 = vrot.lane.b32.xlu0 %v2404, 24
      %v2897 = vpop.permute.xlu0 %2896
      %2898 = vrot.lane.b32.xlu0 %v2406, 24
      %v2899 = vpop.permute.xlu0 %2898
      %2900 = vrot.lane.b32.xlu0 %v2407, 24
      %v2901 = vpop.permute.xlu0 %2900
      %2934 = vrot.lane.b32.xlu0 %v2467, 32
      %v2935 = vpop.permute.xlu0 %2934
      %2936 = vrot.lane.b32.xlu0 %v2469, 32
      %v2937 = vpop.permute.xlu0 %2936
      %2938 = vrot.lane.b32.xlu0 %v2472, 32
      %v2939 = vpop.permute.xlu0 %2938
      %2940 = vrot.lane.b32.xlu0 %v2474, 32
      %v2941 = vpop.permute.xlu0 %2940
      %2942 = vrot.lane.b32.xlu0 %v2477, 32
      %v2943 = vpop.permute.xlu0 %2942
      %2944 = vrot.lane.b32.xlu0 %v2479, 32
      %v2945 = vpop.permute.xlu0 %2944
      %2946 = vrot.lane.b32.xlu0 %v2482, 32
      %v2947 = vpop.permute.xlu0 %2946
      %2948 = vrot.lane.b32.xlu0 %v2484, 32
      %v2949 = vpop.permute.xlu0 %2948
      %2950 = vrot.lane.b32.xlu0 %v2487, 32
      %v2951 = vpop.permute.xlu0 %2950
      %2952 = vrot.lane.b32.xlu0 %v2489, 32
      %v2953 = vpop.permute.xlu0 %2952
      %2954 = vrot.lane.b32.xlu0 %v2492, 32
      %v2955 = vpop.permute.xlu0 %2954
      %2956 = vrot.lane.b32.xlu0 %v2494, 32
      %v2957 = vpop.permute.xlu0 %2956
      %2958 = vrot.lane.b32.xlu0 %v2497, 32
      %v2959 = vpop.permute.xlu0 %2958
      %2960 = vrot.lane.b32.xlu0 %v2499, 32
      %v2961 = vpop.permute.xlu0 %2960
      %2962 = vrot.lane.b32.xlu0 %v2502, 32
      %v2963 = vpop.permute.xlu0 %2962
      %2964 = vrot.lane.b32.xlu0 %v2504, 32
      %v2965 = vpop.permute.xlu0 %2964
      %2966 = vrot.lane.b32.xlu0 %v2507, 32
      %v2967 = vpop.permute.xlu0 %2966
      %2968 = vrot.lane.b32.xlu0 %v2509, 32
      %v2969 = vpop.permute.xlu0 %2968
      %2970 = vrot.lane.b32.xlu0 %v2512, 32
      %v2971 = vpop.permute.xlu0 %2970
      %2972 = vrot.lane.b32.xlu0 %v2514, 32
      %v2973 = vpop.permute.xlu0 %2972
      %2974 = vrot.lane.b32.xlu0 %v2517, 32
      %v2975 = vpop.permute.xlu0 %2974
      %2976 = vrot.lane.b32.xlu0 %v2519, 32
      %v2977 = vpop.permute.xlu0 %2976
      %2978 = vrot.lane.b32.xlu0 %v2522, 32
      %v2979 = vpop.permute.xlu0 %2978
      %2980 = vrot.lane.b32.xlu0 %v2524, 32
      %v2981 = vpop.permute.xlu0 %2980
      %2982 = vrot.lane.b32.xlu0 %v2527, 32
      %v2983 = vpop.permute.xlu0 %2982
      %2984 = vrot.lane.b32.xlu0 %v2529, 32
      %v2985 = vpop.permute.xlu0 %2984
      %2986 = vrot.lane.b32.xlu0 %v2532, 32
      %v2987 = vpop.permute.xlu0 %2986
      %2988 = vrot.lane.b32.xlu0 %v2534, 32
      %v2989 = vpop.permute.xlu0 %2988
      %2990 = vrot.lane.b32.xlu0 %v2537, 32
      %v2991 = vpop.permute.xlu0 %2990
      %2992 = vrot.lane.b32.xlu0 %v2539, 32
      %v2993 = vpop.permute.xlu0 %2992
      %2994 = vrot.lane.b32.xlu0 %v2625, 32
      %v2995 = vpop.permute.xlu0 %2994
      %2996 = vrot.lane.b32.xlu0 %v2627, 32
      %v2997 = vpop.permute.xlu0 %2996
      %3030 = vrot.lane.b32.xlu0 %v2547, 40
      %v3031 = vpop.permute.xlu0 %3030
      %3032 = vrot.lane.b32.xlu0 %v2549, 40
      %v3033 = vpop.permute.xlu0 %3032
      %3034 = vrot.lane.b32.xlu0 %v2552, 40
      %v3035 = vpop.permute.xlu0 %3034
      %3036 = vrot.lane.b32.xlu0 %v2554, 40
      %v3037 = vpop.permute.xlu0 %3036
      %3038 = vrot.lane.b32.xlu0 %v2557, 40
      %v3039 = vpop.permute.xlu0 %3038
      %3040 = vrot.lane.b32.xlu0 %v2559, 40
      %v3041 = vpop.permute.xlu0 %3040
      %3042 = vrot.lane.b32.xlu0 %v2562, 40
      %v3043 = vpop.permute.xlu0 %3042
      %3044 = vrot.lane.b32.xlu0 %v2564, 40
      %v3045 = vpop.permute.xlu0 %3044
      %3046 = vrot.lane.b32.xlu0 %v2567, 40
      %v3047 = vpop.permute.xlu0 %3046
      %3048 = vrot.lane.b32.xlu0 %v2569, 40
      %v3049 = vpop.permute.xlu0 %3048
      %3050 = vrot.lane.b32.xlu0 %v2572, 40
      %v3051 = vpop.permute.xlu0 %3050
      %3052 = vrot.lane.b32.xlu0 %v2574, 40
      %v3053 = vpop.permute.xlu0 %3052
      %3054 = vrot.lane.b32.xlu0 %v2577, 40
      %v3055 = vpop.permute.xlu0 %3054
      %3056 = vrot.lane.b32.xlu0 %v2579, 40
      %v3057 = vpop.permute.xlu0 %3056
      %3058 = vrot.lane.b32.xlu0 %v2582, 40
      %v3059 = vpop.permute.xlu0 %3058
      %3060 = vrot.lane.b32.xlu0 %v2584, 40
      %v3061 = vpop.permute.xlu0 %3060
      %3062 = vrot.lane.b32.xlu0 %v2587, 40
      %v3063 = vpop.permute.xlu0 %3062
      %3064 = vrot.lane.b32.xlu0 %v2589, 40
      %v3065 = vpop.permute.xlu0 %3064
      %3066 = vrot.lane.b32.xlu0 %v2592, 40
      %v3067 = vpop.permute.xlu0 %3066
      %3068 = vrot.lane.b32.xlu0 %v2594, 40
      %v3069 = vpop.permute.xlu0 %3068
      %3070 = vrot.lane.b32.xlu0 %v2597, 40
      %v3071 = vpop.permute.xlu0 %3070
      %3072 = vrot.lane.b32.xlu0 %v2599, 40
      %v3073 = vpop.permute.xlu0 %3072
      %3074 = vrot.lane.b32.xlu0 %v2602, 40
      %v3075 = vpop.permute.xlu0 %3074
      %3076 = vrot.lane.b32.xlu0 %v2604, 40
      %v3077 = vpop.permute.xlu0 %3076
      %3078 = vrot.lane.b32.xlu0 %v2607, 40
      %v3079 = vpop.permute.xlu0 %3078
      %3080 = vrot.lane.b32.xlu0 %v2609, 40
      %v3081 = vpop.permute.xlu0 %3080
      %3082 = vrot.lane.b32.xlu0 %v2612, 40
      %v3083 = vpop.permute.xlu0 %3082
      %3084 = vrot.lane.b32.xlu0 %v2614, 40
      %v3085 = vpop.permute.xlu0 %3084
      %3086 = vrot.lane.b32.xlu0 %v2617, 40
      %v3087 = vpop.permute.xlu0 %3086
      %3088 = vrot.lane.b32.xlu0 %v2619, 40
      %v3089 = vpop.permute.xlu0 %3088
      %3090 = vrot.lane.b32.xlu0 %v2630, 40
      %v3091 = vpop.permute.xlu0 %3090
      %3092 = vrot.lane.b32.xlu0 %v2632, 40
      %v3093 = vpop.permute.xlu0 %3092
      %3126 = vrot.lane.b32.xlu0 %v2364, 48
      %v3127 = vpop.permute.xlu0 %3126
      %3128 = vrot.lane.b32.xlu0 %v2365, 48
      %v3129 = vpop.permute.xlu0 %3128
      %3130 = vrot.lane.b32.xlu0 %v2367, 48
      %v3131 = vpop.permute.xlu0 %3130
      %3132 = vrot.lane.b32.xlu0 %v2368, 48
      %v3133 = vpop.permute.xlu0 %3132
      %3134 = vrot.lane.b32.xlu0 %v2370, 48
      %v3135 = vpop.permute.xlu0 %3134
      %3136 = vrot.lane.b32.xlu0 %v2371, 48
      %v3137 = vpop.permute.xlu0 %3136
      %3138 = vrot.lane.b32.xlu0 %v2373, 48
      %v3139 = vpop.permute.xlu0 %3138
      %3140 = vrot.lane.b32.xlu0 %v2374, 48
      %v3141 = vpop.permute.xlu0 %3140
      %3142 = vrot.lane.b32.xlu0 %v2376, 48
      %v3143 = vpop.permute.xlu0 %3142
      %3144 = vrot.lane.b32.xlu0 %v2377, 48
      %v3145 = vpop.permute.xlu0 %3144
      %3146 = vrot.lane.b32.xlu0 %v2379, 48
      %v3147 = vpop.permute.xlu0 %3146
      %3148 = vrot.lane.b32.xlu0 %v2380, 48
      %v3149 = vpop.permute.xlu0 %3148
      %3150 = vrot.lane.b32.xlu0 %v2382, 48
      %v3151 = vpop.permute.xlu0 %3150
      %3152 = vrot.lane.b32.xlu0 %v2383, 48
      %v3153 = vpop.permute.xlu0 %3152
      %3154 = vrot.lane.b32.xlu0 %v2385, 48
      %v3155 = vpop.permute.xlu0 %3154
      %3156 = vrot.lane.b32.xlu0 %v2386, 48
      %v3157 = vpop.permute.xlu0 %3156
      %3158 = vrot.lane.b32.xlu0 %v2388, 48
      %v3159 = vpop.permute.xlu0 %3158
      %3160 = vrot.lane.b32.xlu0 %v2389, 48
      %v3161 = vpop.permute.xlu0 %3160
      %3162 = vrot.lane.b32.xlu0 %v2391, 48
      %v3163 = vpop.permute.xlu0 %3162
      %3164 = vrot.lane.b32.xlu0 %v2392, 48
      %v3165 = vpop.permute.xlu0 %3164
      %3166 = vrot.lane.b32.xlu0 %v2394, 48
      %v3167 = vpop.permute.xlu0 %3166
      %3168 = vrot.lane.b32.xlu0 %v2395, 48
      %v3169 = vpop.permute.xlu0 %3168
      %3170 = vrot.lane.b32.xlu0 %v2397, 48
      %v3171 = vpop.permute.xlu0 %3170
      %3172 = vrot.lane.b32.xlu0 %v2398, 48
      %v3173 = vpop.permute.xlu0 %3172
      %3174 = vrot.lane.b32.xlu0 %v2400, 48
      %v3175 = vpop.permute.xlu0 %3174
      %3176 = vrot.lane.b32.xlu0 %v2401, 48
      %v3177 = vpop.permute.xlu0 %3176
      %3178 = vrot.lane.b32.xlu0 %v2403, 48
      %v3179 = vpop.permute.xlu0 %3178
      %3180 = vrot.lane.b32.xlu0 %v2404, 48
      %v3181 = vpop.permute.xlu0 %3180
      %3182 = vrot.lane.b32.xlu0 %v2406, 48
      %v3183 = vpop.permute.xlu0 %3182
      %3184 = vrot.lane.b32.xlu0 %v2407, 48
      %v3185 = vpop.permute.xlu0 %3184
      %3186 = vrot.lane.b32.xlu0 %v2409, 48
      %v3187 = vpop.permute.xlu0 %3186
      %3188 = vrot.lane.b32.xlu0 %v2410, 48
      %v3189 = vpop.permute.xlu0 %3188
      %3222 = vrot.lane.b32.xlu0 %v2472, 56
      %v3223 = vpop.permute.xlu0 %3222
      %3224 = vrot.lane.b32.xlu0 %v2474, 56
      %v3225 = vpop.permute.xlu0 %3224
      %3226 = vrot.lane.b32.xlu0 %v2477, 56
      %v3227 = vpop.permute.xlu0 %3226
      %3228 = vrot.lane.b32.xlu0 %v2479, 56
      %v3229 = vpop.permute.xlu0 %3228
      %3230 = vrot.lane.b32.xlu0 %v2482, 56
      %v3231 = vpop.permute.xlu0 %3230
      %3232 = vrot.lane.b32.xlu0 %v2484, 56
      %v3233 = vpop.permute.xlu0 %3232
      %3234 = vrot.lane.b32.xlu0 %v2487, 56
      %v3235 = vpop.permute.xlu0 %3234
      %3236 = vrot.lane.b32.xlu0 %v2489, 56
      %v3237 = vpop.permute.xlu0 %3236
      %3238 = vrot.lane.b32.xlu0 %v2492, 56
      %v3239 = vpop.permute.xlu0 %3238
      %3240 = vrot.lane.b32.xlu0 %v2494, 56
      %v3241 = vpop.permute.xlu0 %3240
      %3242 = vrot.lane.b32.xlu0 %v2497, 56
      %v3243 = vpop.permute.xlu0 %3242
      %3244 = vrot.lane.b32.xlu0 %v2499, 56
      %v3245 = vpop.permute.xlu0 %3244
      %3246 = vrot.lane.b32.xlu0 %v2502, 56
      %v3247 = vpop.permute.xlu0 %3246
      %3248 = vrot.lane.b32.xlu0 %v2504, 56
      %v3249 = vpop.permute.xlu0 %3248
      %3250 = vrot.lane.b32.xlu0 %v2507, 56
      %v3251 = vpop.permute.xlu0 %3250
      %3252 = vrot.lane.b32.xlu0 %v2509, 56
      %v3253 = vpop.permute.xlu0 %3252
      %3254 = vrot.lane.b32.xlu0 %v2512, 56
      %v3255 = vpop.permute.xlu0 %3254
      %3256 = vrot.lane.b32.xlu0 %v2514, 56
      %v3257 = vpop.permute.xlu0 %3256
      %3258 = vrot.lane.b32.xlu0 %v2517, 56
      %v3259 = vpop.permute.xlu0 %3258
      %3260 = vrot.lane.b32.xlu0 %v2519, 56
      %v3261 = vpop.permute.xlu0 %3260
      %3262 = vrot.lane.b32.xlu0 %v2522, 56
      %v3263 = vpop.permute.xlu0 %3262
      %3264 = vrot.lane.b32.xlu0 %v2524, 56
      %v3265 = vpop.permute.xlu0 %3264
      %3266 = vrot.lane.b32.xlu0 %v2527, 56
      %v3267 = vpop.permute.xlu0 %3266
      %3268 = vrot.lane.b32.xlu0 %v2529, 56
      %v3269 = vpop.permute.xlu0 %3268
      %3270 = vrot.lane.b32.xlu0 %v2532, 56
      %v3271 = vpop.permute.xlu0 %3270
      %3272 = vrot.lane.b32.xlu0 %v2534, 56
      %v3273 = vpop.permute.xlu0 %3272
      %3274 = vrot.lane.b32.xlu0 %v2537, 56
      %v3275 = vpop.permute.xlu0 %3274
      %3276 = vrot.lane.b32.xlu0 %v2539, 56
      %v3277 = vpop.permute.xlu0 %3276
      %3278 = vrot.lane.b32.xlu0 %v2625, 56
      %v3279 = vpop.permute.xlu0 %3278
      %3280 = vrot.lane.b32.xlu0 %v2627, 56
      %v3281 = vpop.permute.xlu0 %3280
      %3282 = vrot.lane.b32.xlu0 %v2638, 56
      %v3283 = vpop.permute.xlu0 %3282
      %3284 = vrot.lane.b32.xlu0 %v2640, 56
      %v3285 = vpop.permute.xlu0 %3284
      %3318 = vrot.lane.b32.xlu0 %v2552, 64
      %v3319 = vpop.permute.xlu0 %3318
      %3320 = vrot.lane.b32.xlu0 %v2554, 64
      %v3321 = vpop.permute.xlu0 %3320
      %3322 = vrot.lane.b32.xlu0 %v2557, 64
      %v3323 = vpop.permute.xlu0 %3322
      %3324 = vrot.lane.b32.xlu0 %v2559, 64
      %v3325 = vpop.permute.xlu0 %3324
      %3326 = vrot.lane.b32.xlu0 %v2562, 64
      %v3327 = vpop.permute.xlu0 %3326
      %3328 = vrot.lane.b32.xlu0 %v2564, 64
      %v3329 = vpop.permute.xlu0 %3328
      %3330 = vrot.lane.b32.xlu0 %v2567, 64
      %v3331 = vpop.permute.xlu0 %3330
      %3332 = vrot.lane.b32.xlu0 %v2569, 64
      %v3333 = vpop.permute.xlu0 %3332
      %3334 = vrot.lane.b32.xlu0 %v2572, 64
      %v3335 = vpop.permute.xlu0 %3334
      %3336 = vrot.lane.b32.xlu0 %v2574, 64
      %v3337 = vpop.permute.xlu0 %3336
      %3338 = vrot.lane.b32.xlu0 %v2577, 64
      %v3339 = vpop.permute.xlu0 %3338
      %3340 = vrot.lane.b32.xlu0 %v2579, 64
      %v3341 = vpop.permute.xlu0 %3340
      %3342 = vrot.lane.b32.xlu0 %v2582, 64
      %v3343 = vpop.permute.xlu0 %3342
      %3344 = vrot.lane.b32.xlu0 %v2584, 64
      %v3345 = vpop.permute.xlu0 %3344
      %3346 = vrot.lane.b32.xlu0 %v2587, 64
      %v3347 = vpop.permute.xlu0 %3346
      %3348 = vrot.lane.b32.xlu0 %v2589, 64
      %v3349 = vpop.permute.xlu0 %3348
      %3350 = vrot.lane.b32.xlu0 %v2592, 64
      %v3351 = vpop.permute.xlu0 %3350
      %3352 = vrot.lane.b32.xlu0 %v2594, 64
      %v3353 = vpop.permute.xlu0 %3352
      %3354 = vrot.lane.b32.xlu0 %v2597, 64
      %v3355 = vpop.permute.xlu0 %3354
      %3356 = vrot.lane.b32.xlu0 %v2599, 64
      %v3357 = vpop.permute.xlu0 %3356
      %3358 = vrot.lane.b32.xlu0 %v2602, 64
      %v3359 = vpop.permute.xlu0 %3358
      %3360 = vrot.lane.b32.xlu0 %v2604, 64
      %v3361 = vpop.permute.xlu0 %3360
      %3362 = vrot.lane.b32.xlu0 %v2607, 64
      %v3363 = vpop.permute.xlu0 %3362
      %3364 = vrot.lane.b32.xlu0 %v2609, 64
      %v3365 = vpop.permute.xlu0 %3364
      %3366 = vrot.lane.b32.xlu0 %v2612, 64
      %v3367 = vpop.permute.xlu0 %3366
      %3368 = vrot.lane.b32.xlu0 %v2614, 64
      %v3369 = vpop.permute.xlu0 %3368
      %3370 = vrot.lane.b32.xlu0 %v2617, 64
      %v3371 = vpop.permute.xlu0 %3370
      %3372 = vrot.lane.b32.xlu0 %v2619, 64
      %v3373 = vpop.permute.xlu0 %3372
      %3374 = vrot.lane.b32.xlu0 %v2630, 64
      %v3375 = vpop.permute.xlu0 %3374
      %3376 = vrot.lane.b32.xlu0 %v2632, 64
      %v3377 = vpop.permute.xlu0 %3376
      %3378 = vrot.lane.b32.xlu0 %v2643, 64
      %v3379 = vpop.permute.xlu0 %3378
      %3380 = vrot.lane.b32.xlu0 %v2645, 64
      %v3381 = vpop.permute.xlu0 %3380
      %v3414 = vsel %vm2325, %v2358, %v2647
      %v3415 = vsel %vm2325, %v2359, %v2649
      %v3416 = vsel %vm2325, %v2361, %v2651
      %v3417 = vsel %vm2325, %v2362, %v2653
      %v3418 = vsel %vm2325, %v2364, %v2655
      %v3419 = vsel %vm2325, %v2365, %v2657
      %v3420 = vsel %vm2325, %v2367, %v2659
      %v3421 = vsel %vm2325, %v2368, %v2661
      %v3422 = vsel %vm2325, %v2370, %v2663
      %v3423 = vsel %vm2325, %v2371, %v2665
      %v3424 = vsel %vm2325, %v2373, %v2667
      %v3425 = vsel %vm2325, %v2374, %v2669
      %v3426 = vsel %vm2325, %v2376, %v2671
      %v3427 = vsel %vm2325, %v2377, %v2673
      %v3428 = vsel %vm2325, %v2379, %v2675
      %v3429 = vsel %vm2325, %v2380, %v2677
      %v3430 = vsel %vm2325, %v2382, %v2679
      %v3431 = vsel %vm2325, %v2383, %v2681
      %v3432 = vsel %vm2325, %v2385, %v2683
      %v3433 = vsel %vm2325, %v2386, %v2685
      %v3434 = vsel %vm2325, %v2388, %v2687
      %v3435 = vsel %vm2325, %v2389, %v2689
      %v3436 = vsel %vm2325, %v2391, %v2691
      %v3437 = vsel %vm2325, %v2392, %v2693
      %v3438 = vsel %vm2325, %v2394, %v2695
      %v3439 = vsel %vm2325, %v2395, %v2697
      %v3440 = vsel %vm2325, %v2397, %v2699
      %v3441 = vsel %vm2325, %v2398, %v2701
      %v3442 = vsel %vm2325, %v2400, %v2703
      %v3443 = vsel %vm2325, %v2401, %v2705
      %v3444 = vsel %vm2325, %v2403, %v2707
      %v3445 = vsel %vm2325, %v2404, %v2709
      %vm3446 = vcmask 130048
      %v3447 = vsel %vm3446, %v3414, %v2743
      %v3448 = vsel %vm3446, %v3415, %v2745
      %v3449 = vsel %vm3446, %v3416, %v2747
      %v3450 = vsel %vm3446, %v3417, %v2749
      %v3451 = vsel %vm3446, %v3418, %v2751
      %v3452 = vsel %vm3446, %v3419, %v2753
      %v3453 = vsel %vm3446, %v3420, %v2755
      %v3454 = vsel %vm3446, %v3421, %v2757
      %v3455 = vsel %vm3446, %v3422, %v2759
      %v3456 = vsel %vm3446, %v3423, %v2761
      %v3457 = vsel %vm3446, %v3424, %v2763
      %v3458 = vsel %vm3446, %v3425, %v2765
      %v3459 = vsel %vm3446, %v3426, %v2767
      %v3460 = vsel %vm3446, %v3427, %v2769
      %v3461 = vsel %vm3446, %v3428, %v2771
      %v3462 = vsel %vm3446, %v3429, %v2773
      %v3463 = vsel %vm3446, %v3430, %v2775
      %v3464 = vsel %vm3446, %v3431, %v2777
      %v3465 = vsel %vm3446, %v3432, %v2779
      %v3466 = vsel %vm3446, %v3433, %v2781
      %v3467 = vsel %vm3446, %v3434, %v2783
      %v3468 = vsel %vm3446, %v3435, %v2785
      %v3469 = vsel %vm3446, %v3436, %v2787
      %v3470 = vsel %vm3446, %v3437, %v2789
      %v3471 = vsel %vm3446, %v3438, %v2791
      %v3472 = vsel %vm3446, %v3439, %v2793
      %v3473 = vsel %vm3446, %v3440, %v2795
      %v3474 = vsel %vm3446, %v3441, %v2797
      %v3475 = vsel %vm3446, %v3442, %v2799
      %v3476 = vsel %vm3446, %v3443, %v2801
      %v3477 = vsel %vm3446, %v3444, %v2803
      %v3478 = vsel %vm3446, %v3445, %v2805
      %v3479 = vsel %vm1802, %v3447, %v2839
      %v3480 = vsel %vm1802, %v3448, %v2841
      %v3481 = vsel %vm1802, %v3449, %v2843
      %v3482 = vsel %vm1802, %v3450, %v2845
      %v3483 = vsel %vm1802, %v3451, %v2847
      %v3484 = vsel %vm1802, %v3452, %v2849
      %v3485 = vsel %vm1802, %v3453, %v2851
      %v3486 = vsel %vm1802, %v3454, %v2853
      %v3487 = vsel %vm1802, %v3455, %v2855
      %v3488 = vsel %vm1802, %v3456, %v2857
      %v3489 = vsel %vm1802, %v3457, %v2859
      %v3490 = vsel %vm1802, %v3458, %v2861
      %v3491 = vsel %vm1802, %v3459, %v2863
      %v3492 = vsel %vm1802, %v3460, %v2865
      %v3493 = vsel %vm1802, %v3461, %v2867
      %v3494 = vsel %vm1802, %v3462, %v2869
      %v3495 = vsel %vm1802, %v3463, %v2871
      %v3496 = vsel %vm1802, %v3464, %v2873
      %v3497 = vsel %vm1802, %v3465, %v2875
      %v3498 = vsel %vm1802, %v3466, %v2877
      %v3499 = vsel %vm1802, %v3467, %v2879
      %v3500 = vsel %vm1802, %v3468, %v2881
      %v3501 = vsel %vm1802, %v3469, %v2883
      %v3502 = vsel %vm1802, %v3470, %v2885
      %v3503 = vsel %vm1802, %v3471, %v2887
      %v3504 = vsel %vm1802, %v3472, %v2889
      %v3505 = vsel %vm1802, %v3473, %v2891
      %v3506 = vsel %vm1802, %v3474, %v2893
      %v3507 = vsel %vm1802, %v3475, %v2895
      %v3508 = vsel %vm1802, %v3476, %v2897
      %v3509 = vsel %vm1802, %v3477, %v2899
      %v3510 = vsel %vm1802, %v3478, %v2901
      %vm3511 = vcmask 261120
      %v3512 = vsel %vm3511, %v3479, %v2935
      %v3513 = vsel %vm3511, %v3480, %v2937
      %v3514 = vsel %vm3511, %v3481, %v2939
      %v3515 = vsel %vm3511, %v3482, %v2941
      %v3516 = vsel %vm3511, %v3483, %v2943
      %v3517 = vsel %vm3511, %v3484, %v2945
      %v3518 = vsel %vm3511, %v3485, %v2947
      %v3519 = vsel %vm3511, %v3486, %v2949
      %v3520 = vsel %vm3511, %v3487, %v2951
      %v3521 = vsel %vm3511, %v3488, %v2953
      %v3522 = vsel %vm3511, %v3489, %v2955
      %v3523 = vsel %vm3511, %v3490, %v2957
      %v3524 = vsel %vm3511, %v3491, %v2959
      %v3525 = vsel %vm3511, %v3492, %v2961
      %v3526 = vsel %vm3511, %v3493, %v2963
      %v3527 = vsel %vm3511, %v3494, %v2965
      %v3528 = vsel %vm3511, %v3495, %v2967
      %v3529 = vsel %vm3511, %v3496, %v2969
      %v3530 = vsel %vm3511, %v3497, %v2971
      %v3531 = vsel %vm3511, %v3498, %v2973
      %v3532 = vsel %vm3511, %v3499, %v2975
      %v3533 = vsel %vm3511, %v3500, %v2977
      %v3534 = vsel %vm3511, %v3501, %v2979
      %v3535 = vsel %vm3511, %v3502, %v2981
      %v3536 = vsel %vm3511, %v3503, %v2983
      %v3537 = vsel %vm3511, %v3504, %v2985
      %v3538 = vsel %vm3511, %v3505, %v2987
      %v3539 = vsel %vm3511, %v3506, %v2989
      %v3540 = vsel %vm3511, %v3507, %v2991
      %v3541 = vsel %vm3511, %v3508, %v2993
      %v3542 = vsel %vm3511, %v3509, %v2995
      %v3543 = vsel %vm3511, %v3510, %v2997
      %vm3544 = vcmask 326656
      %v3545 = vsel %vm3544, %v3512, %v3031
      %v3546 = vsel %vm3544, %v3513, %v3033
      %v3547 = vsel %vm3544, %v3514, %v3035
      %v3548 = vsel %vm3544, %v3515, %v3037
      %v3549 = vsel %vm3544, %v3516, %v3039
      %v3550 = vsel %vm3544, %v3517, %v3041
      %v3551 = vsel %vm3544, %v3518, %v3043
      %v3552 = vsel %vm3544, %v3519, %v3045
      %v3553 = vsel %vm3544, %v3520, %v3047
      %v3554 = vsel %vm3544, %v3521, %v3049
      %v3555 = vsel %vm3544, %v3522, %v3051
      %v3556 = vsel %vm3544, %v3523, %v3053
      %v3557 = vsel %vm3544, %v3524, %v3055
      %v3558 = vsel %vm3544, %v3525, %v3057
      %v3559 = vsel %vm3544, %v3526, %v3059
      %v3560 = vsel %vm3544, %v3527, %v3061
      %v3561 = vsel %vm3544, %v3528, %v3063
      %v3562 = vsel %vm3544, %v3529, %v3065
      %v3563 = vsel %vm3544, %v3530, %v3067
      %v3564 = vsel %vm3544, %v3531, %v3069
      %v3565 = vsel %vm3544, %v3532, %v3071
      %v3566 = vsel %vm3544, %v3533, %v3073
      %v3567 = vsel %vm3544, %v3534, %v3075
      %v3568 = vsel %vm3544, %v3535, %v3077
      %v3569 = vsel %vm3544, %v3536, %v3079
      %v3570 = vsel %vm3544, %v3537, %v3081
      %v3571 = vsel %vm3544, %v3538, %v3083
      %v3572 = vsel %vm3544, %v3539, %v3085
      %v3573 = vsel %vm3544, %v3540, %v3087
      %v3574 = vsel %vm3544, %v3541, %v3089
      %v3575 = vsel %vm3544, %v3542, %v3091
      %v3576 = vsel %vm3544, %v3543, %v3093
      %v3577 = vsel %vm1868, %v3545, %v3127
      %v3578 = vsel %vm1868, %v3546, %v3129
      %v3579 = vsel %vm1868, %v3547, %v3131
      %v3580 = vsel %vm1868, %v3548, %v3133
      %v3581 = vsel %vm1868, %v3549, %v3135
      %v3582 = vsel %vm1868, %v3550, %v3137
      %v3583 = vsel %vm1868, %v3551, %v3139
      %v3584 = vsel %vm1868, %v3552, %v3141
      %v3585 = vsel %vm1868, %v3553, %v3143
      %v3586 = vsel %vm1868, %v3554, %v3145
      %v3587 = vsel %vm1868, %v3555, %v3147
      %v3588 = vsel %vm1868, %v3556, %v3149
      %v3589 = vsel %vm1868, %v3557, %v3151
      %v3590 = vsel %vm1868, %v3558, %v3153
      %v3591 = vsel %vm1868, %v3559, %v3155
      %v3592 = vsel %vm1868, %v3560, %v3157
      %v3593 = vsel %vm1868, %v3561, %v3159
      %v3594 = vsel %vm1868, %v3562, %v3161
      %v3595 = vsel %vm1868, %v3563, %v3163
      %v3596 = vsel %vm1868, %v3564, %v3165
      %v3597 = vsel %vm1868, %v3565, %v3167
      %v3598 = vsel %vm1868, %v3566, %v3169
      %v3599 = vsel %vm1868, %v3567, %v3171
      %v3600 = vsel %vm1868, %v3568, %v3173
      %v3601 = vsel %vm1868, %v3569, %v3175
      %v3602 = vsel %vm1868, %v3570, %v3177
      %v3603 = vsel %vm1868, %v3571, %v3179
      %v3604 = vsel %vm1868, %v3572, %v3181
      %v3605 = vsel %vm1868, %v3573, %v3183
      %v3606 = vsel %vm1868, %v3574, %v3185
      %v3607 = vsel %vm1868, %v3575, %v3187
      %v3608 = vsel %vm1868, %v3576, %v3189
      %vm3609 = vcmask 457728
      %v3610 = vsel %vm3609, %v3577, %v3223
      %v3611 = vsel %vm3609, %v3578, %v3225
      %v3612 = vsel %vm3609, %v3579, %v3227
      %v3613 = vsel %vm3609, %v3580, %v3229
      %v3614 = vsel %vm3609, %v3581, %v3231
      %v3615 = vsel %vm3609, %v3582, %v3233
      %v3616 = vsel %vm3609, %v3583, %v3235
      %v3617 = vsel %vm3609, %v3584, %v3237
      %v3618 = vsel %vm3609, %v3585, %v3239
      %v3619 = vsel %vm3609, %v3586, %v3241
      %v3620 = vsel %vm3609, %v3587, %v3243
      %v3621 = vsel %vm3609, %v3588, %v3245
      %v3622 = vsel %vm3609, %v3589, %v3247
      %v3623 = vsel %vm3609, %v3590, %v3249
      %v3624 = vsel %vm3609, %v3591, %v3251
      %v3625 = vsel %vm3609, %v3592, %v3253
      %v3626 = vsel %vm3609, %v3593, %v3255
      %v3627 = vsel %vm3609, %v3594, %v3257
      %v3628 = vsel %vm3609, %v3595, %v3259
      %v3629 = vsel %vm3609, %v3596, %v3261
      %v3630 = vsel %vm3609, %v3597, %v3263
      %v3631 = vsel %vm3609, %v3598, %v3265
      %v3632 = vsel %vm3609, %v3599, %v3267
      %v3633 = vsel %vm3609, %v3600, %v3269
      %v3634 = vsel %vm3609, %v3601, %v3271
      %v3635 = vsel %vm3609, %v3602, %v3273
      %v3636 = vsel %vm3609, %v3603, %v3275
      %v3637 = vsel %vm3609, %v3604, %v3277
      %v3638 = vsel %vm3609, %v3605, %v3279
      %v3639 = vsel %vm3609, %v3606, %v3281
      %v3640 = vsel %vm3609, %v3607, %v3283
      %v3641 = vsel %vm3609, %v3608, %v3285
      %vm3642 = vcmask 523264
      %v3643 = vsel %vm3642, %v3610, %v3319
      %v3644 = vsel %vm3642, %v3611, %v3321
      %v3645 = vsel %vm3642, %v3612, %v3323
      %v3646 = vsel %vm3642, %v3613, %v3325
      %v3647 = vsel %vm3642, %v3614, %v3327
      %v3648 = vsel %vm3642, %v3615, %v3329
      %v3649 = vsel %vm3642, %v3616, %v3331
      %v3650 = vsel %vm3642, %v3617, %v3333
      %v3651 = vsel %vm3642, %v3618, %v3335
      %v3652 = vsel %vm3642, %v3619, %v3337
      %v3653 = vsel %vm3642, %v3620, %v3339
      %v3654 = vsel %vm3642, %v3621, %v3341
      %v3655 = vsel %vm3642, %v3622, %v3343
      %v3656 = vsel %vm3642, %v3623, %v3345
      %v3657 = vsel %vm3642, %v3624, %v3347
      %v3658 = vsel %vm3642, %v3625, %v3349
      %v3659 = vsel %vm3642, %v3626, %v3351
      %v3660 = vsel %vm3642, %v3627, %v3353
      %v3661 = vsel %vm3642, %v3628, %v3355
      %v3662 = vsel %vm3642, %v3629, %v3357
      %v3663 = vsel %vm3642, %v3630, %v3359
      %v3664 = vsel %vm3642, %v3631, %v3361
      %v3665 = vsel %vm3642, %v3632, %v3363
      %v3666 = vsel %vm3642, %v3633, %v3365
      %v3667 = vsel %vm3642, %v3634, %v3367
      %v3668 = vsel %vm3642, %v3635, %v3369
      %v3669 = vsel %vm3642, %v3636, %v3371
      %v3670 = vsel %vm3642, %v3637, %v3373
      %v3671 = vsel %vm3642, %v3638, %v3375
      %v3672 = vsel %vm3642, %v3639, %v3377
      %v3673 = vsel %vm3642, %v3640, %v3379
      %v3674 = vsel %vm3642, %v3641, %v3381
      %v3675 = vpack.c.bf16 %v3644, %v3643
      %v3676 = vpack.c.bf16 %v3646, %v3645
      %v3677 = vpack.c.bf16 %v3648, %v3647
      %v3678 = vpack.c.bf16 %v3650, %v3649
      %v3679 = vpack.c.bf16 %v3652, %v3651
      %v3680 = vpack.c.bf16 %v3654, %v3653
      %v3681 = vpack.c.bf16 %v3656, %v3655
      %v3682 = vpack.c.bf16 %v3658, %v3657
      %v3683 = vpack.c.bf16 %v3660, %v3659
      %v3684 = vpack.c.bf16 %v3662, %v3661
      %v3685 = vpack.c.bf16 %v3664, %v3663
      %v3686 = vpack.c.bf16 %v3666, %v3665
      %v3687 = vpack.c.bf16 %v3668, %v3667
      %v3688 = vpack.c.bf16 %v3670, %v3669
      %v3689 = vpack.c.bf16 %v3672, %v3671
      %v3690 = vpack.c.bf16 %v3674, %v3673
      %v3691 = vld [vmem:[%s4] sm:$0xf]
      %v3692 = vld [vmem:[%s4 + $0x4] sm:$0xf]
      %v3693 = vld [vmem:[%s4 + $0x8] sm:$0xf]
      %v3694 = vld [vmem:[%s4 + $0xc] sm:$0xf]
      %v3695 = vld [vmem:[%s4 + $0x10] sm:$0xf]
      %v3696 = vld [vmem:[%s4 + $0x14] sm:$0xf]
      %v3697 = vld [vmem:[%s4 + $0x18] sm:$0xf]
      %v3698 = vld [vmem:[%s4 + $0x1c] sm:$0xf]
      %v3699 = vld [vmem:[%s4 + $0x20] sm:$0xf]
      %v3700 = vld [vmem:[%s5] sm:$0x1]
      %v3702 = vlaneseq
      %v3703 = vshrl.u32 %v3702, 7
      %v3704 = vsub.s32 0, %v3703
      %v3705 = vrot.slane %v3700, %v3704
      %v3716 = vunpack.c.l.b16 %v3691
      %v3717 = vunpack.c.l.b16 %v3692
      %v3718 = vunpack.c.l.b16 %v3693
      %v3719 = vunpack.c.l.b16 %v3694
      %v3720 = vunpack.c.l.b16 %v3695
      %v3721 = vunpack.c.l.b16 %v3696
      %v3722 = vunpack.c.l.b16 %v3697
      %v3723 = vunpack.c.l.b16 %v3698
      %v3724 = vunpack.c.l.b16 %v3699
      %v3725 = vpack.c.b16 %v3717, %v3716
      %v3726 = vpack.c.b16 %v3719, %v3718
      %v3727 = vpack.c.b16 %v3721, %v3720
      %v3728 = vpack.c.b16 %v3723, %v3722
      %v3729 = vpack.c.b16 %v3724, %v3724
      %v3735 = vsel %vm1934, %v3675, 0
      %v3738 = vsel %vm1934, %v3676, 0
      %v3741 = vsel %vm1934, %v3677, 0
      %v3744 = vsel %vm1934, %v3678, 0
      %v3747 = vsel %vm1934, %v3679, 0
      %v3750 = vsel %vm1934, %v3680, 0
      %v3753 = vsel %vm1934, %v3681, 0
      %v3756 = vsel %vm1934, %v3682, 0
      %v3759 = vsel %vm1934, %v3683, 0
      %v3762 = vsel %vm1934, %v3684, 0
      %v3765 = vsel %vm1934, %v3685, 0
      %v3768 = vsel %vm1934, %v3686, 0
      %v3771 = vsel %vm1934, %v3687, 0
      %v3774 = vsel %vm1934, %v3688, 0
      %v3777 = vsel %vm1934, %v3689, 0
      %v3780 = vsel %vm1934, %v3690, 0
      %vm3782 = vcmask 1043456
      %v3784 = vsel %vm3782, %v3729, 0
      %3786 = vmatprep.subr.bf16.mxu0 0
      %3787 = vmatpush1.bf16.msra.mxu0 %v3725
      %3788 = vmatprep.subr.bf16.mxu0 0
      %3789 = vmatpush1.bf16.msra.mxu0 %v3726
      %3790 = vmatprep.subr.bf16.mxu0 0
      %3791 = vmatpush1.bf16.msra.mxu0 %v3727
      %3792 = vmatprep.subr.bf16.mxu0 0
      %3793 = vmatpush1.bf16.msra.mxu0 %v3728
      %3794 = vmatprep.subr.bf16.mxu0 0
      %3795 = vmatpush1.bf16.msra.mxu0 %v3784
      %3796 = vmatprep.subr.bf16.mxu0 0
      %3797 = vmatpush1.bf16.msra.mxu0 0
      %3798 = vmatprep.subr.bf16.mxu0 0
      %3799 = vmatpush1.bf16.msra.mxu0 0
      %3800 = vmatprep.subr.bf16.mxu0 0
      %3801 = vmatpush1.bf16.msra.mxu0 0
      %3802 = vmatprep.subr.bf16.mxu0 0
      %3803 = vmatpush1.bf16.msra.mxu0 0
      %3804 = vmatprep.subr.bf16.mxu0 0
      %3805 = vmatpush1.bf16.msra.mxu0 0
      %3806 = vmatprep.subr.bf16.mxu0 0
      %3807 = vmatpush1.bf16.msra.mxu0 0
      %3808 = vmatprep.subr.bf16.mxu0 0
      %3809 = vmatpush1.bf16.msra.mxu0 0
      %3810 = vmatprep.subr.bf16.mxu0 0
      %3811 = vmatpush1.bf16.msra.mxu0 0
      %3812 = vmatprep.subr.bf16.mxu0 0
      %3813 = vmatpush1.bf16.msra.mxu0 0
      %3814 = vmatprep.subr.bf16.mxu0 0
      %3815 = vmatpush1.bf16.msra.mxu0 0
      %3816 = vmatprep.subr.bf16.mxu0 0
      %3817 = vmatpush1.bf16.msra.mxu0 0
      %3818 = vmatprep.mubr.bf16.mxu0 0
      %3819 = vmatmul.mubr.bf16.gmra.mrb[0].mxu0 %v3735
      %v3820 = vpop.f32.mrb[0].mxu0
      %v3821 = vadd.f32 %v3705, %v3820
      %v3822 = vpop.f32.mrb[0].mxu0
      %v3823 = vpop.f32.mrb[0].mxu0
      %v3824 = vadd.f32 %v3705, %v3823
      %v3825 = vpop.f32.mrb[0].mxu0
      %3826 = vmatprep.mubr.bf16.mxu0 0
      %3827 = vmatmul.mubr.bf16.gmra.mrb[0].mxu0 %v3738
      %v3828 = vpop.f32.mrb[0].mxu0
      %v3829 = vadd.f32 %v3705, %v3828
      %v3830 = vpop.f32.mrb[0].mxu0
      %v3831 = vpop.f32.mrb[0].mxu0
      %v3832 = vadd.f32 %v3705, %v3831
      %v3833 = vpop.f32.mrb[0].mxu0
      %3834 = vmatprep.mubr.bf16.mxu0 0
      %3835 = vmatmul.mubr.bf16.gmra.mrb[0].mxu0 %v3741
      %v3836 = vpop.f32.mrb[0].mxu0
      %v3837 = vadd.f32 %v3705, %v3836
      %v3838 = vpop.f32.mrb[0].mxu0
      %v3839 = vpop.f32.mrb[0].mxu0
      %v3840 = vadd.f32 %v3705, %v3839
      %v3841 = vpop.f32.mrb[0].mxu0
      %3842 = vmatprep.mubr.bf16.mxu0 0
      %3843 = vmatmul.mubr.bf16.gmra.mrb[0].mxu0 %v3744
      %v3844 = vpop.f32.mrb[0].mxu0
      %v3845 = vadd.f32 %v3705, %v3844
      %v3846 = vpop.f32.mrb[0].mxu0
      %v3847 = vpop.f32.mrb[0].mxu0
      %v3848 = vadd.f32 %v3705, %v3847
      %v3849 = vpop.f32.mrb[0].mxu0
      %3850 = vmatprep.mubr.bf16.mxu0 0
      %3851 = vmatmul.mubr.bf16.gmra.mrb[0].mxu0 %v3747
      %v3852 = vpop.f32.mrb[0].mxu0
      %v3853 = vadd.f32 %v3705, %v3852
      %v3854 = vpop.f32.mrb[0].mxu0
      %v3855 = vpop.f32.mrb[0].mxu0
      %v3856 = vadd.f32 %v3705, %v3855
      %v3857 = vpop.f32.mrb[0].mxu0
      %3858 = vmatprep.mubr.bf16.mxu0 0
      %3859 = vmatmul.mubr.bf16.gmra.mrb[0].mxu0 %v3750
      %v3860 = vpop.f32.mrb[0].mxu0
      %v3861 = vadd.f32 %v3705, %v3860
      %v3862 = vpop.f32.mrb[0].mxu0
      %v3863 = vpop.f32.mrb[0].mxu0
      %v3864 = vadd.f32 %v3705, %v3863
      %v3865 = vpop.f32.mrb[0].mxu0
      %3866 = vmatprep.mubr.bf16.mxu0 0
      %3867 = vmatmul.mubr.bf16.gmra.mrb[0].mxu0 %v3753
      %v3868 = vpop.f32.mrb[0].mxu0
      %v3869 = vadd.f32 %v3705, %v3868
      %v3870 = vpop.f32.mrb[0].mxu0
      %v3871 = vpop.f32.mrb[0].mxu0
      %v3872 = vadd.f32 %v3705, %v3871
      %v3873 = vpop.f32.mrb[0].mxu0
      %3874 = vmatprep.mubr.bf16.mxu0 0
      %3875 = vmatmul.mubr.bf16.gmra.mrb[0].mxu0 %v3756
      %v3876 = vpop.f32.mrb[0].mxu0
      %v3877 = vadd.f32 %v3705, %v3876
      %v3878 = vpop.f32.mrb[0].mxu0
      %v3879 = vpop.f32.mrb[0].mxu0
      %v3880 = vadd.f32 %v3705, %v3879
      %v3881 = vpop.f32.mrb[0].mxu0
      %3882 = vmatprep.mubr.bf16.mxu0 0
      %3883 = vmatmul.mubr.bf16.gmra.mrb[0].mxu0 %v3759
      %v3884 = vpop.f32.mrb[0].mxu0
      %v3885 = vadd.f32 %v3705, %v3884
      %v3886 = vpop.f32.mrb[0].mxu0
      %v3887 = vpop.f32.mrb[0].mxu0
      %v3888 = vadd.f32 %v3705, %v3887
      %v3889 = vpop.f32.mrb[0].mxu0
      %3890 = vmatprep.mubr.bf16.mxu0 0
      %3891 = vmatmul.mubr.bf16.gmra.mrb[0].mxu0 %v3762
      %v3892 = vpop.f32.mrb[0].mxu0
      %v3893 = vadd.f32 %v3705, %v3892
      %v3894 = vpop.f32.mrb[0].mxu0
      %v3895 = vpop.f32.mrb[0].mxu0
      %v3896 = vadd.f32 %v3705, %v3895
      %v3897 = vpop.f32.mrb[0].mxu0
      %3898 = vmatprep.mubr.bf16.mxu0 0
      %3899 = vmatmul.mubr.bf16.gmra.mrb[0].mxu0 %v3765
      %v3900 = vpop.f32.mrb[0].mxu0
      %v3901 = vadd.f32 %v3705, %v3900
      %v3902 = vpop.f32.mrb[0].mxu0
      %v3903 = vpop.f32.mrb[0].mxu0
      %v3904 = vadd.f32 %v3705, %v3903
      %v3905 = vpop.f32.mrb[0].mxu0
      %3906 = vmatprep.mubr.bf16.mxu0 0
      %3907 = vmatmul.mubr.bf16.gmra.mrb[0].mxu0 %v3768
      %v3908 = vpop.f32.mrb[0].mxu0
      %v3909 = vadd.f32 %v3705, %v3908
      %v3910 = vpop.f32.mrb[0].mxu0
      %v3911 = vpop.f32.mrb[0].mxu0
      %v3912 = vadd.f32 %v3705, %v3911
      %v3913 = vpop.f32.mrb[0].mxu0
      %3914 = vmatprep.mubr.bf16.mxu0 0
      %3915 = vmatmul.mubr.bf16.gmra.mrb[0].mxu0 %v3771
      %v3916 = vpop.f32.mrb[0].mxu0
      %v3917 = vadd.f32 %v3705, %v3916
      %v3918 = vpop.f32.mrb[0].mxu0
      %v3919 = vpop.f32.mrb[0].mxu0
      %v3920 = vadd.f32 %v3705, %v3919
      %v3921 = vpop.f32.mrb[0].mxu0
      %3922 = vmatprep.mubr.bf16.mxu0 0
      %3923 = vmatmul.mubr.bf16.gmra.mrb[0].mxu0 %v3774
      %v3924 = vpop.f32.mrb[0].mxu0
      %v3925 = vadd.f32 %v3705, %v3924
      %v3926 = vpop.f32.mrb[0].mxu0
      %v3927 = vpop.f32.mrb[0].mxu0
      %v3928 = vadd.f32 %v3705, %v3927
      %v3929 = vpop.f32.mrb[0].mxu0
      %3930 = vmatprep.mubr.bf16.mxu0 0
      %3931 = vmatmul.mubr.bf16.gmra.mrb[0].mxu0 %v3777
      %v3932 = vpop.f32.mrb[0].mxu0
      %v3933 = vadd.f32 %v3705, %v3932
      %v3934 = vpop.f32.mrb[0].mxu0
      %v3935 = vpop.f32.mrb[0].mxu0
      %v3936 = vadd.f32 %v3705, %v3935
      %v3937 = vpop.f32.mrb[0].mxu0
      %3938 = vmatprep.mubr.bf16.mxu0 0
      %3939 = vmatmul.mubr.bf16.gmra.mrb[0].mxu0 %v3780
      %v3940 = vpop.f32.mrb[0].mxu0
      %v3941 = vadd.f32 %v3705, %v3940
      %v3942 = vpop.f32.mrb[0].mxu0
      %v3943 = vpop.f32.mrb[0].mxu0
      %v3944 = vadd.f32 %v3705, %v3943
      %v3945 = vpop.f32.mrb[0].mxu0
      %3946 = vdwg.mxu0
      %3947 = vst.msk [vmem:[%s271] sm:$0xff] %vm2325, %v3821
      %3948 = vst.msk [vmem:[%s271 + $0x8] sm:$0xff] %vm2325, %v3824
      %3949 = vst.msk [vmem:[%s271 + $0x10] sm:$0xff] %vm2325, %v3829
      %3950 = vst.msk [vmem:[%s271 + $0x18] sm:$0xff] %vm2325, %v3832
      %3951 = vst.msk [vmem:[%s271 + $0x20] sm:$0xff] %vm2325, %v3837
      %3952 = vst.msk [vmem:[%s271 + $0x28] sm:$0xff] %vm2325, %v3840
      %3953 = vst.msk [vmem:[%s271 + $0x30] sm:$0xff] %vm2325, %v3845
      %3954 = vst.msk [vmem:[%s271 + $0x38] sm:$0xff] %vm2325, %v3848
      %3955 = vst.msk [vmem:[%s271 + $0x40] sm:$0xff] %vm2325, %v3853
      %3956 = vst.msk [vmem:[%s271 + $0x48] sm:$0xff] %vm2325, %v3856
      %3957 = vst.msk [vmem:[%s271 + $0x50] sm:$0xff] %vm2325, %v3861
      %3958 = vst.msk [vmem:[%s271 + $0x58] sm:$0xff] %vm2325, %v3864
      %3959 = vst.msk [vmem:[%s271 + $0x60] sm:$0xff] %vm2325, %v3869
      %3960 = vst.msk [vmem:[%s271 + $0x68] sm:$0xff] %vm2325, %v3872
      %3961 = vst.msk [vmem:[%s271 + $0x70] sm:$0xff] %vm2325, %v3877
      %3962 = vst.msk [vmem:[%s271 + $0x78] sm:$0xff] %vm2325, %v3880
      %3963 = vst.msk [vmem:[%s271 + $0x80] sm:$0xff] %vm2325, %v3885
      %3964 = vst.msk [vmem:[%s271 + $0x88] sm:$0xff] %vm2325, %v3888
      %3965 = vst.msk [vmem:[%s271 + $0x90] sm:$0xff] %vm2325, %v3893
      %3966 = vst.msk [vmem:[%s271 + $0x98] sm:$0xff] %vm2325, %v3896
      %3967 = vst.msk [vmem:[%s271 + $0xa0] sm:$0xff] %vm2325, %v3901
      %3968 = vst.msk [vmem:[%s271 + $0xa8] sm:$0xff] %vm2325, %v3904
      %3969 = vst.msk [vmem:[%s271 + $0xb0] sm:$0xff] %vm2325, %v3909
      %3970 = vst.msk [vmem:[%s271 + $0xb8] sm:$0xff] %vm2325, %v3912
      %3971 = vst.msk [vmem:[%s271 + $0xc0] sm:$0xff] %vm2325, %v3917
      %3972 = vst.msk [vmem:[%s271 + $0xc8] sm:$0xff] %vm2325, %v3920
      %3973 = vst.msk [vmem:[%s271 + $0xd0] sm:$0xff] %vm2325, %v3925
      %3974 = vst.msk [vmem:[%s271 + $0xd8] sm:$0xff] %vm2325, %v3928
      %3975 = vst.msk [vmem:[%s271 + $0xe0] sm:$0xff] %vm2325, %v3933
      %3976 = vst.msk [vmem:[%s271 + $0xe8] sm:$0xff] %vm2325, %v3936
      %3977 = vst.msk [vmem:[%s271 + $0xf0] sm:$0xff] %vm2325, %v3941
      %3978 = vst.msk [vmem:[%s271 + $0xf8] sm:$0xff] %vm2325, %v3944
      %p3979 = scmp.lt.s32.totalorder %s17, 1
      %s3980 = scalar_select %p3979, %s17, 1
      %s3981 = smul.addr %s3980, 32
      %s3982 = smul.addr %s3981, 8
      %s3983 = scalar_lea.vmem %s6, %s3982
      // Predicated region
      $region49: #{unet_up_forward.1} parent=43 // pred_check
        %p3984 = pneg %p171
      $region50: #{unet_up_forward.1} parent=43 // pred_check_branch
        %3986 = sbr.rel (%p3984) target = $region52
      $region51: #{unet_up_forward.1} parent=43 // pred_region
        _
      $region52: #{unet_up_forward.1} parent=43 // pred_fallthru
        _
    $region44: #{unet_up_forward.1} parent=5 // pred_fallthru
      _
    %p3987 = scmp.le.s32.totalorder 2, %s12
    // Predicated region
    $region53: #{unet_up_forward.1} parent=5 // pred_check
      %p3988 = pneg %p3987
    $region54: #{unet_up_forward.1} parent=5 // pred_check_branch
      %3990 = sbr.rel (%p3988) target = $region56
    $region55: #{unet_up_forward.1} parent=5 // pred_region
      %s3991 = ssub.s32 %s12, 2
      // Predicated region
      $region57: #{unet_up_forward.1} parent=55 // pred_check
        %p3992 = pneg %p177
      $region58: #{unet_up_forward.1} parent=55 // pred_check_branch
        %3994 = sbr.rel (%p3992) target = $region60
      $region59: #{unet_up_forward.1} parent=55 // pred_region
        %p3995 = scmp.lt.s32.totalorder %s18, 1
        %s3996 = scalar_select %p3995, %s18, 1
        %s3997 = smul.addr %s3996, 32
        %s3998 = smul.addr %s3997, 8
        %s3999 = scalar_lea.vmem %s6, %s3998
      $region60: #{unet_up_forward.1} parent=55 // pred_fallthru
        _
    $region56: #{unet_up_forward.1} parent=5 // pred_fallthru
      _
  $region6: #{unet_up_forward.1} parent=0 // loop_footer
    %s16 = sadd.s32 1, %s12
  $region7: #{unet_up_forward.1} parent=0 // loop_footer_branch
    %11 = sbr.rel target = $region3
  $region8: #{unet_up_forward.1} parent=0 // loop_exit
    _

</llo_original>
